<compile_context>
chip_gen: v6e
topology: v6e:2x2x1
jax: 0.10.0
libtpu: 0.0.40
codegen_flags: <defaults>
</compile_context>

<pallas_src>
import functools
import math

import jax
import jax.numpy as jnp
import numpy as np
from jax import lax
from jax.experimental import pallas as pl
from jax.experimental.pallas import tpu as pltpu  # noqa: F401  (kept for parity)

# ----------------- small synthetic config (GPTConfig analogue) -----------------
VOCAB = 128          # vocab_size
BLOCK_SIZE = 16      # block_size
N_LAYER = 2          # n_layer
N_HEAD = 4           # n_head
N_EMBD = 64          # n_embd
HEAD_DIM = N_EMBD // N_HEAD
LN_EPS = 1e-5        # PyTorch nn.LayerNorm default
GELU_C = math.sqrt(2.0 / math.pi)
NEG_INF = -1e30      # large finite negative (safe even for fully masked rows)


# ------------------------------ in-kernel helpers --------------------------------
def _ln(x, g, b):
    mu = jnp.mean(x, axis=-1, keepdims=True)
    var = jnp.mean((x - mu) ** 2, axis=-1, keepdims=True)
    return (x - mu) * lax.rsqrt(var + LN_EPS) * g + b


def _gelu_tanh(x):
    # matches nn.GELU(approximate='tanh'); kept in f32
    return 0.5 * x * (1.0 + jnp.tanh(GELU_C * (x + 0.044715 * x * x * x)))


# ----------------------------- fully fused forward kernel -------------------------
def _gpt2_kernel(x_ref,
                 ln1g_ref, ln1b_ref, wqkv_ref, bqkv_ref,
                 wproj_ref, bproj_ref, ln2g_ref, ln2b_ref,
                 wfc_ref, bfc_ref, wmp_ref, bmp_ref,
                 lnfg_ref, lnfb_ref, wlm_ref,
                 o_ref, *, batch, seqlen):
    B, T, C, H, D = batch, seqlen, N_EMBD, N_HEAD, HEAD_DIM
    scale = 1.0 / math.sqrt(D)

    x = x_ref[...]                                           # (B*T, C) f32 residual

    # causal mask shared by every layer/head
    row = lax.broadcasted_iota(jnp.int32, (B, T, T), 1)
    col = lax.broadcasted_iota(jnp.int32, (B, T, T), 2)
    causal = row >= col

    for l in range(N_LAYER):
        # --- LN1 + fused QKV projection over ALL B*T rows (bf16 MXU, f32 acc) ---
        h = _ln(x, ln1g_ref[l], ln1b_ref[l])
        qkv = jnp.dot(h.astype(jnp.bfloat16), wqkv_ref[l],
                      preferred_element_type=jnp.float32) + bqkv_ref[l]   # (B*T, 3C)

        # --- multi-head causal attention: per head, batched over B ---
        heads = []
        for hh in range(H):
            lo = hh * D
            qh = qkv[:, lo:lo + D].reshape(B, T, D).astype(jnp.bfloat16)
            kh = qkv[:, C + lo:C + lo + D].reshape(B, T, D).astype(jnp.bfloat16)
            vh = qkv[:, 2 * C + lo:2 * C + lo + D].reshape(B, T, D).astype(jnp.bfloat16)
            s = lax.dot_general(qh, kh, (((2,), (2,)), ((0,), (0,))),
                                preferred_element_type=jnp.float32) * scale  # (B,T,T)
            s = jnp.where(causal, s, NEG_INF)                # is_causal=True
            m = jnp.max(s, axis=-1, keepdims=True)
            p = jnp.exp(s - m)
            p = p * pl.reciprocal(jnp.sum(p, axis=-1, keepdims=True), approx=True)
            yh = lax.dot_general(p.astype(jnp.bfloat16), vh,
                                 (((2,), (1,)), ((0,), (0,))),
                                 preferred_element_type=jnp.float32)        # (B,T,D)
            heads.append(yh.reshape(B * T, D))
        y = jnp.concatenate(heads, axis=-1)                  # (B*T, C), values only

        # --- attention output projection + residual ---
        x = x + jnp.dot(y.astype(jnp.bfloat16), wproj_ref[l],
                        preferred_element_type=jnp.float32) + bproj_ref[l]

        # --- LN2 + MLP (fc -> tanh GELU -> proj) + residual ---
        h2 = _ln(x, ln2g_ref[l], ln2b_ref[l])
        mh = jnp.dot(h2.astype(jnp.bfloat16), wfc_ref[l],
                     preferred_element_type=jnp.float32) + bfc_ref[l]
        mh = _gelu_tanh(mh)
        x = x + jnp.dot(mh.astype(jnp.bfloat16), wmp_ref[l],
                        preferred_element_type=jnp.float32) + bmp_ref[l]

    # --- final LN + tied lm_head (lane-dense V=128 output) ---
    hf = _ln(x, lnfg_ref[...], lnfb_ref[...])
    o_ref[...] = jnp.dot(hf.astype(jnp.bfloat16), wlm_ref[...],
                         preferred_element_type=jnp.float32)


def gpt2_fused(params, x2d, batch, seqlen):
    """One pallas_call for the whole stack. No grid: all arrays live in VMEM."""
    BT = x2d.shape[0]
    kern = functools.partial(_gpt2_kernel, batch=batch, seqlen=seqlen)
    # TODO(synk): for real GPT-2 dims (C=768, T=1024) this "whole model in VMEM"
    # scheme must be re-tiled (128-lane tiles, T chunks, per-layer streaming).
    return pl.pallas_call(
        kern,
        out_shape=jax.ShapeDtypeStruct((BT, VOCAB), jnp.float32),
    )(x2d,
      params["ln1_g"], params["ln1_b"], params["attn_w"], params["attn_b"],
      params["proj_w"], params["proj_b"], params["ln2_g"], params["ln2_b"],
      params["fc_w"], params["fc_b"], params["mproj_w"], params["mproj_b"],
      params["ln_f_g"], params["ln_f_b"], params["lm_head_w"])


# ----------------------------------- parameters ------------------------------------
def init_params(key):
    std = 0.02
    proj_std = 0.02 * (2 * N_LAYER) ** -0.5   # NANO_GPT_INIT scaling
    keys = iter(jax.random.split(key, 2 + 4 * N_LAYER))
    wte = std * jax.random.normal(next(keys), (VOCAB, N_EMBD), jnp.float32)
    wpe = std * jax.random.normal(next(keys), (BLOCK_SIZE, N_EMBD), jnp.float32)

    attn_w, proj_w, fc_w, mproj_w = [], [], [], []
    for _ in range(N_LAYER):
        attn_w.append((std * jax.random.normal(
            next(keys), (N_EMBD, 3 * N_EMBD), jnp.float32)).astype(jnp.bfloat16))
        proj_w.append((proj_std * jax.random.normal(
            next(keys), (N_EMBD, N_EMBD), jnp.float32)).astype(jnp.bfloat16))
        fc_w.append((std * jax.random.normal(
            next(keys), (N_EMBD, 4 * N_EMBD), jnp.float32)).astype(jnp.bfloat16))
        mproj_w.append((proj_std * jax.random.normal(
            next(keys), (4 * N_EMBD, N_EMBD), jnp.float32)).astype(jnp.bfloat16))

    return {
        "wte": wte,                                  # (V, C) f32 for the token gather
        "wpe": wpe,                                  # (block, C) f32
        "lm_head_w": wte.T.astype(jnp.bfloat16),     # tied weight, pre-transposed once
        "ln_f_g": jnp.ones((1, N_EMBD), jnp.float32),
        "ln_f_b": jnp.zeros((1, N_EMBD), jnp.float32),
        # per-layer weights stacked along a leading layer axis
        "ln1_g": jnp.ones((N_LAYER, 1, N_EMBD), jnp.float32),
        "ln1_b": jnp.zeros((N_LAYER, 1, N_EMBD), jnp.float32),
        "ln2_g": jnp.ones((N_LAYER, 1, N_EMBD), jnp.float32),
        "ln2_b": jnp.zeros((N_LAYER, 1, N_EMBD), jnp.float32),
        "attn_w": jnp.stack(attn_w),                 # (L, C, 3C) bf16
        "attn_b": jnp.zeros((N_LAYER, 1, 3 * N_EMBD), jnp.float32),
        "proj_w": jnp.stack(proj_w),                 # (L, C, C) bf16
        "proj_b": jnp.zeros((N_LAYER, 1, N_EMBD), jnp.float32),
        "fc_w": jnp.stack(fc_w),                     # (L, C, 4C) bf16
        "fc_b": jnp.zeros((N_LAYER, 1, 4 * N_EMBD), jnp.float32),
        "mproj_w": jnp.stack(mproj_w),               # (L, 4C, C) bf16
        "mproj_b": jnp.zeros((N_LAYER, 1, N_EMBD), jnp.float32),
    }


# ----------------------------- forward (Pallas) ------------------------------------
def gpt2_forward(params, idx, targets=None):
    B, T = idx.shape
    assert T <= BLOCK_SIZE
    # TODO(synk): embedding gather and cross-entropy loss stay as thin JAX glue.
    tok = params["wte"][idx]                        # (B, T, C)
    pos = params["wpe"][:T][None]                   # (1, T, C)
    x2d = (tok + pos).astype(jnp.float32).reshape(B * T, N_EMBD)

    logits = gpt2_fused(params, x2d, B, T).reshape(B, T, VOCAB)

    loss = None
    if targets is not None:
        logp = jax.nn.log_softmax(logits.reshape(-1, VOCAB), axis=-1)
        loss = -jnp.mean(jnp.take_along_axis(logp, targets.reshape(-1, 1), axis=-1))
    return logits, loss


# ----------------------------- pure-JAX reference ----------------------------------
def gpt2_reference(params, idx):
    B, T = idx.shape
    x = params["wte"][idx] + params["wpe"][:T][None]

    def ln(x, g, b):
        mu = jnp.mean(x, axis=-1, keepdims=True)
        var = jnp.mean((x - mu) ** 2, axis=-1, keepdims=True)
        return (x - mu) * lax.rsqrt(var + LN_EPS) * g + b

    for l in range(N_LAYER):
        aw = params["attn_w"][l].astype(jnp.float32)
        pw = params["proj_w"][l].astype(jnp.float32)
        fw = params["fc_w"][l].astype(jnp.float32)
        mw = params["mproj_w"][l].astype(jnp.float32)
        h = ln(x, params["ln1_g"][l], params["ln1_b"][l])
        qkv = h @ aw + params["attn_b"][l]
        q, k, v = jnp.split(qkv, 3, axis=-1)
        q = q.reshape(B, T, N_HEAD, HEAD_DIM).transpose(0, 2, 1, 3)
        k = k.reshape(B, T, N_HEAD, HEAD_DIM).transpose(0, 2, 1, 3)
        v = v.reshape(B, T, N_HEAD, HEAD_DIM).transpose(0, 2, 1, 3)
        s = jnp.einsum("bhqd,bhkd->bhqk", q, k) / math.sqrt(HEAD_DIM)
        mask = jnp.tril(jnp.ones((T, T), bool))
        s = jnp.where(mask[None, None], s, -jnp.inf)
        p = jax.nn.softmax(s, axis=-1)
        y = jnp.einsum("bhqk,bhkd->bhqd", p, v)
        y = y.transpose(0, 2, 1, 3).reshape(B, T, N_EMBD)
        x = x + (y @ pw + params["proj_b"][l])
        h = ln(x, params["ln2_g"][l], params["ln2_b"][l])
        h = _gelu_tanh(h @ fw + params["fc_b"][l])
        x = x + (h @ mw + params["mproj_b"][l])

    x = ln(x, params["ln_f_g"], params["ln_f_b"])
    return x @ params["lm_head_w"].astype(jnp.float32)


# ----------------------------------- main ------------------------------------------
if __name__ == "__main__":
    key = jax.random.PRNGKey(0)
    pkey, ikey, tkey = jax.random.split(key, 3)
    params = init_params(pkey)

    B, T = 2, 8
    idx = jax.random.randint(ikey, (B, T), 0, VOCAB, dtype=jnp.int32)
    targets = jax.random.randint(tkey, (B, T), 0, VOCAB, dtype=jnp.int32)

    fwd = jax.jit(gpt2_forward)
    logits, loss = fwd(params, idx, targets)
    logits = jax.block_until_ready(logits)
    loss = jax.block_until_ready(loss)

    ref = gpt2_reference(params, idx)
    # bf16 MXU operands + approx reciprocal loosen numerics vs the f32 reference
    np.testing.assert_allclose(np.asarray(logits), np.asarray(ref),
                               atol=2e-2, rtol=2e-2)
    assert np.isfinite(float(loss))

    print("KERNEL_OK")
</pallas_src>

<mosaic_0001>
module attributes {stable_mosaic.version = 11 : i64} {
  func.func @_gpt2_kernel(%arg0: memref<16x64xf32, #tpu.memory_space<vmem>>, %arg1: memref<2x1x64xf32, #tpu.memory_space<vmem>>, %arg2: memref<2x1x64xf32, #tpu.memory_space<vmem>>, %arg3: memref<2x64x192xbf16, #tpu.memory_space<vmem>>, %arg4: memref<2x1x192xf32, #tpu.memory_space<vmem>>, %arg5: memref<2x64x64xbf16, #tpu.memory_space<vmem>>, %arg6: memref<2x1x64xf32, #tpu.memory_space<vmem>>, %arg7: memref<2x1x64xf32, #tpu.memory_space<vmem>>, %arg8: memref<2x1x64xf32, #tpu.memory_space<vmem>>, %arg9: memref<2x64x256xbf16, #tpu.memory_space<vmem>>, %arg10: memref<2x1x256xf32, #tpu.memory_space<vmem>>, %arg11: memref<2x256x64xbf16, #tpu.memory_space<vmem>>, %arg12: memref<2x1x64xf32, #tpu.memory_space<vmem>>, %arg13: memref<1x64xf32, #tpu.memory_space<vmem>>, %arg14: memref<1x64xf32, #tpu.memory_space<vmem>>, %arg15: memref<64x128xbf16, #tpu.memory_space<vmem>>, %arg16: memref<16x128xf32, #tpu.memory_space<vmem>>) attributes {dimension_semantics = [], scalar_prefetch = 0 : i64, scratch_operands = 0 : i64, tpu.core_type = #tpu.core_type<tc>} {
    %c0 = arith.constant 0 : index
    %c0_0 = arith.constant 0 : index
    %0 = vector.load %arg0[%c0, %c0_0] : memref<16x64xf32, #tpu.memory_space<vmem>>, vector<16x64xf32>
    %1 = tpu.iota {dimensions = array<i32: 1>} : vector<2x8x8xi32>
    %2 = tpu.iota {dimensions = array<i32: 2>} : vector<2x8x8xi32>
    %3 = arith.cmpi sge, %1, %2 : vector<2x8x8xi32>
    %c0_1 = arith.constant 0 : index
    %c0_2 = arith.constant 0 : index
    %c0_3 = arith.constant 0 : index
    %4 = vector.load %arg1[%c0_1, %c0_2, %c0_3] : memref<2x1x64xf32, #tpu.memory_space<vmem>>, vector<1x1x64xf32>
    %5 = vector.shape_cast %4 : vector<1x1x64xf32> to vector<1x64xf32>
    %c0_4 = arith.constant 0 : index
    %c0_5 = arith.constant 0 : index
    %c0_6 = arith.constant 0 : index
    %6 = vector.load %arg2[%c0_4, %c0_5, %c0_6] : memref<2x1x64xf32, #tpu.memory_space<vmem>>, vector<1x1x64xf32>
    %7 = vector.shape_cast %6 : vector<1x1x64xf32> to vector<1x64xf32>
    %cst = arith.constant dense<0.000000e+00> : vector<16xf32>
    %8 = vector.multi_reduction <add>, %0, %cst [1] : vector<16x64xf32> to vector<16xf32>
    %9 = vector.shape_cast %8 : vector<16xf32> to vector<16x1xf32>
    %cst_7 = arith.constant 6.400000e+01 : f32
    %10 = vector.broadcast %cst_7 : f32 to vector<16x1xf32>
    %11 = arith.divf %9, %10 : vector<16x1xf32>
    %12 = vector.broadcast %11 : vector<16x1xf32> to vector<16x64xf32>
    %13 = arith.subf %0, %12 : vector<16x64xf32>
    %14 = arith.mulf %13, %13 : vector<16x64xf32>
    %cst_8 = arith.constant dense<0.000000e+00> : vector<16xf32>
    %15 = vector.multi_reduction <add>, %14, %cst_8 [1] : vector<16x64xf32> to vector<16xf32>
    %16 = vector.shape_cast %15 : vector<16xf32> to vector<16x1xf32>
    %cst_9 = arith.constant 6.400000e+01 : f32
    %17 = vector.broadcast %cst_9 : f32 to vector<16x1xf32>
    %18 = arith.divf %16, %17 : vector<16x1xf32>
    %19 = vector.broadcast %11 : vector<16x1xf32> to vector<16x64xf32>
    %20 = arith.subf %0, %19 : vector<16x64xf32>
    %cst_10 = arith.constant 9.99999974E-6 : f32
    %21 = vector.broadcast %cst_10 : f32 to vector<16x1xf32>
    %22 = arith.addf %18, %21 : vector<16x1xf32>
    %23 = math.rsqrt %22 : vector<16x1xf32>
    %24 = vector.broadcast %23 : vector<16x1xf32> to vector<16x64xf32>
    %25 = arith.mulf %20, %24 : vector<16x64xf32>
    %26 = vector.broadcast %5 : vector<1x64xf32> to vector<16x64xf32>
    %27 = arith.mulf %25, %26 : vector<16x64xf32>
    %28 = vector.broadcast %7 : vector<1x64xf32> to vector<16x64xf32>
    %29 = arith.addf %27, %28 : vector<16x64xf32>
    %30 = arith.truncf %29 : vector<16x64xf32> to vector<16x64xbf16>
    %c0_11 = arith.constant 0 : index
    %c0_12 = arith.constant 0 : index
    %c0_13 = arith.constant 0 : index
    %31 = vector.load %arg3[%c0_11, %c0_12, %c0_13] : memref<2x64x192xbf16, #tpu.memory_space<vmem>>, vector<1x64x192xbf16>
    %32 = vector.shape_cast %31 : vector<1x64x192xbf16> to vector<64x192xbf16>
    %cst_14 = arith.constant dense<0.000000e+00> : vector<16x192xf32>
    %33 = tpu.matmul %30, %32, %cst_14 {dimension_numbers = #tpu.dot_dimension_numbers<[1], [0], [0], [1], [0, 0, 1, 1], [], []>} : vector<16x64xbf16>, vector<64x192xbf16>, vector<16x192xf32> -> vector<16x192xf32>
    %c0_15 = arith.constant 0 : index
    %c0_16 = arith.constant 0 : index
    %c0_17 = arith.constant 0 : index
    %34 = vector.load %arg4[%c0_15, %c0_16, %c0_17] : memref<2x1x192xf32, #tpu.memory_space<vmem>>, vector<1x1x192xf32>
    %35 = vector.shape_cast %34 : vector<1x1x192xf32> to vector<1x192xf32>
    %36 = vector.broadcast %35 : vector<1x192xf32> to vector<16x192xf32>
    %37 = arith.addf %33, %36 : vector<16x192xf32>
    %38 = vector.extract_strided_slice %37 {offsets = [0, 0], sizes = [16, 16], strides = [1, 1]} : vector<16x192xf32> to vector<16x16xf32>
    %39 = vector.shape_cast %38 : vector<16x16xf32> to vector<2x8x16xf32>
    %40 = arith.truncf %39 : vector<2x8x16xf32> to vector<2x8x16xbf16>
    %41 = vector.extract_strided_slice %37 {offsets = [0, 64], sizes = [16, 16], strides = [1, 1]} : vector<16x192xf32> to vector<16x16xf32>
    %42 = vector.shape_cast %41 : vector<16x16xf32> to vector<2x8x16xf32>
    %43 = arith.truncf %42 : vector<2x8x16xf32> to vector<2x8x16xbf16>
    %44 = vector.extract_strided_slice %37 {offsets = [0, 128], sizes = [16, 16], strides = [1, 1]} : vector<16x192xf32> to vector<16x16xf32>
    %45 = vector.shape_cast %44 : vector<16x16xf32> to vector<2x8x16xf32>
    %46 = arith.truncf %45 : vector<2x8x16xf32> to vector<2x8x16xbf16>
    %cst_18 = arith.constant dense<0.000000e+00> : vector<2x8x8xf32>
    %47 = tpu.matmul %40, %43, %cst_18 {dimension_numbers = #tpu.dot_dimension_numbers<[2], [2], [1], [1], [0, 0, 0, 1, 1, 1], [0], [0]>} : vector<2x8x16xbf16>, vector<2x8x16xbf16>, vector<2x8x8xf32> -> vector<2x8x8xf32>
    %cst_19 = arith.constant 2.500000e-01 : f32
    %48 = vector.broadcast %cst_19 : f32 to vector<2x8x8xf32>
    %49 = arith.mulf %47, %48 : vector<2x8x8xf32>
    %cst_20 = arith.constant -1.000000e+30 : f32
    %50 = vector.broadcast %cst_20 : f32 to vector<2x8x8xf32>
    %51 = arith.select %3, %49, %50 : vector<2x8x8xi1>, vector<2x8x8xf32>
    %cst_21 = arith.constant dense<0xFF800000> : vector<2x8xf32>
    %52 = vector.multi_reduction <maximumf>, %51, %cst_21 [2] : vector<2x8x8xf32> to vector<2x8xf32>
    %53 = vector.shape_cast %52 : vector<2x8xf32> to vector<2x8x1xf32>
    %54 = vector.broadcast %53 : vector<2x8x1xf32> to vector<2x8x8xf32>
    %55 = arith.subf %51, %54 : vector<2x8x8xf32>
    %56 = math.exp %55 : vector<2x8x8xf32>
    %cst_22 = arith.constant dense<0.000000e+00> : vector<2x8xf32>
    %57 = vector.multi_reduction <add>, %56, %cst_22 [2] : vector<2x8x8xf32> to vector<2x8xf32>
    %58 = vector.shape_cast %57 : vector<2x8xf32> to vector<2x8x1xf32>
    %59 = tpu.reciprocal %58 {approx = true} : vector<2x8x1xf32> -> vector<2x8x1xf32>
    %60 = vector.broadcast %59 : vector<2x8x1xf32> to vector<2x8x8xf32>
    %61 = arith.mulf %56, %60 : vector<2x8x8xf32>
    %62 = arith.truncf %61 : vector<2x8x8xf32> to vector<2x8x8xbf16>
    %cst_23 = arith.constant dense<0.000000e+00> : vector<2x8x16xf32>
    %63 = tpu.matmul %62, %46, %cst_23 {dimension_numbers = #tpu.dot_dimension_numbers<[2], [1], [1], [2], [0, 0, 0, 1, 1, 2], [0], [0]>} : vector<2x8x8xbf16>, vector<2x8x16xbf16>, vector<2x8x16xf32> -> vector<2x8x16xf32>
    %64 = vector.shape_cast %63 : vector<2x8x16xf32> to vector<16x16xf32>
    %65 = vector.extract_strided_slice %37 {offsets = [0, 16], sizes = [16, 16], strides = [1, 1]} : vector<16x192xf32> to vector<16x16xf32>
    %66 = vector.shape_cast %65 : vector<16x16xf32> to vector<2x8x16xf32>
    %67 = arith.truncf %66 : vector<2x8x16xf32> to vector<2x8x16xbf16>
    %68 = vector.extract_strided_slice %37 {offsets = [0, 80], sizes = [16, 16], strides = [1, 1]} : vector<16x192xf32> to vector<16x16xf32>
    %69 = vector.shape_cast %68 : vector<16x16xf32> to vector<2x8x16xf32>
    %70 = arith.truncf %69 : vector<2x8x16xf32> to vector<2x8x16xbf16>
    %71 = vector.extract_strided_slice %37 {offsets = [0, 144], sizes = [16, 16], strides = [1, 1]} : vector<16x192xf32> to vector<16x16xf32>
    %72 = vector.shape_cast %71 : vector<16x16xf32> to vector<2x8x16xf32>
    %73 = arith.truncf %72 : vector<2x8x16xf32> to vector<2x8x16xbf16>
    %cst_24 = arith.constant dense<0.000000e+00> : vector<2x8x8xf32>
    %74 = tpu.matmul %67, %70, %cst_24 {dimension_numbers = #tpu.dot_dimension_numbers<[2], [2], [1], [1], [0, 0, 0, 1, 1, 1], [0], [0]>} : vector<2x8x16xbf16>, vector<2x8x16xbf16>, vector<2x8x8xf32> -> vector<2x8x8xf32>
    %cst_25 = arith.constant 2.500000e-01 : f32
    %75 = vector.broadcast %cst_25 : f32 to vector<2x8x8xf32>
    %76 = arith.mulf %74, %75 : vector<2x8x8xf32>
    %cst_26 = arith.constant -1.000000e+30 : f32
    %77 = vector.broadcast %cst_26 : f32 to vector<2x8x8xf32>
    %78 = arith.select %3, %76, %77 : vector<2x8x8xi1>, vector<2x8x8xf32>
    %cst_27 = arith.constant dense<0xFF800000> : vector<2x8xf32>
    %79 = vector.multi_reduction <maximumf>, %78, %cst_27 [2] : vector<2x8x8xf32> to vector<2x8xf32>
    %80 = vector.shape_cast %79 : vector<2x8xf32> to vector<2x8x1xf32>
    %81 = vector.broadcast %80 : vector<2x8x1xf32> to vector<2x8x8xf32>
    %82 = arith.subf %78, %81 : vector<2x8x8xf32>
    %83 = math.exp %82 : vector<2x8x8xf32>
    %cst_28 = arith.constant dense<0.000000e+00> : vector<2x8xf32>
    %84 = vector.multi_reduction <add>, %83, %cst_28 [2] : vector<2x8x8xf32> to vector<2x8xf32>
    %85 = vector.shape_cast %84 : vector<2x8xf32> to vector<2x8x1xf32>
    %86 = tpu.reciprocal %85 {approx = true} : vector<2x8x1xf32> -> vector<2x8x1xf32>
    %87 = vector.broadcast %86 : vector<2x8x1xf32> to vector<2x8x8xf32>
    %88 = arith.mulf %83, %87 : vector<2x8x8xf32>
    %89 = arith.truncf %88 : vector<2x8x8xf32> to vector<2x8x8xbf16>
    %cst_29 = arith.constant dense<0.000000e+00> : vector<2x8x16xf32>
    %90 = tpu.matmul %89, %73, %cst_29 {dimension_numbers = #tpu.dot_dimension_numbers<[2], [1], [1], [2], [0, 0, 0, 1, 1, 2], [0], [0]>} : vector<2x8x8xbf16>, vector<2x8x16xbf16>, vector<2x8x16xf32> -> vector<2x8x16xf32>
    %91 = vector.shape_cast %90 : vector<2x8x16xf32> to vector<16x16xf32>
    %92 = vector.extract_strided_slice %37 {offsets = [0, 32], sizes = [16, 16], strides = [1, 1]} : vector<16x192xf32> to vector<16x16xf32>
    %93 = vector.shape_cast %92 : vector<16x16xf32> to vector<2x8x16xf32>
    %94 = arith.truncf %93 : vector<2x8x16xf32> to vector<2x8x16xbf16>
    %95 = vector.extract_strided_slice %37 {offsets = [0, 96], sizes = [16, 16], strides = [1, 1]} : vector<16x192xf32> to vector<16x16xf32>
    %96 = vector.shape_cast %95 : vector<16x16xf32> to vector<2x8x16xf32>
    %97 = arith.truncf %96 : vector<2x8x16xf32> to vector<2x8x16xbf16>
    %98 = vector.extract_strided_slice %37 {offsets = [0, 160], sizes = [16, 16], strides = [1, 1]} : vector<16x192xf32> to vector<16x16xf32>
    %99 = vector.shape_cast %98 : vector<16x16xf32> to vector<2x8x16xf32>
    %100 = arith.truncf %99 : vector<2x8x16xf32> to vector<2x8x16xbf16>
    %cst_30 = arith.constant dense<0.000000e+00> : vector<2x8x8xf32>
    %101 = tpu.matmul %94, %97, %cst_30 {dimension_numbers = #tpu.dot_dimension_numbers<[2], [2], [1], [1], [0, 0, 0, 1, 1, 1], [0], [0]>} : vector<2x8x16xbf16>, vector<2x8x16xbf16>, vector<2x8x8xf32> -> vector<2x8x8xf32>
    %cst_31 = arith.constant 2.500000e-01 : f32
    %102 = vector.broadcast %cst_31 : f32 to vector<2x8x8xf32>
    %103 = arith.mulf %101, %102 : vector<2x8x8xf32>
    %cst_32 = arith.constant -1.000000e+30 : f32
    %104 = vector.broadcast %cst_32 : f32 to vector<2x8x8xf32>
    %105 = arith.select %3, %103, %104 : vector<2x8x8xi1>, vector<2x8x8xf32>
    %cst_33 = arith.constant dense<0xFF800000> : vector<2x8xf32>
    %106 = vector.multi_reduction <maximumf>, %105, %cst_33 [2] : vector<2x8x8xf32> to vector<2x8xf32>
    %107 = vector.shape_cast %106 : vector<2x8xf32> to vector<2x8x1xf32>
    %108 = vector.broadcast %107 : vector<2x8x1xf32> to vector<2x8x8xf32>
    %109 = arith.subf %105, %108 : vector<2x8x8xf32>
    %110 = math.exp %109 : vector<2x8x8xf32>
    %cst_34 = arith.constant dense<0.000000e+00> : vector<2x8xf32>
    %111 = vector.multi_reduction <add>, %110, %cst_34 [2] : vector<2x8x8xf32> to vector<2x8xf32>
    %112 = vector.shape_cast %111 : vector<2x8xf32> to vector<2x8x1xf32>
    %113 = tpu.reciprocal %112 {approx = true} : vector<2x8x1xf32> -> vector<2x8x1xf32>
    %114 = vector.broadcast %113 : vector<2x8x1xf32> to vector<2x8x8xf32>
    %115 = arith.mulf %110, %114 : vector<2x8x8xf32>
    %116 = arith.truncf %115 : vector<2x8x8xf32> to vector<2x8x8xbf16>
    %cst_35 = arith.constant dense<0.000000e+00> : vector<2x8x16xf32>
    %117 = tpu.matmul %116, %100, %cst_35 {dimension_numbers = #tpu.dot_dimension_numbers<[2], [1], [1], [2], [0, 0, 0, 1, 1, 2], [0], [0]>} : vector<2x8x8xbf16>, vector<2x8x16xbf16>, vector<2x8x16xf32> -> vector<2x8x16xf32>
    %118 = vector.shape_cast %117 : vector<2x8x16xf32> to vector<16x16xf32>
    %119 = vector.extract_strided_slice %37 {offsets = [0, 48], sizes = [16, 16], strides = [1, 1]} : vector<16x192xf32> to vector<16x16xf32>
    %120 = vector.shape_cast %119 : vector<16x16xf32> to vector<2x8x16xf32>
    %121 = arith.truncf %120 : vector<2x8x16xf32> to vector<2x8x16xbf16>
    %122 = vector.extract_strided_slice %37 {offsets = [0, 112], sizes = [16, 16], strides = [1, 1]} : vector<16x192xf32> to vector<16x16xf32>
    %123 = vector.shape_cast %122 : vector<16x16xf32> to vector<2x8x16xf32>
    %124 = arith.truncf %123 : vector<2x8x16xf32> to vector<2x8x16xbf16>
    %125 = vector.extract_strided_slice %37 {offsets = [0, 176], sizes = [16, 16], strides = [1, 1]} : vector<16x192xf32> to vector<16x16xf32>
    %126 = vector.shape_cast %125 : vector<16x16xf32> to vector<2x8x16xf32>
    %127 = arith.truncf %126 : vector<2x8x16xf32> to vector<2x8x16xbf16>
    %cst_36 = arith.constant dense<0.000000e+00> : vector<2x8x8xf32>
    %128 = tpu.matmul %121, %124, %cst_36 {dimension_numbers = #tpu.dot_dimension_numbers<[2], [2], [1], [1], [0, 0, 0, 1, 1, 1], [0], [0]>} : vector<2x8x16xbf16>, vector<2x8x16xbf16>, vector<2x8x8xf32> -> vector<2x8x8xf32>
    %cst_37 = arith.constant 2.500000e-01 : f32
    %129 = vector.broadcast %cst_37 : f32 to vector<2x8x8xf32>
    %130 = arith.mulf %128, %129 : vector<2x8x8xf32>
    %cst_38 = arith.constant -1.000000e+30 : f32
    %131 = vector.broadcast %cst_38 : f32 to vector<2x8x8xf32>
    %132 = arith.select %3, %130, %131 : vector<2x8x8xi1>, vector<2x8x8xf32>
    %cst_39 = arith.constant dense<0xFF800000> : vector<2x8xf32>
    %133 = vector.multi_reduction <maximumf>, %132, %cst_39 [2] : vector<2x8x8xf32> to vector<2x8xf32>
    %134 = vector.shape_cast %133 : vector<2x8xf32> to vector<2x8x1xf32>
    %135 = vector.broadcast %134 : vector<2x8x1xf32> to vector<2x8x8xf32>
    %136 = arith.subf %132, %135 : vector<2x8x8xf32>
    %137 = math.exp %136 : vector<2x8x8xf32>
    %cst_40 = arith.constant dense<0.000000e+00> : vector<2x8xf32>
    %138 = vector.multi_reduction <add>, %137, %cst_40 [2] : vector<2x8x8xf32> to vector<2x8xf32>
    %139 = vector.shape_cast %138 : vector<2x8xf32> to vector<2x8x1xf32>
    %140 = tpu.reciprocal %139 {approx = true} : vector<2x8x1xf32> -> vector<2x8x1xf32>
    %141 = vector.broadcast %140 : vector<2x8x1xf32> to vector<2x8x8xf32>
    %142 = arith.mulf %137, %141 : vector<2x8x8xf32>
    %143 = arith.truncf %142 : vector<2x8x8xf32> to vector<2x8x8xbf16>
    %cst_41 = arith.constant dense<0.000000e+00> : vector<2x8x16xf32>
    %144 = tpu.matmul %143, %127, %cst_41 {dimension_numbers = #tpu.dot_dimension_numbers<[2], [1], [1], [2], [0, 0, 0, 1, 1, 2], [0], [0]>} : vector<2x8x8xbf16>, vector<2x8x16xbf16>, vector<2x8x16xf32> -> vector<2x8x16xf32>
    %145 = vector.shape_cast %144 : vector<2x8x16xf32> to vector<16x16xf32>
    %146 = tpu.concatenate %64, %91, %118, %145 in 1 : vector<16x16xf32>, vector<16x16xf32>, vector<16x16xf32>, vector<16x16xf32> -> vector<16x64xf32>
    %147 = arith.truncf %146 : vector<16x64xf32> to vector<16x64xbf16>
    %c0_42 = arith.constant 0 : index
    %c0_43 = arith.constant 0 : index
    %c0_44 = arith.constant 0 : index
    %148 = vector.load %arg5[%c0_42, %c0_43, %c0_44] : memref<2x64x64xbf16, #tpu.memory_space<vmem>>, vector<1x64x64xbf16>
    %149 = vector.shape_cast %148 : vector<1x64x64xbf16> to vector<64x64xbf16>
    %cst_45 = arith.constant dense<0.000000e+00> : vector<16x64xf32>
    %150 = tpu.matmul %147, %149, %cst_45 {dimension_numbers = #tpu.dot_dimension_numbers<[1], [0], [0], [1], [0, 0, 1, 1], [], []>} : vector<16x64xbf16>, vector<64x64xbf16>, vector<16x64xf32> -> vector<16x64xf32>
    %151 = arith.addf %0, %150 : vector<16x64xf32>
    %c0_46 = arith.constant 0 : index
    %c0_47 = arith.constant 0 : index
    %c0_48 = arith.constant 0 : index
    %152 = vector.load %arg6[%c0_46, %c0_47, %c0_48] : memref<2x1x64xf32, #tpu.memory_space<vmem>>, vector<1x1x64xf32>
    %153 = vector.shape_cast %152 : vector<1x1x64xf32> to vector<1x64xf32>
    %154 = vector.broadcast %153 : vector<1x64xf32> to vector<16x64xf32>
    %155 = arith.addf %151, %154 : vector<16x64xf32>
    %c0_49 = arith.constant 0 : index
    %c0_50 = arith.constant 0 : index
    %c0_51 = arith.constant 0 : index
    %156 = vector.load %arg7[%c0_49, %c0_50, %c0_51] : memref<2x1x64xf32, #tpu.memory_space<vmem>>, vector<1x1x64xf32>
    %157 = vector.shape_cast %156 : vector<1x1x64xf32> to vector<1x64xf32>
    %c0_52 = arith.constant 0 : index
    %c0_53 = arith.constant 0 : index
    %c0_54 = arith.constant 0 : index
    %158 = vector.load %arg8[%c0_52, %c0_53, %c0_54] : memref<2x1x64xf32, #tpu.memory_space<vmem>>, vector<1x1x64xf32>
    %159 = vector.shape_cast %158 : vector<1x1x64xf32> to vector<1x64xf32>
    %cst_55 = arith.constant dense<0.000000e+00> : vector<16xf32>
    %160 = vector.multi_reduction <add>, %155, %cst_55 [1] : vector<16x64xf32> to vector<16xf32>
    %161 = vector.shape_cast %160 : vector<16xf32> to vector<16x1xf32>
    %cst_56 = arith.constant 6.400000e+01 : f32
    %162 = vector.broadcast %cst_56 : f32 to vector<16x1xf32>
    %163 = arith.divf %161, %162 : vector<16x1xf32>
    %164 = vector.broadcast %163 : vector<16x1xf32> to vector<16x64xf32>
    %165 = arith.subf %155, %164 : vector<16x64xf32>
    %166 = arith.mulf %165, %165 : vector<16x64xf32>
    %cst_57 = arith.constant dense<0.000000e+00> : vector<16xf32>
    %167 = vector.multi_reduction <add>, %166, %cst_57 [1] : vector<16x64xf32> to vector<16xf32>
    %168 = vector.shape_cast %167 : vector<16xf32> to vector<16x1xf32>
    %cst_58 = arith.constant 6.400000e+01 : f32
    %169 = vector.broadcast %cst_58 : f32 to vector<16x1xf32>
    %170 = arith.divf %168, %169 : vector<16x1xf32>
    %171 = vector.broadcast %163 : vector<16x1xf32> to vector<16x64xf32>
    %172 = arith.subf %155, %171 : vector<16x64xf32>
    %cst_59 = arith.constant 9.99999974E-6 : f32
    %173 = vector.broadcast %cst_59 : f32 to vector<16x1xf32>
    %174 = arith.addf %170, %173 : vector<16x1xf32>
    %175 = math.rsqrt %174 : vector<16x1xf32>
    %176 = vector.broadcast %175 : vector<16x1xf32> to vector<16x64xf32>
    %177 = arith.mulf %172, %176 : vector<16x64xf32>
    %178 = vector.broadcast %157 : vector<1x64xf32> to vector<16x64xf32>
    %179 = arith.mulf %177, %178 : vector<16x64xf32>
    %180 = vector.broadcast %159 : vector<1x64xf32> to vector<16x64xf32>
    %181 = arith.addf %179, %180 : vector<16x64xf32>
    %182 = arith.truncf %181 : vector<16x64xf32> to vector<16x64xbf16>
    %c0_60 = arith.constant 0 : index
    %c0_61 = arith.constant 0 : index
    %c0_62 = arith.constant 0 : index
    %183 = vector.load %arg9[%c0_60, %c0_61, %c0_62] : memref<2x64x256xbf16, #tpu.memory_space<vmem>>, vector<1x64x256xbf16>
    %184 = vector.shape_cast %183 : vector<1x64x256xbf16> to vector<64x256xbf16>
    %cst_63 = arith.constant dense<0.000000e+00> : vector<16x256xf32>
    %185 = tpu.matmul %182, %184, %cst_63 {dimension_numbers = #tpu.dot_dimension_numbers<[1], [0], [0], [1], [0, 0, 1, 1], [], []>} : vector<16x64xbf16>, vector<64x256xbf16>, vector<16x256xf32> -> vector<16x256xf32>
    %c0_64 = arith.constant 0 : index
    %c0_65 = arith.constant 0 : index
    %c0_66 = arith.constant 0 : index
    %186 = vector.load %arg10[%c0_64, %c0_65, %c0_66] : memref<2x1x256xf32, #tpu.memory_space<vmem>>, vector<1x1x256xf32>
    %187 = vector.shape_cast %186 : vector<1x1x256xf32> to vector<1x256xf32>
    %188 = vector.broadcast %187 : vector<1x256xf32> to vector<16x256xf32>
    %189 = arith.addf %185, %188 : vector<16x256xf32>
    %cst_67 = arith.constant 5.000000e-01 : f32
    %190 = vector.broadcast %cst_67 : f32 to vector<16x256xf32>
    %191 = arith.mulf %190, %189 : vector<16x256xf32>
    %cst_68 = arith.constant 4.471500e-02 : f32
    %192 = vector.broadcast %cst_68 : f32 to vector<16x256xf32>
    %193 = arith.mulf %192, %189 : vector<16x256xf32>
    %194 = arith.mulf %193, %189 : vector<16x256xf32>
    %195 = arith.mulf %194, %189 : vector<16x256xf32>
    %196 = arith.addf %189, %195 : vector<16x256xf32>
    %cst_69 = arith.constant 0.797884583 : f32
    %197 = vector.broadcast %cst_69 : f32 to vector<16x256xf32>
    %198 = arith.mulf %197, %196 : vector<16x256xf32>
    %199 = math.tanh %198 : vector<16x256xf32>
    %cst_70 = arith.constant 1.000000e+00 : f32
    %200 = vector.broadcast %cst_70 : f32 to vector<16x256xf32>
    %201 = arith.addf %200, %199 : vector<16x256xf32>
    %202 = arith.mulf %191, %201 : vector<16x256xf32>
    %203 = arith.truncf %202 : vector<16x256xf32> to vector<16x256xbf16>
    %c0_71 = arith.constant 0 : index
    %c0_72 = arith.constant 0 : index
    %c0_73 = arith.constant 0 : index
    %204 = vector.load %arg11[%c0_71, %c0_72, %c0_73] : memref<2x256x64xbf16, #tpu.memory_space<vmem>>, vector<1x256x64xbf16>
    %205 = vector.shape_cast %204 : vector<1x256x64xbf16> to vector<256x64xbf16>
    %cst_74 = arith.constant dense<0.000000e+00> : vector<16x64xf32>
    %206 = tpu.matmul %203, %205, %cst_74 {dimension_numbers = #tpu.dot_dimension_numbers<[1], [0], [0], [1], [0, 0, 1, 1], [], []>} : vector<16x256xbf16>, vector<256x64xbf16>, vector<16x64xf32> -> vector<16x64xf32>
    %207 = arith.addf %155, %206 : vector<16x64xf32>
    %c0_75 = arith.constant 0 : index
    %c0_76 = arith.constant 0 : index
    %c0_77 = arith.constant 0 : index
    %208 = vector.load %arg12[%c0_75, %c0_76, %c0_77] : memref<2x1x64xf32, #tpu.memory_space<vmem>>, vector<1x1x64xf32>
    %209 = vector.shape_cast %208 : vector<1x1x64xf32> to vector<1x64xf32>
    %210 = vector.broadcast %209 : vector<1x64xf32> to vector<16x64xf32>
    %211 = arith.addf %207, %210 : vector<16x64xf32>
    %c1 = arith.constant 1 : index
    %c0_78 = arith.constant 0 : index
    %c0_79 = arith.constant 0 : index
    %212 = vector.load %arg1[%c1, %c0_78, %c0_79] : memref<2x1x64xf32, #tpu.memory_space<vmem>>, vector<1x1x64xf32>
    %213 = vector.shape_cast %212 : vector<1x1x64xf32> to vector<1x64xf32>
    %c1_80 = arith.constant 1 : index
    %c0_81 = arith.constant 0 : index
    %c0_82 = arith.constant 0 : index
    %214 = vector.load %arg2[%c1_80, %c0_81, %c0_82] : memref<2x1x64xf32, #tpu.memory_space<vmem>>, vector<1x1x64xf32>
    %215 = vector.shape_cast %214 : vector<1x1x64xf32> to vector<1x64xf32>
    %cst_83 = arith.constant dense<0.000000e+00> : vector<16xf32>
    %216 = vector.multi_reduction <add>, %211, %cst_83 [1] : vector<16x64xf32> to vector<16xf32>
    %217 = vector.shape_cast %216 : vector<16xf32> to vector<16x1xf32>
    %cst_84 = arith.constant 6.400000e+01 : f32
    %218 = vector.broadcast %cst_84 : f32 to vector<16x1xf32>
    %219 = arith.divf %217, %218 : vector<16x1xf32>
    %220 = vector.broadcast %219 : vector<16x1xf32> to vector<16x64xf32>
    %221 = arith.subf %211, %220 : vector<16x64xf32>
    %222 = arith.mulf %221, %221 : vector<16x64xf32>
    %cst_85 = arith.constant dense<0.000000e+00> : vector<16xf32>
    %223 = vector.multi_reduction <add>, %222, %cst_85 [1] : vector<16x64xf32> to vector<16xf32>
    %224 = vector.shape_cast %223 : vector<16xf32> to vector<16x1xf32>
    %cst_86 = arith.constant 6.400000e+01 : f32
    %225 = vector.broadcast %cst_86 : f32 to vector<16x1xf32>
    %226 = arith.divf %224, %225 : vector<16x1xf32>
    %227 = vector.broadcast %219 : vector<16x1xf32> to vector<16x64xf32>
    %228 = arith.subf %211, %227 : vector<16x64xf32>
    %cst_87 = arith.constant 9.99999974E-6 : f32
    %229 = vector.broadcast %cst_87 : f32 to vector<16x1xf32>
    %230 = arith.addf %226, %229 : vector<16x1xf32>
    %231 = math.rsqrt %230 : vector<16x1xf32>
    %232 = vector.broadcast %231 : vector<16x1xf32> to vector<16x64xf32>
    %233 = arith.mulf %228, %232 : vector<16x64xf32>
    %234 = vector.broadcast %213 : vector<1x64xf32> to vector<16x64xf32>
    %235 = arith.mulf %233, %234 : vector<16x64xf32>
    %236 = vector.broadcast %215 : vector<1x64xf32> to vector<16x64xf32>
    %237 = arith.addf %235, %236 : vector<16x64xf32>
    %238 = arith.truncf %237 : vector<16x64xf32> to vector<16x64xbf16>
    %c1_88 = arith.constant 1 : index
    %c0_89 = arith.constant 0 : index
    %c0_90 = arith.constant 0 : index
    %239 = vector.load %arg3[%c1_88, %c0_89, %c0_90] : memref<2x64x192xbf16, #tpu.memory_space<vmem>>, vector<1x64x192xbf16>
    %240 = vector.shape_cast %239 : vector<1x64x192xbf16> to vector<64x192xbf16>
    %cst_91 = arith.constant dense<0.000000e+00> : vector<16x192xf32>
    %241 = tpu.matmul %238, %240, %cst_91 {dimension_numbers = #tpu.dot_dimension_numbers<[1], [0], [0], [1], [0, 0, 1, 1], [], []>} : vector<16x64xbf16>, vector<64x192xbf16>, vector<16x192xf32> -> vector<16x192xf32>
    %c1_92 = arith.constant 1 : index
    %c0_93 = arith.constant 0 : index
    %c0_94 = arith.constant 0 : index
    %242 = vector.load %arg4[%c1_92, %c0_93, %c0_94] : memref<2x1x192xf32, #tpu.memory_space<vmem>>, vector<1x1x192xf32>
    %243 = vector.shape_cast %242 : vector<1x1x192xf32> to vector<1x192xf32>
    %244 = vector.broadcast %243 : vector<1x192xf32> to vector<16x192xf32>
    %245 = arith.addf %241, %244 : vector<16x192xf32>
    %246 = vector.extract_strided_slice %245 {offsets = [0, 0], sizes = [16, 16], strides = [1, 1]} : vector<16x192xf32> to vector<16x16xf32>
    %247 = vector.shape_cast %246 : vector<16x16xf32> to vector<2x8x16xf32>
    %248 = arith.truncf %247 : vector<2x8x16xf32> to vector<2x8x16xbf16>
    %249 = vector.extract_strided_slice %245 {offsets = [0, 64], sizes = [16, 16], strides = [1, 1]} : vector<16x192xf32> to vector<16x16xf32>
    %250 = vector.shape_cast %249 : vector<16x16xf32> to vector<2x8x16xf32>
    %251 = arith.truncf %250 : vector<2x8x16xf32> to vector<2x8x16xbf16>
    %252 = vector.extract_strided_slice %245 {offsets = [0, 128], sizes = [16, 16], strides = [1, 1]} : vector<16x192xf32> to vector<16x16xf32>
    %253 = vector.shape_cast %252 : vector<16x16xf32> to vector<2x8x16xf32>
    %254 = arith.truncf %253 : vector<2x8x16xf32> to vector<2x8x16xbf16>
    %cst_95 = arith.constant dense<0.000000e+00> : vector<2x8x8xf32>
    %255 = tpu.matmul %248, %251, %cst_95 {dimension_numbers = #tpu.dot_dimension_numbers<[2], [2], [1], [1], [0, 0, 0, 1, 1, 1], [0], [0]>} : vector<2x8x16xbf16>, vector<2x8x16xbf16>, vector<2x8x8xf32> -> vector<2x8x8xf32>
    %cst_96 = arith.constant 2.500000e-01 : f32
    %256 = vector.broadcast %cst_96 : f32 to vector<2x8x8xf32>
    %257 = arith.mulf %255, %256 : vector<2x8x8xf32>
    %cst_97 = arith.constant -1.000000e+30 : f32
    %258 = vector.broadcast %cst_97 : f32 to vector<2x8x8xf32>
    %259 = arith.select %3, %257, %258 : vector<2x8x8xi1>, vector<2x8x8xf32>
    %cst_98 = arith.constant dense<0xFF800000> : vector<2x8xf32>
    %260 = vector.multi_reduction <maximumf>, %259, %cst_98 [2] : vector<2x8x8xf32> to vector<2x8xf32>
    %261 = vector.shape_cast %260 : vector<2x8xf32> to vector<2x8x1xf32>
    %262 = vector.broadcast %261 : vector<2x8x1xf32> to vector<2x8x8xf32>
    %263 = arith.subf %259, %262 : vector<2x8x8xf32>
    %264 = math.exp %263 : vector<2x8x8xf32>
    %cst_99 = arith.constant dense<0.000000e+00> : vector<2x8xf32>
    %265 = vector.multi_reduction <add>, %264, %cst_99 [2] : vector<2x8x8xf32> to vector<2x8xf32>
    %266 = vector.shape_cast %265 : vector<2x8xf32> to vector<2x8x1xf32>
    %267 = tpu.reciprocal %266 {approx = true} : vector<2x8x1xf32> -> vector<2x8x1xf32>
    %268 = vector.broadcast %267 : vector<2x8x1xf32> to vector<2x8x8xf32>
    %269 = arith.mulf %264, %268 : vector<2x8x8xf32>
    %270 = arith.truncf %269 : vector<2x8x8xf32> to vector<2x8x8xbf16>
    %cst_100 = arith.constant dense<0.000000e+00> : vector<2x8x16xf32>
    %271 = tpu.matmul %270, %254, %cst_100 {dimension_numbers = #tpu.dot_dimension_numbers<[2], [1], [1], [2], [0, 0, 0, 1, 1, 2], [0], [0]>} : vector<2x8x8xbf16>, vector<2x8x16xbf16>, vector<2x8x16xf32> -> vector<2x8x16xf32>
    %272 = vector.shape_cast %271 : vector<2x8x16xf32> to vector<16x16xf32>
    %273 = vector.extract_strided_slice %245 {offsets = [0, 16], sizes = [16, 16], strides = [1, 1]} : vector<16x192xf32> to vector<16x16xf32>
    %274 = vector.shape_cast %273 : vector<16x16xf32> to vector<2x8x16xf32>
    %275 = arith.truncf %274 : vector<2x8x16xf32> to vector<2x8x16xbf16>
    %276 = vector.extract_strided_slice %245 {offsets = [0, 80], sizes = [16, 16], strides = [1, 1]} : vector<16x192xf32> to vector<16x16xf32>
    %277 = vector.shape_cast %276 : vector<16x16xf32> to vector<2x8x16xf32>
    %278 = arith.truncf %277 : vector<2x8x16xf32> to vector<2x8x16xbf16>
    %279 = vector.extract_strided_slice %245 {offsets = [0, 144], sizes = [16, 16], strides = [1, 1]} : vector<16x192xf32> to vector<16x16xf32>
    %280 = vector.shape_cast %279 : vector<16x16xf32> to vector<2x8x16xf32>
    %281 = arith.truncf %280 : vector<2x8x16xf32> to vector<2x8x16xbf16>
    %cst_101 = arith.constant dense<0.000000e+00> : vector<2x8x8xf32>
    %282 = tpu.matmul %275, %278, %cst_101 {dimension_numbers = #tpu.dot_dimension_numbers<[2], [2], [1], [1], [0, 0, 0, 1, 1, 1], [0], [0]>} : vector<2x8x16xbf16>, vector<2x8x16xbf16>, vector<2x8x8xf32> -> vector<2x8x8xf32>
    %cst_102 = arith.constant 2.500000e-01 : f32
    %283 = vector.broadcast %cst_102 : f32 to vector<2x8x8xf32>
    %284 = arith.mulf %282, %283 : vector<2x8x8xf32>
    %cst_103 = arith.constant -1.000000e+30 : f32
    %285 = vector.broadcast %cst_103 : f32 to vector<2x8x8xf32>
    %286 = arith.select %3, %284, %285 : vector<2x8x8xi1>, vector<2x8x8xf32>
    %cst_104 = arith.constant dense<0xFF800000> : vector<2x8xf32>
    %287 = vector.multi_reduction <maximumf>, %286, %cst_104 [2] : vector<2x8x8xf32> to vector<2x8xf32>
    %288 = vector.shape_cast %287 : vector<2x8xf32> to vector<2x8x1xf32>
    %289 = vector.broadcast %288 : vector<2x8x1xf32> to vector<2x8x8xf32>
    %290 = arith.subf %286, %289 : vector<2x8x8xf32>
    %291 = math.exp %290 : vector<2x8x8xf32>
    %cst_105 = arith.constant dense<0.000000e+00> : vector<2x8xf32>
    %292 = vector.multi_reduction <add>, %291, %cst_105 [2] : vector<2x8x8xf32> to vector<2x8xf32>
    %293 = vector.shape_cast %292 : vector<2x8xf32> to vector<2x8x1xf32>
    %294 = tpu.reciprocal %293 {approx = true} : vector<2x8x1xf32> -> vector<2x8x1xf32>
    %295 = vector.broadcast %294 : vector<2x8x1xf32> to vector<2x8x8xf32>
    %296 = arith.mulf %291, %295 : vector<2x8x8xf32>
    %297 = arith.truncf %296 : vector<2x8x8xf32> to vector<2x8x8xbf16>
    %cst_106 = arith.constant dense<0.000000e+00> : vector<2x8x16xf32>
    %298 = tpu.matmul %297, %281, %cst_106 {dimension_numbers = #tpu.dot_dimension_numbers<[2], [1], [1], [2], [0, 0, 0, 1, 1, 2], [0], [0]>} : vector<2x8x8xbf16>, vector<2x8x16xbf16>, vector<2x8x16xf32> -> vector<2x8x16xf32>
    %299 = vector.shape_cast %298 : vector<2x8x16xf32> to vector<16x16xf32>
    %300 = vector.extract_strided_slice %245 {offsets = [0, 32], sizes = [16, 16], strides = [1, 1]} : vector<16x192xf32> to vector<16x16xf32>
    %301 = vector.shape_cast %300 : vector<16x16xf32> to vector<2x8x16xf32>
    %302 = arith.truncf %301 : vector<2x8x16xf32> to vector<2x8x16xbf16>
    %303 = vector.extract_strided_slice %245 {offsets = [0, 96], sizes = [16, 16], strides = [1, 1]} : vector<16x192xf32> to vector<16x16xf32>
    %304 = vector.shape_cast %303 : vector<16x16xf32> to vector<2x8x16xf32>
    %305 = arith.truncf %304 : vector<2x8x16xf32> to vector<2x8x16xbf16>
    %306 = vector.extract_strided_slice %245 {offsets = [0, 160], sizes = [16, 16], strides = [1, 1]} : vector<16x192xf32> to vector<16x16xf32>
    %307 = vector.shape_cast %306 : vector<16x16xf32> to vector<2x8x16xf32>
    %308 = arith.truncf %307 : vector<2x8x16xf32> to vector<2x8x16xbf16>
    %cst_107 = arith.constant dense<0.000000e+00> : vector<2x8x8xf32>
    %309 = tpu.matmul %302, %305, %cst_107 {dimension_numbers = #tpu.dot_dimension_numbers<[2], [2], [1], [1], [0, 0, 0, 1, 1, 1], [0], [0]>} : vector<2x8x16xbf16>, vector<2x8x16xbf16>, vector<2x8x8xf32> -> vector<2x8x8xf32>
    %cst_108 = arith.constant 2.500000e-01 : f32
    %310 = vector.broadcast %cst_108 : f32 to vector<2x8x8xf32>
    %311 = arith.mulf %309, %310 : vector<2x8x8xf32>
    %cst_109 = arith.constant -1.000000e+30 : f32
    %312 = vector.broadcast %cst_109 : f32 to vector<2x8x8xf32>
    %313 = arith.select %3, %311, %312 : vector<2x8x8xi1>, vector<2x8x8xf32>
    %cst_110 = arith.constant dense<0xFF800000> : vector<2x8xf32>
    %314 = vector.multi_reduction <maximumf>, %313, %cst_110 [2] : vector<2x8x8xf32> to vector<2x8xf32>
    %315 = vector.shape_cast %314 : vector<2x8xf32> to vector<2x8x1xf32>
    %316 = vector.broadcast %315 : vector<2x8x1xf32> to vector<2x8x8xf32>
    %317 = arith.subf %313, %316 : vector<2x8x8xf32>
    %318 = math.exp %317 : vector<2x8x8xf32>
    %cst_111 = arith.constant dense<0.000000e+00> : vector<2x8xf32>
    %319 = vector.multi_reduction <add>, %318, %cst_111 [2] : vector<2x8x8xf32> to vector<2x8xf32>
    %320 = vector.shape_cast %319 : vector<2x8xf32> to vector<2x8x1xf32>
    %321 = tpu.reciprocal %320 {approx = true} : vector<2x8x1xf32> -> vector<2x8x1xf32>
    %322 = vector.broadcast %321 : vector<2x8x1xf32> to vector<2x8x8xf32>
    %323 = arith.mulf %318, %322 : vector<2x8x8xf32>
    %324 = arith.truncf %323 : vector<2x8x8xf32> to vector<2x8x8xbf16>
    %cst_112 = arith.constant dense<0.000000e+00> : vector<2x8x16xf32>
    %325 = tpu.matmul %324, %308, %cst_112 {dimension_numbers = #tpu.dot_dimension_numbers<[2], [1], [1], [2], [0, 0, 0, 1, 1, 2], [0], [0]>} : vector<2x8x8xbf16>, vector<2x8x16xbf16>, vector<2x8x16xf32> -> vector<2x8x16xf32>
    %326 = vector.shape_cast %325 : vector<2x8x16xf32> to vector<16x16xf32>
    %327 = vector.extract_strided_slice %245 {offsets = [0, 48], sizes = [16, 16], strides = [1, 1]} : vector<16x192xf32> to vector<16x16xf32>
    %328 = vector.shape_cast %327 : vector<16x16xf32> to vector<2x8x16xf32>
    %329 = arith.truncf %328 : vector<2x8x16xf32> to vector<2x8x16xbf16>
    %330 = vector.extract_strided_slice %245 {offsets = [0, 112], sizes = [16, 16], strides = [1, 1]} : vector<16x192xf32> to vector<16x16xf32>
    %331 = vector.shape_cast %330 : vector<16x16xf32> to vector<2x8x16xf32>
    %332 = arith.truncf %331 : vector<2x8x16xf32> to vector<2x8x16xbf16>
    %333 = vector.extract_strided_slice %245 {offsets = [0, 176], sizes = [16, 16], strides = [1, 1]} : vector<16x192xf32> to vector<16x16xf32>
    %334 = vector.shape_cast %333 : vector<16x16xf32> to vector<2x8x16xf32>
    %335 = arith.truncf %334 : vector<2x8x16xf32> to vector<2x8x16xbf16>
    %cst_113 = arith.constant dense<0.000000e+00> : vector<2x8x8xf32>
    %336 = tpu.matmul %329, %332, %cst_113 {dimension_numbers = #tpu.dot_dimension_numbers<[2], [2], [1], [1], [0, 0, 0, 1, 1, 1], [0], [0]>} : vector<2x8x16xbf16>, vector<2x8x16xbf16>, vector<2x8x8xf32> -> vector<2x8x8xf32>
    %cst_114 = arith.constant 2.500000e-01 : f32
    %337 = vector.broadcast %cst_114 : f32 to vector<2x8x8xf32>
    %338 = arith.mulf %336, %337 : vector<2x8x8xf32>
    %cst_115 = arith.constant -1.000000e+30 : f32
    %339 = vector.broadcast %cst_115 : f32 to vector<2x8x8xf32>
    %340 = arith.select %3, %338, %339 : vector<2x8x8xi1>, vector<2x8x8xf32>
    %cst_116 = arith.constant dense<0xFF800000> : vector<2x8xf32>
    %341 = vector.multi_reduction <maximumf>, %340, %cst_116 [2] : vector<2x8x8xf32> to vector<2x8xf32>
    %342 = vector.shape_cast %341 : vector<2x8xf32> to vector<2x8x1xf32>
    %343 = vector.broadcast %342 : vector<2x8x1xf32> to vector<2x8x8xf32>
    %344 = arith.subf %340, %343 : vector<2x8x8xf32>
    %345 = math.exp %344 : vector<2x8x8xf32>
    %cst_117 = arith.constant dense<0.000000e+00> : vector<2x8xf32>
    %346 = vector.multi_reduction <add>, %345, %cst_117 [2] : vector<2x8x8xf32> to vector<2x8xf32>
    %347 = vector.shape_cast %346 : vector<2x8xf32> to vector<2x8x1xf32>
    %348 = tpu.reciprocal %347 {approx = true} : vector<2x8x1xf32> -> vector<2x8x1xf32>
    %349 = vector.broadcast %348 : vector<2x8x1xf32> to vector<2x8x8xf32>
    %350 = arith.mulf %345, %349 : vector<2x8x8xf32>
    %351 = arith.truncf %350 : vector<2x8x8xf32> to vector<2x8x8xbf16>
    %cst_118 = arith.constant dense<0.000000e+00> : vector<2x8x16xf32>
    %352 = tpu.matmul %351, %335, %cst_118 {dimension_numbers = #tpu.dot_dimension_numbers<[2], [1], [1], [2], [0, 0, 0, 1, 1, 2], [0], [0]>} : vector<2x8x8xbf16>, vector<2x8x16xbf16>, vector<2x8x16xf32> -> vector<2x8x16xf32>
    %353 = vector.shape_cast %352 : vector<2x8x16xf32> to vector<16x16xf32>
    %354 = tpu.concatenate %272, %299, %326, %353 in 1 : vector<16x16xf32>, vector<16x16xf32>, vector<16x16xf32>, vector<16x16xf32> -> vector<16x64xf32>
    %355 = arith.truncf %354 : vector<16x64xf32> to vector<16x64xbf16>
    %c1_119 = arith.constant 1 : index
    %c0_120 = arith.constant 0 : index
    %c0_121 = arith.constant 0 : index
    %356 = vector.load %arg5[%c1_119, %c0_120, %c0_121] : memref<2x64x64xbf16, #tpu.memory_space<vmem>>, vector<1x64x64xbf16>
    %357 = vector.shape_cast %356 : vector<1x64x64xbf16> to vector<64x64xbf16>
    %cst_122 = arith.constant dense<0.000000e+00> : vector<16x64xf32>
    %358 = tpu.matmul %355, %357, %cst_122 {dimension_numbers = #tpu.dot_dimension_numbers<[1], [0], [0], [1], [0, 0, 1, 1], [], []>} : vector<16x64xbf16>, vector<64x64xbf16>, vector<16x64xf32> -> vector<16x64xf32>
    %359 = arith.addf %211, %358 : vector<16x64xf32>
    %c1_123 = arith.constant 1 : index
    %c0_124 = arith.constant 0 : index
    %c0_125 = arith.constant 0 : index
    %360 = vector.load %arg6[%c1_123, %c0_124, %c0_125] : memref<2x1x64xf32, #tpu.memory_space<vmem>>, vector<1x1x64xf32>
    %361 = vector.shape_cast %360 : vector<1x1x64xf32> to vector<1x64xf32>
    %362 = vector.broadcast %361 : vector<1x64xf32> to vector<16x64xf32>
    %363 = arith.addf %359, %362 : vector<16x64xf32>
    %c1_126 = arith.constant 1 : index
    %c0_127 = arith.constant 0 : index
    %c0_128 = arith.constant 0 : index
    %364 = vector.load %arg7[%c1_126, %c0_127, %c0_128] : memref<2x1x64xf32, #tpu.memory_space<vmem>>, vector<1x1x64xf32>
    %365 = vector.shape_cast %364 : vector<1x1x64xf32> to vector<1x64xf32>
    %c1_129 = arith.constant 1 : index
    %c0_130 = arith.constant 0 : index
    %c0_131 = arith.constant 0 : index
    %366 = vector.load %arg8[%c1_129, %c0_130, %c0_131] : memref<2x1x64xf32, #tpu.memory_space<vmem>>, vector<1x1x64xf32>
    %367 = vector.shape_cast %366 : vector<1x1x64xf32> to vector<1x64xf32>
    %cst_132 = arith.constant dense<0.000000e+00> : vector<16xf32>
    %368 = vector.multi_reduction <add>, %363, %cst_132 [1] : vector<16x64xf32> to vector<16xf32>
    %369 = vector.shape_cast %368 : vector<16xf32> to vector<16x1xf32>
    %cst_133 = arith.constant 6.400000e+01 : f32
    %370 = vector.broadcast %cst_133 : f32 to vector<16x1xf32>
    %371 = arith.divf %369, %370 : vector<16x1xf32>
    %372 = vector.broadcast %371 : vector<16x1xf32> to vector<16x64xf32>
    %373 = arith.subf %363, %372 : vector<16x64xf32>
    %374 = arith.mulf %373, %373 : vector<16x64xf32>
    %cst_134 = arith.constant dense<0.000000e+00> : vector<16xf32>
    %375 = vector.multi_reduction <add>, %374, %cst_134 [1] : vector<16x64xf32> to vector<16xf32>
    %376 = vector.shape_cast %375 : vector<16xf32> to vector<16x1xf32>
    %cst_135 = arith.constant 6.400000e+01 : f32
    %377 = vector.broadcast %cst_135 : f32 to vector<16x1xf32>
    %378 = arith.divf %376, %377 : vector<16x1xf32>
    %379 = vector.broadcast %371 : vector<16x1xf32> to vector<16x64xf32>
    %380 = arith.subf %363, %379 : vector<16x64xf32>
    %cst_136 = arith.constant 9.99999974E-6 : f32
    %381 = vector.broadcast %cst_136 : f32 to vector<16x1xf32>
    %382 = arith.addf %378, %381 : vector<16x1xf32>
    %383 = math.rsqrt %382 : vector<16x1xf32>
    %384 = vector.broadcast %383 : vector<16x1xf32> to vector<16x64xf32>
    %385 = arith.mulf %380, %384 : vector<16x64xf32>
    %386 = vector.broadcast %365 : vector<1x64xf32> to vector<16x64xf32>
    %387 = arith.mulf %385, %386 : vector<16x64xf32>
    %388 = vector.broadcast %367 : vector<1x64xf32> to vector<16x64xf32>
    %389 = arith.addf %387, %388 : vector<16x64xf32>
    %390 = arith.truncf %389 : vector<16x64xf32> to vector<16x64xbf16>
    %c1_137 = arith.constant 1 : index
    %c0_138 = arith.constant 0 : index
    %c0_139 = arith.constant 0 : index
    %391 = vector.load %arg9[%c1_137, %c0_138, %c0_139] : memref<2x64x256xbf16, #tpu.memory_space<vmem>>, vector<1x64x256xbf16>
    %392 = vector.shape_cast %391 : vector<1x64x256xbf16> to vector<64x256xbf16>
    %cst_140 = arith.constant dense<0.000000e+00> : vector<16x256xf32>
    %393 = tpu.matmul %390, %392, %cst_140 {dimension_numbers = #tpu.dot_dimension_numbers<[1], [0], [0], [1], [0, 0, 1, 1], [], []>} : vector<16x64xbf16>, vector<64x256xbf16>, vector<16x256xf32> -> vector<16x256xf32>
    %c1_141 = arith.constant 1 : index
    %c0_142 = arith.constant 0 : index
    %c0_143 = arith.constant 0 : index
    %394 = vector.load %arg10[%c1_141, %c0_142, %c0_143] : memref<2x1x256xf32, #tpu.memory_space<vmem>>, vector<1x1x256xf32>
    %395 = vector.shape_cast %394 : vector<1x1x256xf32> to vector<1x256xf32>
    %396 = vector.broadcast %395 : vector<1x256xf32> to vector<16x256xf32>
    %397 = arith.addf %393, %396 : vector<16x256xf32>
    %cst_144 = arith.constant 5.000000e-01 : f32
    %398 = vector.broadcast %cst_144 : f32 to vector<16x256xf32>
    %399 = arith.mulf %398, %397 : vector<16x256xf32>
    %cst_145 = arith.constant 4.471500e-02 : f32
    %400 = vector.broadcast %cst_145 : f32 to vector<16x256xf32>
    %401 = arith.mulf %400, %397 : vector<16x256xf32>
    %402 = arith.mulf %401, %397 : vector<16x256xf32>
    %403 = arith.mulf %402, %397 : vector<16x256xf32>
    %404 = arith.addf %397, %403 : vector<16x256xf32>
    %cst_146 = arith.constant 0.797884583 : f32
    %405 = vector.broadcast %cst_146 : f32 to vector<16x256xf32>
    %406 = arith.mulf %405, %404 : vector<16x256xf32>
    %407 = math.tanh %406 : vector<16x256xf32>
    %cst_147 = arith.constant 1.000000e+00 : f32
    %408 = vector.broadcast %cst_147 : f32 to vector<16x256xf32>
    %409 = arith.addf %408, %407 : vector<16x256xf32>
    %410 = arith.mulf %399, %409 : vector<16x256xf32>
    %411 = arith.truncf %410 : vector<16x256xf32> to vector<16x256xbf16>
    %c1_148 = arith.constant 1 : index
    %c0_149 = arith.constant 0 : index
    %c0_150 = arith.constant 0 : index
    %412 = vector.load %arg11[%c1_148, %c0_149, %c0_150] : memref<2x256x64xbf16, #tpu.memory_space<vmem>>, vector<1x256x64xbf16>
    %413 = vector.shape_cast %412 : vector<1x256x64xbf16> to vector<256x64xbf16>
    %cst_151 = arith.constant dense<0.000000e+00> : vector<16x64xf32>
    %414 = tpu.matmul %411, %413, %cst_151 {dimension_numbers = #tpu.dot_dimension_numbers<[1], [0], [0], [1], [0, 0, 1, 1], [], []>} : vector<16x256xbf16>, vector<256x64xbf16>, vector<16x64xf32> -> vector<16x64xf32>
    %415 = arith.addf %363, %414 : vector<16x64xf32>
    %c1_152 = arith.constant 1 : index
    %c0_153 = arith.constant 0 : index
    %c0_154 = arith.constant 0 : index
    %416 = vector.load %arg12[%c1_152, %c0_153, %c0_154] : memref<2x1x64xf32, #tpu.memory_space<vmem>>, vector<1x1x64xf32>
    %417 = vector.shape_cast %416 : vector<1x1x64xf32> to vector<1x64xf32>
    %418 = vector.broadcast %417 : vector<1x64xf32> to vector<16x64xf32>
    %419 = arith.addf %415, %418 : vector<16x64xf32>
    %c0_155 = arith.constant 0 : index
    %c0_156 = arith.constant 0 : index
    %420 = vector.load %arg13[%c0_155, %c0_156] : memref<1x64xf32, #tpu.memory_space<vmem>>, vector<1x64xf32>
    %c0_157 = arith.constant 0 : index
    %c0_158 = arith.constant 0 : index
    %421 = vector.load %arg14[%c0_157, %c0_158] : memref<1x64xf32, #tpu.memory_space<vmem>>, vector<1x64xf32>
    %cst_159 = arith.constant dense<0.000000e+00> : vector<16xf32>
    %422 = vector.multi_reduction <add>, %419, %cst_159 [1] : vector<16x64xf32> to vector<16xf32>
    %423 = vector.shape_cast %422 : vector<16xf32> to vector<16x1xf32>
    %cst_160 = arith.constant 6.400000e+01 : f32
    %424 = vector.broadcast %cst_160 : f32 to vector<16x1xf32>
    %425 = arith.divf %423, %424 : vector<16x1xf32>
    %426 = vector.broadcast %425 : vector<16x1xf32> to vector<16x64xf32>
    %427 = arith.subf %419, %426 : vector<16x64xf32>
    %428 = arith.mulf %427, %427 : vector<16x64xf32>
    %cst_161 = arith.constant dense<0.000000e+00> : vector<16xf32>
    %429 = vector.multi_reduction <add>, %428, %cst_161 [1] : vector<16x64xf32> to vector<16xf32>
    %430 = vector.shape_cast %429 : vector<16xf32> to vector<16x1xf32>
    %cst_162 = arith.constant 6.400000e+01 : f32
    %431 = vector.broadcast %cst_162 : f32 to vector<16x1xf32>
    %432 = arith.divf %430, %431 : vector<16x1xf32>
    %433 = vector.broadcast %425 : vector<16x1xf32> to vector<16x64xf32>
    %434 = arith.subf %419, %433 : vector<16x64xf32>
    %cst_163 = arith.constant 9.99999974E-6 : f32
    %435 = vector.broadcast %cst_163 : f32 to vector<16x1xf32>
    %436 = arith.addf %432, %435 : vector<16x1xf32>
    %437 = math.rsqrt %436 : vector<16x1xf32>
    %438 = vector.broadcast %437 : vector<16x1xf32> to vector<16x64xf32>
    %439 = arith.mulf %434, %438 : vector<16x64xf32>
    %440 = vector.broadcast %420 : vector<1x64xf32> to vector<16x64xf32>
    %441 = arith.mulf %439, %440 : vector<16x64xf32>
    %442 = vector.broadcast %421 : vector<1x64xf32> to vector<16x64xf32>
    %443 = arith.addf %441, %442 : vector<16x64xf32>
    %444 = arith.truncf %443 : vector<16x64xf32> to vector<16x64xbf16>
    %c0_164 = arith.constant 0 : index
    %c0_165 = arith.constant 0 : index
    %445 = vector.load %arg15[%c0_164, %c0_165] : memref<64x128xbf16, #tpu.memory_space<vmem>>, vector<64x128xbf16>
    %cst_166 = arith.constant dense<0.000000e+00> : vector<16x128xf32>
    %446 = tpu.matmul %444, %445, %cst_166 {dimension_numbers = #tpu.dot_dimension_numbers<[1], [0], [0], [1], [0, 0, 1, 1], [], []>} : vector<16x64xbf16>, vector<64x128xbf16>, vector<16x128xf32> -> vector<16x128xf32>
    %c0_167 = arith.constant 0 : index
    %c0_168 = arith.constant 0 : index
    %447 = vector.load %arg16[%c0_167, %c0_168] : memref<16x128xf32, #tpu.memory_space<vmem>>, vector<16x128xf32>
    tpu.vector_store %arg16[%c0_167, %c0_168], %446 {strides = array<i32>} : memref<16x128xf32, #tpu.memory_space<vmem>>, vector<16x128xf32>,
    return
  }
}

</mosaic_0001>

<llo_original>
// kernel: gpt2_forward.1
$region0: #{gpt2_forward.1}
  #allocation0 [shape = 'u32[]', space=smem, size = 0x4, offset = 0x4, fixed_abs, tag = 'smem constant byte address 0x4 - core index']
  #allocation1 [shape = 'u32[144,128]{1,0:T(1,128)}', space=vmem, size = 0x12000, scoped, tag = 'internal scratch']
  %s0 = inlined_call_operand.vmem [shape: f32[16,64], index: 0, kind: input, shape index: {}]
  %s1 = inlined_call_operand.vmem [shape: f32[2,1,64], index: 1, kind: input, shape index: {}]
  %s2 = inlined_call_operand.vmem [shape: f32[2,1,64], index: 2, kind: input, shape index: {}]
  %s3 = inlined_call_operand.vmem [shape: bf16[2,64,192], index: 3, kind: input, shape index: {}]
  %s4 = inlined_call_operand.vmem [shape: f32[2,1,192], index: 4, kind: input, shape index: {}]
  %s5 = inlined_call_operand.vmem [shape: bf16[2,64,64], index: 5, kind: input, shape index: {}]
  %s6 = inlined_call_operand.vmem [shape: f32[2,1,64], index: 6, kind: input, shape index: {}]
  %s7 = inlined_call_operand.vmem [shape: f32[2,1,64], index: 7, kind: input, shape index: {}]
  %s8 = inlined_call_operand.vmem [shape: f32[2,1,64], index: 8, kind: input, shape index: {}]
  %s9 = inlined_call_operand.vmem [shape: bf16[2,64,256], index: 9, kind: input, shape index: {}]
  %s10 = inlined_call_operand.vmem [shape: f32[2,1,256], index: 10, kind: input, shape index: {}]
  %s11 = inlined_call_operand.vmem [shape: bf16[2,256,64], index: 11, kind: input, shape index: {}]
  %s12 = inlined_call_operand.vmem [shape: f32[2,1,64], index: 12, kind: input, shape index: {}]
  %s13 = inlined_call_operand.vmem [shape: f32[1,64], index: 13, kind: input, shape index: {}]
  %s14 = inlined_call_operand.vmem [shape: f32[1,64], index: 14, kind: input, shape index: {}]
  %s15 = inlined_call_operand.vmem [shape: bf16[64,128], index: 15, kind: input, shape index: {}]
  %s16 = inlined_call_operand.vmem [shape: f32[16,128], index: 16, kind: output, shape index: {}]
  %s17 = sld [smem:[#allocation0]]
  $region74: #{gpt2_forward.1} parent=0
    _
  %s19 = ssub.s32 1, %s17
  %s20 = scalar_select 0, %s19, %s17
  // Predicated region
  $region2: #{gpt2_forward.1} parent=0 // pred_check
    _
  $region3: #{gpt2_forward.1} parent=0 // pred_check_branch
    %22 = sbr.rel (0) target = $region5
  $region4: #{gpt2_forward.1} parent=0 // pred_region
    _
  $region5: #{gpt2_forward.1} parent=0 // pred_fallthru
    _
  // Predicated region
  $region6: #{gpt2_forward.1} parent=0 // pred_check
    _
  $region7: #{gpt2_forward.1} parent=0 // pred_check_branch
    %24 = sbr.rel (0) target = $region9
  $region8: #{gpt2_forward.1} parent=0 // pred_region
    _
  $region9: #{gpt2_forward.1} parent=0 // pred_fallthru
    _
  // Predicated region
  $region10: #{gpt2_forward.1} parent=0 // pred_check
    _
  $region11: #{gpt2_forward.1} parent=0 // pred_check_branch
    %26 = sbr.rel (0) target = $region13
  $region12: #{gpt2_forward.1} parent=0 // pred_region
    _
  $region13: #{gpt2_forward.1} parent=0 // pred_fallthru
    _
  // Predicated region
  $region14: #{gpt2_forward.1} parent=0 // pred_check
    _
  $region15: #{gpt2_forward.1} parent=0 // pred_check_branch
    %28 = sbr.rel (0) target = $region17
  $region16: #{gpt2_forward.1} parent=0 // pred_region
    _
  $region17: #{gpt2_forward.1} parent=0 // pred_fallthru
    _
  // Predicated region
  $region18: #{gpt2_forward.1} parent=0 // pred_check
    _
  $region19: #{gpt2_forward.1} parent=0 // pred_check_branch
    %30 = sbr.rel (0) target = $region21
  $region20: #{gpt2_forward.1} parent=0 // pred_region
    _
  $region21: #{gpt2_forward.1} parent=0 // pred_fallthru
    _
  // Predicated region
  $region22: #{gpt2_forward.1} parent=0 // pred_check
    _
  $region23: #{gpt2_forward.1} parent=0 // pred_check_branch
    %32 = sbr.rel (0) target = $region25
  $region24: #{gpt2_forward.1} parent=0 // pred_region
    _
  $region25: #{gpt2_forward.1} parent=0 // pred_fallthru
    _
  // Predicated region
  $region26: #{gpt2_forward.1} parent=0 // pred_check
    _
  $region27: #{gpt2_forward.1} parent=0 // pred_check_branch
    %34 = sbr.rel (0) target = $region29
  $region28: #{gpt2_forward.1} parent=0 // pred_region
    _
  $region29: #{gpt2_forward.1} parent=0 // pred_fallthru
    _
  // Predicated region
  $region30: #{gpt2_forward.1} parent=0 // pred_check
    _
  $region31: #{gpt2_forward.1} parent=0 // pred_check_branch
    %36 = sbr.rel (0) target = $region33
  $region32: #{gpt2_forward.1} parent=0 // pred_region
    _
  $region33: #{gpt2_forward.1} parent=0 // pred_fallthru
    _
  // Predicated region
  $region34: #{gpt2_forward.1} parent=0 // pred_check
    _
  $region35: #{gpt2_forward.1} parent=0 // pred_check_branch
    %38 = sbr.rel (0) target = $region37
  $region36: #{gpt2_forward.1} parent=0 // pred_region
    _
  $region37: #{gpt2_forward.1} parent=0 // pred_fallthru
    _
  // Predicated region
  $region38: #{gpt2_forward.1} parent=0 // pred_check
    _
  $region39: #{gpt2_forward.1} parent=0 // pred_check_branch
    %40 = sbr.rel (0) target = $region41
  $region40: #{gpt2_forward.1} parent=0 // pred_region
    _
  $region41: #{gpt2_forward.1} parent=0 // pred_fallthru
    _
  // Predicated region
  $region42: #{gpt2_forward.1} parent=0 // pred_check
    _
  $region43: #{gpt2_forward.1} parent=0 // pred_check_branch
    %42 = sbr.rel (0) target = $region45
  $region44: #{gpt2_forward.1} parent=0 // pred_region
    _
  $region45: #{gpt2_forward.1} parent=0 // pred_fallthru
    _
  // Predicated region
  $region46: #{gpt2_forward.1} parent=0 // pred_check
    _
  $region47: #{gpt2_forward.1} parent=0 // pred_check_branch
    %44 = sbr.rel (0) target = $region49
  $region48: #{gpt2_forward.1} parent=0 // pred_region
    _
  $region49: #{gpt2_forward.1} parent=0 // pred_fallthru
    _
  // Predicated region
  $region50: #{gpt2_forward.1} parent=0 // pred_check
    _
  $region51: #{gpt2_forward.1} parent=0 // pred_check_branch
    %46 = sbr.rel (0) target = $region53
  $region52: #{gpt2_forward.1} parent=0 // pred_region
    _
  $region53: #{gpt2_forward.1} parent=0 // pred_fallthru
    _
  // Predicated region
  $region54: #{gpt2_forward.1} parent=0 // pred_check
    _
  $region55: #{gpt2_forward.1} parent=0 // pred_check_branch
    %48 = sbr.rel (0) target = $region57
  $region56: #{gpt2_forward.1} parent=0 // pred_region
    _
  $region57: #{gpt2_forward.1} parent=0 // pred_fallthru
    _
  // Predicated region
  $region58: #{gpt2_forward.1} parent=0 // pred_check
    _
  $region59: #{gpt2_forward.1} parent=0 // pred_check_branch
    %50 = sbr.rel (0) target = $region61
  $region60: #{gpt2_forward.1} parent=0 // pred_region
    _
  $region61: #{gpt2_forward.1} parent=0 // pred_fallthru
    _
  // Predicated region
  $region62: #{gpt2_forward.1} parent=0 // pred_check
    _
  $region63: #{gpt2_forward.1} parent=0 // pred_check_branch
    %52 = sbr.rel (0) target = $region65
  $region64: #{gpt2_forward.1} parent=0 // pred_region
    _
  $region65: #{gpt2_forward.1} parent=0 // pred_fallthru
    _
  %v54 = vld [vmem:[%s0] sm:$0xff]
  %v55 = vld [vmem:[%s0 + $0x8] sm:$0xff]
  %v56 = vlaneseq
  %v57 = vshrl.u32 %v56, 7
  %v58 = vlaneseq
  %v59 = vand.u32 %v58, 127
  %vm60 = vcmp.ge.s32.totalorder %v57, %v59
  %v61 = vld [vmem:[%s1] sm:$0x1]
  %v62 = vld [vmem:[%s2] sm:$0x1]
  %vm63 = vcmask 523264
  %v64 = vsel %vm63, %v54, 0.0
  %65 = vadd.xlane.f32.xlu0 %v64
  %v66 = vpop.xlane.xlu0 %65
  %v67 = vsel %vm63, %v55, 0.0
  %68 = vadd.xlane.f32.xlu0 %v67
  %v69 = vpop.xlane.xlu0 %68
  %v70 = vrcp.pop 64.0
  %v71 = vmul.f32 %v66, %v70
  %v72 = vmul.f32 %v69, %v70
  %v73 = vsub.f32 %v54, %v71
  %v74 = vsub.f32 %v55, %v72
  %v75 = vmul.f32 %v73, %v73
  %v76 = vmul.f32 %v74, %v74
  %v77 = vsel %vm63, %v75, 0.0
  %78 = vadd.xlane.f32.xlu0 %v77
  %v79 = vpop.xlane.xlu0 %78
  %v80 = vsel %vm63, %v76, 0.0
  %81 = vadd.xlane.f32.xlu0 %v80
  %v82 = vpop.xlane.xlu0 %81
  %v83 = vmul.f32 %v79, %v70
  %v84 = vmul.f32 %v82, %v70
  %v85 = vadd.f32 %v83, 1e-05
  %v86 = vadd.f32 %v84, 1e-05
  %v87 = vrsqrt.pop %v85
  %v88 = vrsqrt.pop %v86
  %v89 = vmul.f32 %v73, %v87
  %v90 = vmul.f32 %v74, %v88
  %v92 = vlaneseq
  %v93 = vshrl.u32 %v92, 7
  %v94 = vsub.s32 0, %v93
  %v95 = vrot.slane %v61, %v94
  %v97 = vmul.f32 %v89, %v95
  %v98 = vmul.f32 %v90, %v95
  %v100 = vlaneseq
  %v101 = vshrl.u32 %v100, 7
  %v102 = vsub.s32 0, %v101
  %v103 = vrot.slane %v62, %v102
  %v105 = vadd.f32 %v97, %v103
  %v106 = vadd.f32 %v98, %v103
  %v107 = vpack.c.bf16 %v106, %v105
  %v108 = vld [vmem:[%s3] sm:$0xff]
  %v109 = vld [vmem:[%s3 + $0x8] sm:$0xff]
  %v110 = vld [vmem:[%s3 + $0x10] sm:$0xff]
  %v111 = vld [vmem:[%s3 + $0x18] sm:$0xff]
  %v112 = vld [vmem:[%s3 + $0x20] sm:$0xff]
  %v113 = vld [vmem:[%s3 + $0x28] sm:$0xff]
  %v114 = vld [vmem:[%s3 + $0x30] sm:$0xff]
  %v115 = vld [vmem:[%s3 + $0x38] sm:$0xff]
  %v116 = vld [vmem:[%s4] sm:$0x3]
  %v118 = vlaneseq
  %v119 = vshrl.u32 %v118, 7
  %v120 = vsub.s32 0, %v119
  %v121 = vrot.slane %v116, %v120
  %v122 = vlaneseq
  %v123 = vshrl.u32 %v122, 7
  %v124 = vsub.s32 1, %v123
  %v125 = vrot.slane %v116, %v124
  %v136 = vunpack.c.l.b16 %v108
  %v137 = vunpack.c.h.b16 %v108
  %v138 = vunpack.c.l.b16 %v109
  %v139 = vunpack.c.h.b16 %v109
  %v140 = vunpack.c.l.b16 %v110
  %v141 = vunpack.c.h.b16 %v110
  %v142 = vunpack.c.l.b16 %v111
  %v143 = vunpack.c.h.b16 %v111
  %v144 = vunpack.c.l.b16 %v112
  %v145 = vunpack.c.h.b16 %v112
  %v146 = vunpack.c.l.b16 %v113
  %v147 = vunpack.c.h.b16 %v113
  %v148 = vunpack.c.l.b16 %v114
  %v149 = vunpack.c.h.b16 %v114
  %v150 = vunpack.c.l.b16 %v115
  %v151 = vunpack.c.h.b16 %v115
  %v152 = vpack.c.b16 %v138, %v136
  %v153 = vpack.c.b16 %v139, %v137
  %v154 = vpack.c.b16 %v142, %v140
  %v155 = vpack.c.b16 %v143, %v141
  %v156 = vpack.c.b16 %v146, %v144
  %v157 = vpack.c.b16 %v147, %v145
  %v158 = vpack.c.b16 %v150, %v148
  %v159 = vpack.c.b16 %v151, %v149
  %v169 = vsel %vm63, %v107, 0
  %171 = vmatprep.subr.bf16.mxu0 0
  %172 = vmatpush1.bf16.msra.mxu0 0
  %173 = vmatprep.subr.bf16.mxu0 0
  %174 = vmatpush1.bf16.msra.mxu0 0
  %175 = vmatprep.subr.bf16.mxu0 0
  %176 = vmatpush1.bf16.msra.mxu0 0
  %177 = vmatprep.subr.bf16.mxu0 0
  %178 = vmatpush1.bf16.msra.mxu0 0
  %179 = vmatprep.subr.bf16.mxu0 %v159
  %180 = vmatpush1.bf16.msra.mxu0 %v158
  %181 = vmatprep.subr.bf16.mxu0 %v157
  %182 = vmatpush1.bf16.msra.mxu0 %v156
  %183 = vmatprep.subr.bf16.mxu0 %v155
  %184 = vmatpush1.bf16.msra.mxu0 %v154
  %185 = vmatprep.subr.bf16.mxu0 %v153
  %186 = vmatpush1.bf16.msra.mxu0 %v152
  %187 = vmatprep.subr.bf16.mxu0 0
  %188 = vmatpush2.bf16.msra.mxu0 0
  %189 = vmatprep.subr.bf16.mxu0 0
  %190 = vmatpush2.bf16.msra.mxu0 0
  %191 = vmatprep.subr.bf16.mxu0 0
  %192 = vmatpush2.bf16.msra.mxu0 0
  %193 = vmatprep.subr.bf16.mxu0 0
  %194 = vmatpush2.bf16.msra.mxu0 0
  %195 = vmatprep.subr.bf16.mxu0 0
  %196 = vmatpush2.bf16.msra.mxu0 0
  %197 = vmatprep.subr.bf16.mxu0 0
  %198 = vmatpush2.bf16.msra.mxu0 0
  %199 = vmatprep.subr.bf16.mxu0 0
  %200 = vmatpush2.bf16.msra.mxu0 0
  %201 = vmatprep.subr.bf16.mxu0 0
  %202 = vmatpush2.bf16.msra.mxu0 0
  %203 = vmatprep.mubr.bf16.mxu0 0
  %204 = vmatmul.mubr.bf16.gmra.mxu0 %v169
  %v205 = vpop.f32.mrf.mxu0
  %v206 = vadd.f32 %v121, %v205
  %v207 = vpop.f32.mrf.mxu0
  %v208 = vadd.f32 %v125, %v207
  %v209 = vpop.f32.mrf.mxu0
  %v210 = vadd.f32 %v121, %v209
  %v211 = vpop.f32.mrf.mxu0
  %v212 = vadd.f32 %v125, %v211
  %213 = vdwg.mxu0
  %v214 = vpack.c.bf16 %v206, %v206
  %v215 = vpack.c.bf16 %v210, %v210
  %v216 = vpack.c.bf16 %v208, %v208
  %v217 = vpack.c.bf16 %v212, %v212
  %219 = vrot.lane.b32.xlu0 %v214, 64
  %v220 = vpop.permute.xlu0 %219
  %vm221 = vcmask 130048
  %v223 = vsel %vm221, %v214, 0
  %v226 = vsel %vm221, %v220, 0
  %228 = vmatprep.subr.bf16.mxu0 0
  %229 = vmatpush1.bf16.xpose.msra.mxu0 0
  %230 = vmatprep.subr.bf16.mxu0 0
  %231 = vmatpush1.bf16.xpose.msra.mxu0 0
  %232 = vmatprep.subr.bf16.mxu0 0
  %233 = vmatpush1.bf16.xpose.msra.mxu0 0
  %234 = vmatprep.subr.bf16.mxu0 0
  %235 = vmatpush1.bf16.xpose.msra.mxu0 0
  %236 = vmatprep.subr.bf16.mxu0 0
  %237 = vmatpush1.bf16.xpose.msra.mxu0 0
  %238 = vmatprep.subr.bf16.mxu0 0
  %239 = vmatpush1.bf16.xpose.msra.mxu0 0
  %240 = vmatprep.subr.bf16.mxu0 0
  %241 = vmatpush1.bf16.xpose.msra.mxu0 0
  %242 = vmatprep.subr.bf16.mxu0 0
  %243 = vmatpush1.bf16.xpose.msra.mxu0 %v226
  %244 = vmatprep.subr.bf16.mxu0 0
  %245 = vmatpush2.bf16.xpose.msra.mxu0 0
  %246 = vmatprep.subr.bf16.mxu0 0
  %247 = vmatpush2.bf16.xpose.msra.mxu0 0
  %248 = vmatprep.subr.bf16.mxu0 0
  %249 = vmatpush2.bf16.xpose.msra.mxu0 0
  %250 = vmatprep.subr.bf16.mxu0 0
  %251 = vmatpush2.bf16.xpose.msra.mxu0 0
  %252 = vmatprep.subr.bf16.mxu0 0
  %253 = vmatpush2.bf16.xpose.msra.mxu0 0
  %254 = vmatprep.subr.bf16.mxu0 0
  %255 = vmatpush2.bf16.xpose.msra.mxu0 0
  %256 = vmatprep.subr.bf16.mxu0 0
  %257 = vmatpush2.bf16.xpose.msra.mxu0 0
  %258 = vmatprep.subr.bf16.mxu0 0
  %259 = vmatpush2.bf16.xpose.msra.mxu0 0
  %260 = vmatprep.mubr.bf16.mxu0 0
  %261 = vmatmul.mubr.bf16.gmra.mxu0 %v223
  %v262 = vpop.f32.mrf.mxu0
  %v263 = vadd.f32 0.0, %v262
  %v264 = vpop.f32.mrf.mxu0
  %v265 = vpop.f32.mrf.mxu0
  %v266 = vpop.f32.mrf.mxu0
  %267 = vdwg.mxu0
  %269 = vrot.lane.b32.xlu0 %v215, 64
  %v270 = vpop.permute.xlu0 %269
  %v272 = vsel %vm221, %v215, 0
  %v275 = vsel %vm221, %v270, 0
  %277 = vmatprep.subr.bf16.mxu0 0
  %278 = vmatpush1.bf16.xpose.msra.mxu0 0
  %279 = vmatprep.subr.bf16.mxu0 0
  %280 = vmatpush1.bf16.xpose.msra.mxu0 0
  %281 = vmatprep.subr.bf16.mxu0 0
  %282 = vmatpush1.bf16.xpose.msra.mxu0 0
  %283 = vmatprep.subr.bf16.mxu0 0
  %284 = vmatpush1.bf16.xpose.msra.mxu0 0
  %285 = vmatprep.subr.bf16.mxu0 0
  %286 = vmatpush1.bf16.xpose.msra.mxu0 0
  %287 = vmatprep.subr.bf16.mxu0 0
  %288 = vmatpush1.bf16.xpose.msra.mxu0 0
  %289 = vmatprep.subr.bf16.mxu0 0
  %290 = vmatpush1.bf16.xpose.msra.mxu0 0
  %291 = vmatprep.subr.bf16.mxu0 0
  %292 = vmatpush1.bf16.xpose.msra.mxu0 %v275
  %293 = vmatprep.subr.bf16.mxu0 0
  %294 = vmatpush2.bf16.xpose.msra.mxu0 0
  %295 = vmatprep.subr.bf16.mxu0 0
  %296 = vmatpush2.bf16.xpose.msra.mxu0 0
  %297 = vmatprep.subr.bf16.mxu0 0
  %298 = vmatpush2.bf16.xpose.msra.mxu0 0
  %299 = vmatprep.subr.bf16.mxu0 0
  %300 = vmatpush2.bf16.xpose.msra.mxu0 0
  %301 = vmatprep.subr.bf16.mxu0 0
  %302 = vmatpush2.bf16.xpose.msra.mxu0 0
  %303 = vmatprep.subr.bf16.mxu0 0
  %304 = vmatpush2.bf16.xpose.msra.mxu0 0
  %305 = vmatprep.subr.bf16.mxu0 0
  %306 = vmatpush2.bf16.xpose.msra.mxu0 0
  %307 = vmatprep.subr.bf16.mxu0 0
  %308 = vmatpush2.bf16.xpose.msra.mxu0 0
  %309 = vmatprep.mubr.bf16.mxu0 0
  %310 = vmatmul.mubr.bf16.gmra.mxu0 %v272
  %v311 = vpop.f32.mrf.mxu0
  %v312 = vadd.f32 0.0, %v311
  %v313 = vpop.f32.mrf.mxu0
  %v314 = vpop.f32.mrf.mxu0
  %v315 = vpop.f32.mrf.mxu0
  %316 = vdwg.mxu0
  %v317 = vmul.f32 %v263, 0.25
  %v318 = vmul.f32 %v312, 0.25
  %v319 = vsel %vm60, %v317, -1e+30
  %v320 = vsel %vm60, %v318, -1e+30
  %vm321 = vcmask 64512
  %v322 = vsel %vm321, %v319, -inf
  %323 = vmax.xlane.f32.xlu0 %v322
  %v324 = vpop.xlane.xlu0 %323
  %v325 = vsel %vm321, %v320, -inf
  %326 = vmax.xlane.f32.xlu0 %v325
  %v327 = vpop.xlane.xlu0 %326
  %v328 = vsub.f32 %v319, %v324
  %v329 = vsub.f32 %v320, %v327
  %v330 = vmul.f32 %v328, 1.442695
  %v331 = vpow.pop %v330
  %v332 = vmul.f32 %v329, 1.442695
  %v333 = vpow.pop %v332
  %v334 = vsel %vm321, %v331, 0.0
  %335 = vadd.xlane.f32.xlu0 %v334
  %v336 = vpop.xlane.xlu0 %335
  %v337 = vsel %vm321, %v333, 0.0
  %338 = vadd.xlane.f32.xlu0 %v337
  %v339 = vpop.xlane.xlu0 %338
  %v340 = vrcp.pop %v336
  %v341 = vrcp.pop %v339
  %v342 = vmul.f32 %v331, %v340
  %v343 = vmul.f32 %v333, %v341
  %v344 = vpack.c.bf16 %v342, %v342
  %v345 = vpack.c.bf16 %v343, %v343
  %v347 = vsel %vm321, %v344, 0
  %vm349 = vcmask 1043456
  %v351 = vsel %vm349, %v216, 0
  %353 = vmatprep.subr.bf16.mxu0 0
  %354 = vmatpush1.bf16.msra.mxu0 0
  %355 = vmatprep.subr.bf16.mxu0 0
  %356 = vmatpush1.bf16.msra.mxu0 0
  %357 = vmatprep.subr.bf16.mxu0 0
  %358 = vmatpush1.bf16.msra.mxu0 0
  %359 = vmatprep.subr.bf16.mxu0 0
  %360 = vmatpush1.bf16.msra.mxu0 0
  %361 = vmatprep.subr.bf16.mxu0 0
  %362 = vmatpush1.bf16.msra.mxu0 0
  %363 = vmatprep.subr.bf16.mxu0 0
  %364 = vmatpush1.bf16.msra.mxu0 0
  %365 = vmatprep.subr.bf16.mxu0 0
  %366 = vmatpush1.bf16.msra.mxu0 0
  %367 = vmatprep.subr.bf16.mxu0 0
  %368 = vmatpush1.bf16.msra.mxu0 %v351
  %369 = vmatprep.subr.bf16.mxu0 0
  %370 = vmatpush2.bf16.msra.mxu0 0
  %371 = vmatprep.subr.bf16.mxu0 0
  %372 = vmatpush2.bf16.msra.mxu0 0
  %373 = vmatprep.subr.bf16.mxu0 0
  %374 = vmatpush2.bf16.msra.mxu0 0
  %375 = vmatprep.subr.bf16.mxu0 0
  %376 = vmatpush2.bf16.msra.mxu0 0
  %377 = vmatprep.subr.bf16.mxu0 0
  %378 = vmatpush2.bf16.msra.mxu0 0
  %379 = vmatprep.subr.bf16.mxu0 0
  %380 = vmatpush2.bf16.msra.mxu0 0
  %381 = vmatprep.subr.bf16.mxu0 0
  %382 = vmatpush2.bf16.msra.mxu0 0
  %383 = vmatprep.subr.bf16.mxu0 0
  %384 = vmatpush2.bf16.msra.mxu0 0
  %385 = vmatprep.mubr.bf16.mxu0 0
  %386 = vmatmul.mubr.bf16.gmra.mxu0 %v347
  %v387 = vpop.f32.mrf.mxu0
  %v388 = vadd.f32 0.0, %v387
  %v389 = vpop.f32.mrf.mxu0
  %v390 = vpop.f32.mrf.mxu0
  %v391 = vpop.f32.mrf.mxu0
  %392 = vdwg.mxu0
  %v394 = vsel %vm321, %v345, 0
  %v397 = vsel %vm349, %v217, 0
  %399 = vmatprep.subr.bf16.mxu0 0
  %400 = vmatpush1.bf16.msra.mxu0 0
  %401 = vmatprep.subr.bf16.mxu0 0
  %402 = vmatpush1.bf16.msra.mxu0 0
  %403 = vmatprep.subr.bf16.mxu0 0
  %404 = vmatpush1.bf16.msra.mxu0 0
  %405 = vmatprep.subr.bf16.mxu0 0
  %406 = vmatpush1.bf16.msra.mxu0 0
  %407 = vmatprep.subr.bf16.mxu0 0
  %408 = vmatpush1.bf16.msra.mxu0 0
  %409 = vmatprep.subr.bf16.mxu0 0
  %410 = vmatpush1.bf16.msra.mxu0 0
  %411 = vmatprep.subr.bf16.mxu0 0
  %412 = vmatpush1.bf16.msra.mxu0 0
  %413 = vmatprep.subr.bf16.mxu0 0
  %414 = vmatpush1.bf16.msra.mxu0 %v397
  %415 = vmatprep.subr.bf16.mxu0 0
  %416 = vmatpush2.bf16.msra.mxu0 0
  %417 = vmatprep.subr.bf16.mxu0 0
  %418 = vmatpush2.bf16.msra.mxu0 0
  %419 = vmatprep.subr.bf16.mxu0 0
  %420 = vmatpush2.bf16.msra.mxu0 0
  %421 = vmatprep.subr.bf16.mxu0 0
  %422 = vmatpush2.bf16.msra.mxu0 0
  %423 = vmatprep.subr.bf16.mxu0 0
  %424 = vmatpush2.bf16.msra.mxu0 0
  %425 = vmatprep.subr.bf16.mxu0 0
  %426 = vmatpush2.bf16.msra.mxu0 0
  %427 = vmatprep.subr.bf16.mxu0 0
  %428 = vmatpush2.bf16.msra.mxu0 0
  %429 = vmatprep.subr.bf16.mxu0 0
  %430 = vmatpush2.bf16.msra.mxu0 0
  %431 = vmatprep.mubr.bf16.mxu0 0
  %432 = vmatmul.mubr.bf16.gmra.mxu0 %v394
  %v433 = vpop.f32.mrf.mxu0
  %v434 = vadd.f32 0.0, %v433
  %v435 = vpop.f32.mrf.mxu0
  %v436 = vpop.f32.mrf.mxu0
  %v437 = vpop.f32.mrf.mxu0
  %438 = vdwg.mxu0
  %439 = vrot.lane.b32.xlu0 %v214, 112
  %v440 = vpop.permute.xlu0 %439
  %441 = vrot.lane.b32.xlu0 %v214, 48
  %v442 = vpop.permute.xlu0 %441
  %v444 = vsel %vm221, %v440, 0
  %v447 = vsel %vm221, %v442, 0
  %449 = vmatprep.subr.bf16.mxu0 0
  %450 = vmatpush1.bf16.xpose.msra.mxu0 0
  %451 = vmatprep.subr.bf16.mxu0 0
  %452 = vmatpush1.bf16.xpose.msra.mxu0 0
  %453 = vmatprep.subr.bf16.mxu0 0
  %454 = vmatpush1.bf16.xpose.msra.mxu0 0
  %455 = vmatprep.subr.bf16.mxu0 0
  %456 = vmatpush1.bf16.xpose.msra.mxu0 0
  %457 = vmatprep.subr.bf16.mxu0 0
  %458 = vmatpush1.bf16.xpose.msra.mxu0 0
  %459 = vmatprep.subr.bf16.mxu0 0
  %460 = vmatpush1.bf16.xpose.msra.mxu0 0
  %461 = vmatprep.subr.bf16.mxu0 0
  %462 = vmatpush1.bf16.xpose.msra.mxu0 0
  %463 = vmatprep.subr.bf16.mxu0 0
  %464 = vmatpush1.bf16.xpose.msra.mxu0 %v447
  %465 = vmatprep.subr.bf16.mxu0 0
  %466 = vmatpush2.bf16.xpose.msra.mxu0 0
  %467 = vmatprep.subr.bf16.mxu0 0
  %468 = vmatpush2.bf16.xpose.msra.mxu0 0
  %469 = vmatprep.subr.bf16.mxu0 0
  %470 = vmatpush2.bf16.xpose.msra.mxu0 0
  %471 = vmatprep.subr.bf16.mxu0 0
  %472 = vmatpush2.bf16.xpose.msra.mxu0 0
  %473 = vmatprep.subr.bf16.mxu0 0
  %474 = vmatpush2.bf16.xpose.msra.mxu0 0
  %475 = vmatprep.subr.bf16.mxu0 0
  %476 = vmatpush2.bf16.xpose.msra.mxu0 0
  %477 = vmatprep.subr.bf16.mxu0 0
  %478 = vmatpush2.bf16.xpose.msra.mxu0 0
  %479 = vmatprep.subr.bf16.mxu0 0
  %480 = vmatpush2.bf16.xpose.msra.mxu0 0
  %481 = vmatprep.mubr.bf16.mxu0 0
  %482 = vmatmul.mubr.bf16.gmra.mxu0 %v444
  %v483 = vpop.f32.mrf.mxu0
  %v484 = vadd.f32 0.0, %v483
  %v485 = vpop.f32.mrf.mxu0
  %v486 = vpop.f32.mrf.mxu0
  %v487 = vpop.f32.mrf.mxu0
  %488 = vdwg.mxu0
  %489 = vrot.lane.b32.xlu0 %v215, 112
  %v490 = vpop.permute.xlu0 %489
  %491 = vrot.lane.b32.xlu0 %v215, 48
  %v492 = vpop.permute.xlu0 %491
  %v494 = vsel %vm221, %v490, 0
  %v497 = vsel %vm221, %v492, 0
  %499 = vmatprep.subr.bf16.mxu0 0
  %500 = vmatpush1.bf16.xpose.msra.mxu0 0
  %501 = vmatprep.subr.bf16.mxu0 0
  %502 = vmatpush1.bf16.xpose.msra.mxu0 0
  %503 = vmatprep.subr.bf16.mxu0 0
  %504 = vmatpush1.bf16.xpose.msra.mxu0 0
  %505 = vmatprep.subr.bf16.mxu0 0
  %506 = vmatpush1.bf16.xpose.msra.mxu0 0
  %507 = vmatprep.subr.bf16.mxu0 0
  %508 = vmatpush1.bf16.xpose.msra.mxu0 0
  %509 = vmatprep.subr.bf16.mxu0 0
  %510 = vmatpush1.bf16.xpose.msra.mxu0 0
  %511 = vmatprep.subr.bf16.mxu0 0
  %512 = vmatpush1.bf16.xpose.msra.mxu0 0
  %513 = vmatprep.subr.bf16.mxu0 0
  %514 = vmatpush1.bf16.xpose.msra.mxu0 %v497
  %515 = vmatprep.subr.bf16.mxu0 0
  %516 = vmatpush2.bf16.xpose.msra.mxu0 0
  %517 = vmatprep.subr.bf16.mxu0 0
  %518 = vmatpush2.bf16.xpose.msra.mxu0 0
  %519 = vmatprep.subr.bf16.mxu0 0
  %520 = vmatpush2.bf16.xpose.msra.mxu0 0
  %521 = vmatprep.subr.bf16.mxu0 0
  %522 = vmatpush2.bf16.xpose.msra.mxu0 0
  %523 = vmatprep.subr.bf16.mxu0 0
  %524 = vmatpush2.bf16.xpose.msra.mxu0 0
  %525 = vmatprep.subr.bf16.mxu0 0
  %526 = vmatpush2.bf16.xpose.msra.mxu0 0
  %527 = vmatprep.subr.bf16.mxu0 0
  %528 = vmatpush2.bf16.xpose.msra.mxu0 0
  %529 = vmatprep.subr.bf16.mxu0 0
  %530 = vmatpush2.bf16.xpose.msra.mxu0 0
  %531 = vmatprep.mubr.bf16.mxu0 0
  %532 = vmatmul.mubr.bf16.gmra.mxu0 %v494
  %v533 = vpop.f32.mrf.mxu0
  %v534 = vadd.f32 0.0, %v533
  %v535 = vpop.f32.mrf.mxu0
  %v536 = vpop.f32.mrf.mxu0
  %v537 = vpop.f32.mrf.mxu0
  %538 = vdwg.mxu0
  %v539 = vmul.f32 %v484, 0.25
  %v540 = vmul.f32 %v534, 0.25
  %v541 = vsel %vm60, %v539, -1e+30
  %v542 = vsel %vm60, %v540, -1e+30
  %v543 = vsel %vm321, %v541, -inf
  %544 = vmax.xlane.f32.xlu0 %v543
  %v545 = vpop.xlane.xlu0 %544
  %v546 = vsel %vm321, %v542, -inf
  %547 = vmax.xlane.f32.xlu0 %v546
  %v548 = vpop.xlane.xlu0 %547
  %v549 = vsub.f32 %v541, %v545
  %v550 = vsub.f32 %v542, %v548
  %v551 = vmul.f32 %v549, 1.442695
  %v552 = vpow.pop %v551
  %v553 = vmul.f32 %v550, 1.442695
  %v554 = vpow.pop %v553
  %v555 = vsel %vm321, %v552, 0.0
  %556 = vadd.xlane.f32.xlu0 %v555
  %v557 = vpop.xlane.xlu0 %556
  %v558 = vsel %vm321, %v554, 0.0
  %559 = vadd.xlane.f32.xlu0 %v558
  %v560 = vpop.xlane.xlu0 %559
  %v561 = vrcp.pop %v557
  %v562 = vrcp.pop %v560
  %v563 = vmul.f32 %v552, %v561
  %v564 = vmul.f32 %v554, %v562
  %v565 = vpack.c.bf16 %v563, %v563
  %v566 = vpack.c.bf16 %v564, %v564
  %568 = vrot.lane.b32.xlu0 %v216, 112
  %v569 = vpop.permute.xlu0 %568
  %v571 = vsel %vm321, %v565, 0
  %v574 = vsel %vm349, %v569, 0
  %576 = vmatprep.subr.bf16.mxu0 0
  %577 = vmatpush1.bf16.msra.mxu0 0
  %578 = vmatprep.subr.bf16.mxu0 0
  %579 = vmatpush1.bf16.msra.mxu0 0
  %580 = vmatprep.subr.bf16.mxu0 0
  %581 = vmatpush1.bf16.msra.mxu0 0
  %582 = vmatprep.subr.bf16.mxu0 0
  %583 = vmatpush1.bf16.msra.mxu0 0
  %584 = vmatprep.subr.bf16.mxu0 0
  %585 = vmatpush1.bf16.msra.mxu0 0
  %586 = vmatprep.subr.bf16.mxu0 0
  %587 = vmatpush1.bf16.msra.mxu0 0
  %588 = vmatprep.subr.bf16.mxu0 0
  %589 = vmatpush1.bf16.msra.mxu0 0
  %590 = vmatprep.subr.bf16.mxu0 0
  %591 = vmatpush1.bf16.msra.mxu0 %v574
  %592 = vmatprep.subr.bf16.mxu0 0
  %593 = vmatpush2.bf16.msra.mxu0 0
  %594 = vmatprep.subr.bf16.mxu0 0
  %595 = vmatpush2.bf16.msra.mxu0 0
  %596 = vmatprep.subr.bf16.mxu0 0
  %597 = vmatpush2.bf16.msra.mxu0 0
  %598 = vmatprep.subr.bf16.mxu0 0
  %599 = vmatpush2.bf16.msra.mxu0 0
  %600 = vmatprep.subr.bf16.mxu0 0
  %601 = vmatpush2.bf16.msra.mxu0 0
  %602 = vmatprep.subr.bf16.mxu0 0
  %603 = vmatpush2.bf16.msra.mxu0 0
  %604 = vmatprep.subr.bf16.mxu0 0
  %605 = vmatpush2.bf16.msra.mxu0 0
  %606 = vmatprep.subr.bf16.mxu0 0
  %607 = vmatpush2.bf16.msra.mxu0 0
  %608 = vmatprep.mubr.bf16.mxu0 0
  %609 = vmatmul.mubr.bf16.gmra.mxu0 %v571
  %v610 = vpop.f32.mrf.mxu0
  %v611 = vadd.f32 0.0, %v610
  %v612 = vpop.f32.mrf.mxu0
  %v613 = vpop.f32.mrf.mxu0
  %v614 = vpop.f32.mrf.mxu0
  %615 = vdwg.mxu0
  %617 = vrot.lane.b32.xlu0 %v217, 112
  %v618 = vpop.permute.xlu0 %617
  %v620 = vsel %vm321, %v566, 0
  %v623 = vsel %vm349, %v618, 0
  %625 = vmatprep.subr.bf16.mxu0 0
  %626 = vmatpush1.bf16.msra.mxu0 0
  %627 = vmatprep.subr.bf16.mxu0 0
  %628 = vmatpush1.bf16.msra.mxu0 0
  %629 = vmatprep.subr.bf16.mxu0 0
  %630 = vmatpush1.bf16.msra.mxu0 0
  %631 = vmatprep.subr.bf16.mxu0 0
  %632 = vmatpush1.bf16.msra.mxu0 0
  %633 = vmatprep.subr.bf16.mxu0 0
  %634 = vmatpush1.bf16.msra.mxu0 0
  %635 = vmatprep.subr.bf16.mxu0 0
  %636 = vmatpush1.bf16.msra.mxu0 0
  %637 = vmatprep.subr.bf16.mxu0 0
  %638 = vmatpush1.bf16.msra.mxu0 0
  %639 = vmatprep.subr.bf16.mxu0 0
  %640 = vmatpush1.bf16.msra.mxu0 %v623
  %641 = vmatprep.subr.bf16.mxu0 0
  %642 = vmatpush2.bf16.msra.mxu0 0
  %643 = vmatprep.subr.bf16.mxu0 0
  %644 = vmatpush2.bf16.msra.mxu0 0
  %645 = vmatprep.subr.bf16.mxu0 0
  %646 = vmatpush2.bf16.msra.mxu0 0
  %647 = vmatprep.subr.bf16.mxu0 0
  %648 = vmatpush2.bf16.msra.mxu0 0
  %649 = vmatprep.subr.bf16.mxu0 0
  %650 = vmatpush2.bf16.msra.mxu0 0
  %651 = vmatprep.subr.bf16.mxu0 0
  %652 = vmatpush2.bf16.msra.mxu0 0
  %653 = vmatprep.subr.bf16.mxu0 0
  %654 = vmatpush2.bf16.msra.mxu0 0
  %655 = vmatprep.subr.bf16.mxu0 0
  %656 = vmatpush2.bf16.msra.mxu0 0
  %657 = vmatprep.mubr.bf16.mxu0 0
  %658 = vmatmul.mubr.bf16.gmra.mxu0 %v620
  %v659 = vpop.f32.mrf.mxu0
  %v660 = vadd.f32 0.0, %v659
  %v661 = vpop.f32.mrf.mxu0
  %v662 = vpop.f32.mrf.mxu0
  %v663 = vpop.f32.mrf.mxu0
  %664 = vdwg.mxu0
  %665 = vrot.lane.b32.xlu0 %v214, 96
  %v666 = vpop.permute.xlu0 %665
  %667 = vrot.lane.b32.xlu0 %v214, 32
  %v668 = vpop.permute.xlu0 %667
  %v670 = vsel %vm221, %v666, 0
  %v673 = vsel %vm221, %v668, 0
  %675 = vmatprep.subr.bf16.mxu0 0
  %676 = vmatpush1.bf16.xpose.msra.mxu0 0
  %677 = vmatprep.subr.bf16.mxu0 0
  %678 = vmatpush1.bf16.xpose.msra.mxu0 0
  %679 = vmatprep.subr.bf16.mxu0 0
  %680 = vmatpush1.bf16.xpose.msra.mxu0 0
  %681 = vmatprep.subr.bf16.mxu0 0
  %682 = vmatpush1.bf16.xpose.msra.mxu0 0
  %683 = vmatprep.subr.bf16.mxu0 0
  %684 = vmatpush1.bf16.xpose.msra.mxu0 0
  %685 = vmatprep.subr.bf16.mxu0 0
  %686 = vmatpush1.bf16.xpose.msra.mxu0 0
  %687 = vmatprep.subr.bf16.mxu0 0
  %688 = vmatpush1.bf16.xpose.msra.mxu0 0
  %689 = vmatprep.subr.bf16.mxu0 0
  %690 = vmatpush1.bf16.xpose.msra.mxu0 %v673
  %691 = vmatprep.subr.bf16.mxu0 0
  %692 = vmatpush2.bf16.xpose.msra.mxu0 0
  %693 = vmatprep.subr.bf16.mxu0 0
  %694 = vmatpush2.bf16.xpose.msra.mxu0 0
  %695 = vmatprep.subr.bf16.mxu0 0
  %696 = vmatpush2.bf16.xpose.msra.mxu0 0
  %697 = vmatprep.subr.bf16.mxu0 0
  %698 = vmatpush2.bf16.xpose.msra.mxu0 0
  %699 = vmatprep.subr.bf16.mxu0 0
  %700 = vmatpush2.bf16.xpose.msra.mxu0 0
  %701 = vmatprep.subr.bf16.mxu0 0
  %702 = vmatpush2.bf16.xpose.msra.mxu0 0
  %703 = vmatprep.subr.bf16.mxu0 0
  %704 = vmatpush2.bf16.xpose.msra.mxu0 0
  %705 = vmatprep.subr.bf16.mxu0 0
  %706 = vmatpush2.bf16.xpose.msra.mxu0 0
  %707 = vmatprep.mubr.bf16.mxu0 0
  %708 = vmatmul.mubr.bf16.gmra.mxu0 %v670
  %v709 = vpop.f32.mrf.mxu0
  %v710 = vadd.f32 0.0, %v709
  %v711 = vpop.f32.mrf.mxu0
  %v712 = vpop.f32.mrf.mxu0
  %v713 = vpop.f32.mrf.mxu0
  %714 = vdwg.mxu0
  %715 = vrot.lane.b32.xlu0 %v215, 96
  %v716 = vpop.permute.xlu0 %715
  %717 = vrot.lane.b32.xlu0 %v215, 32
  %v718 = vpop.permute.xlu0 %717
  %v720 = vsel %vm221, %v716, 0
  %v723 = vsel %vm221, %v718, 0
  %725 = vmatprep.subr.bf16.mxu0 0
  %726 = vmatpush1.bf16.xpose.msra.mxu0 0
  %727 = vmatprep.subr.bf16.mxu0 0
  %728 = vmatpush1.bf16.xpose.msra.mxu0 0
  %729 = vmatprep.subr.bf16.mxu0 0
  %730 = vmatpush1.bf16.xpose.msra.mxu0 0
  %731 = vmatprep.subr.bf16.mxu0 0
  %732 = vmatpush1.bf16.xpose.msra.mxu0 0
  %733 = vmatprep.subr.bf16.mxu0 0
  %734 = vmatpush1.bf16.xpose.msra.mxu0 0
  %735 = vmatprep.subr.bf16.mxu0 0
  %736 = vmatpush1.bf16.xpose.msra.mxu0 0
  %737 = vmatprep.subr.bf16.mxu0 0
  %738 = vmatpush1.bf16.xpose.msra.mxu0 0
  %739 = vmatprep.subr.bf16.mxu0 0
  %740 = vmatpush1.bf16.xpose.msra.mxu0 %v723
  %741 = vmatprep.subr.bf16.mxu0 0
  %742 = vmatpush2.bf16.xpose.msra.mxu0 0
  %743 = vmatprep.subr.bf16.mxu0 0
  %744 = vmatpush2.bf16.xpose.msra.mxu0 0
  %745 = vmatprep.subr.bf16.mxu0 0
  %746 = vmatpush2.bf16.xpose.msra.mxu0 0
  %747 = vmatprep.subr.bf16.mxu0 0
  %748 = vmatpush2.bf16.xpose.msra.mxu0 0
  %749 = vmatprep.subr.bf16.mxu0 0
  %750 = vmatpush2.bf16.xpose.msra.mxu0 0
  %751 = vmatprep.subr.bf16.mxu0 0
  %752 = vmatpush2.bf16.xpose.msra.mxu0 0
  %753 = vmatprep.subr.bf16.mxu0 0
  %754 = vmatpush2.bf16.xpose.msra.mxu0 0
  %755 = vmatprep.subr.bf16.mxu0 0
  %756 = vmatpush2.bf16.xpose.msra.mxu0 0
  %757 = vmatprep.mubr.bf16.mxu0 0
  %758 = vmatmul.mubr.bf16.gmra.mxu0 %v720
  %v759 = vpop.f32.mrf.mxu0
  %v760 = vadd.f32 0.0, %v759
  %v761 = vpop.f32.mrf.mxu0
  %v762 = vpop.f32.mrf.mxu0
  %v763 = vpop.f32.mrf.mxu0
  %764 = vdwg.mxu0
  %v765 = vmul.f32 %v710, 0.25
  %v766 = vmul.f32 %v760, 0.25
  %v767 = vsel %vm60, %v765, -1e+30
  %v768 = vsel %vm60, %v766, -1e+30
  %v769 = vsel %vm321, %v767, -inf
  %770 = vmax.xlane.f32.xlu0 %v769
  %v771 = vpop.xlane.xlu0 %770
  %v772 = vsel %vm321, %v768, -inf
  %773 = vmax.xlane.f32.xlu0 %v772
  %v774 = vpop.xlane.xlu0 %773
  %v775 = vsub.f32 %v767, %v771
  %v776 = vsub.f32 %v768, %v774
  %v777 = vmul.f32 %v775, 1.442695
  %v778 = vpow.pop %v777
  %v779 = vmul.f32 %v776, 1.442695
  %v780 = vpow.pop %v779
  %v781 = vsel %vm321, %v778, 0.0
  %782 = vadd.xlane.f32.xlu0 %v781
  %v783 = vpop.xlane.xlu0 %782
  %v784 = vsel %vm321, %v780, 0.0
  %785 = vadd.xlane.f32.xlu0 %v784
  %v786 = vpop.xlane.xlu0 %785
  %v787 = vrcp.pop %v783
  %v788 = vrcp.pop %v786
  %v789 = vmul.f32 %v778, %v787
  %v790 = vmul.f32 %v780, %v788
  %v791 = vpack.c.bf16 %v789, %v789
  %v792 = vpack.c.bf16 %v790, %v790
  %793 = vrot.lane.b32.xlu0 %v216, 96
  %v794 = vpop.permute.xlu0 %793
  %v796 = vsel %vm321, %v791, 0
  %v799 = vsel %vm349, %v794, 0
  %801 = vmatprep.subr.bf16.mxu0 0
  %802 = vmatpush1.bf16.msra.mxu0 0
  %803 = vmatprep.subr.bf16.mxu0 0
  %804 = vmatpush1.bf16.msra.mxu0 0
  %805 = vmatprep.subr.bf16.mxu0 0
  %806 = vmatpush1.bf16.msra.mxu0 0
  %807 = vmatprep.subr.bf16.mxu0 0
  %808 = vmatpush1.bf16.msra.mxu0 0
  %809 = vmatprep.subr.bf16.mxu0 0
  %810 = vmatpush1.bf16.msra.mxu0 0
  %811 = vmatprep.subr.bf16.mxu0 0
  %812 = vmatpush1.bf16.msra.mxu0 0
  %813 = vmatprep.subr.bf16.mxu0 0
  %814 = vmatpush1.bf16.msra.mxu0 0
  %815 = vmatprep.subr.bf16.mxu0 0
  %816 = vmatpush1.bf16.msra.mxu0 %v799
  %817 = vmatprep.subr.bf16.mxu0 0
  %818 = vmatpush2.bf16.msra.mxu0 0
  %819 = vmatprep.subr.bf16.mxu0 0
  %820 = vmatpush2.bf16.msra.mxu0 0
  %821 = vmatprep.subr.bf16.mxu0 0
  %822 = vmatpush2.bf16.msra.mxu0 0
  %823 = vmatprep.subr.bf16.mxu0 0
  %824 = vmatpush2.bf16.msra.mxu0 0
  %825 = vmatprep.subr.bf16.mxu0 0
  %826 = vmatpush2.bf16.msra.mxu0 0
  %827 = vmatprep.subr.bf16.mxu0 0
  %828 = vmatpush2.bf16.msra.mxu0 0
  %829 = vmatprep.subr.bf16.mxu0 0
  %830 = vmatpush2.bf16.msra.mxu0 0
  %831 = vmatprep.subr.bf16.mxu0 0
  %832 = vmatpush2.bf16.msra.mxu0 0
  %833 = vmatprep.mubr.bf16.mxu0 0
  %834 = vmatmul.mubr.bf16.gmra.mxu0 %v796
  %v835 = vpop.f32.mrf.mxu0
  %v836 = vadd.f32 0.0, %v835
  %v837 = vpop.f32.mrf.mxu0
  %v838 = vpop.f32.mrf.mxu0
  %v839 = vpop.f32.mrf.mxu0
  %840 = vdwg.mxu0
  %841 = vrot.lane.b32.xlu0 %v217, 96
  %v842 = vpop.permute.xlu0 %841
  %v844 = vsel %vm321, %v792, 0
  %v847 = vsel %vm349, %v842, 0
  %849 = vmatprep.subr.bf16.mxu0 0
  %850 = vmatpush1.bf16.msra.mxu0 0
  %851 = vmatprep.subr.bf16.mxu0 0
  %852 = vmatpush1.bf16.msra.mxu0 0
  %853 = vmatprep.subr.bf16.mxu0 0
  %854 = vmatpush1.bf16.msra.mxu0 0
  %855 = vmatprep.subr.bf16.mxu0 0
  %856 = vmatpush1.bf16.msra.mxu0 0
  %857 = vmatprep.subr.bf16.mxu0 0
  %858 = vmatpush1.bf16.msra.mxu0 0
  %859 = vmatprep.subr.bf16.mxu0 0
  %860 = vmatpush1.bf16.msra.mxu0 0
  %861 = vmatprep.subr.bf16.mxu0 0
  %862 = vmatpush1.bf16.msra.mxu0 0
  %863 = vmatprep.subr.bf16.mxu0 0
  %864 = vmatpush1.bf16.msra.mxu0 %v847
  %865 = vmatprep.subr.bf16.mxu0 0
  %866 = vmatpush2.bf16.msra.mxu0 0
  %867 = vmatprep.subr.bf16.mxu0 0
  %868 = vmatpush2.bf16.msra.mxu0 0
  %869 = vmatprep.subr.bf16.mxu0 0
  %870 = vmatpush2.bf16.msra.mxu0 0
  %871 = vmatprep.subr.bf16.mxu0 0
  %872 = vmatpush2.bf16.msra.mxu0 0
  %873 = vmatprep.subr.bf16.mxu0 0
  %874 = vmatpush2.bf16.msra.mxu0 0
  %875 = vmatprep.subr.bf16.mxu0 0
  %876 = vmatpush2.bf16.msra.mxu0 0
  %877 = vmatprep.subr.bf16.mxu0 0
  %878 = vmatpush2.bf16.msra.mxu0 0
  %879 = vmatprep.subr.bf16.mxu0 0
  %880 = vmatpush2.bf16.msra.mxu0 0
  %881 = vmatprep.mubr.bf16.mxu0 0
  %882 = vmatmul.mubr.bf16.gmra.mxu0 %v844
  %v883 = vpop.f32.mrf.mxu0
  %v884 = vadd.f32 0.0, %v883
  %v885 = vpop.f32.mrf.mxu0
  %v886 = vpop.f32.mrf.mxu0
  %v887 = vpop.f32.mrf.mxu0
  %888 = vdwg.mxu0
  %889 = vrot.lane.b32.xlu0 %v214, 80
  %v890 = vpop.permute.xlu0 %889
  %891 = vrot.lane.b32.xlu0 %v214, 16
  %v892 = vpop.permute.xlu0 %891
  %v894 = vsel %vm221, %v890, 0
  %v897 = vsel %vm221, %v892, 0
  %899 = vmatprep.subr.bf16.mxu0 0
  %900 = vmatpush1.bf16.xpose.msra.mxu0 0
  %901 = vmatprep.subr.bf16.mxu0 0
  %902 = vmatpush1.bf16.xpose.msra.mxu0 0
  %903 = vmatprep.subr.bf16.mxu0 0
  %904 = vmatpush1.bf16.xpose.msra.mxu0 0
  %905 = vmatprep.subr.bf16.mxu0 0
  %906 = vmatpush1.bf16.xpose.msra.mxu0 0
  %907 = vmatprep.subr.bf16.mxu0 0
  %908 = vmatpush1.bf16.xpose.msra.mxu0 0
  %909 = vmatprep.subr.bf16.mxu0 0
  %910 = vmatpush1.bf16.xpose.msra.mxu0 0
  %911 = vmatprep.subr.bf16.mxu0 0
  %912 = vmatpush1.bf16.xpose.msra.mxu0 0
  %913 = vmatprep.subr.bf16.mxu0 0
  %914 = vmatpush1.bf16.xpose.msra.mxu0 %v897
  %915 = vmatprep.subr.bf16.mxu0 0
  %916 = vmatpush2.bf16.xpose.msra.mxu0 0
  %917 = vmatprep.subr.bf16.mxu0 0
  %918 = vmatpush2.bf16.xpose.msra.mxu0 0
  %919 = vmatprep.subr.bf16.mxu0 0
  %920 = vmatpush2.bf16.xpose.msra.mxu0 0
  %921 = vmatprep.subr.bf16.mxu0 0
  %922 = vmatpush2.bf16.xpose.msra.mxu0 0
  %923 = vmatprep.subr.bf16.mxu0 0
  %924 = vmatpush2.bf16.xpose.msra.mxu0 0
  %925 = vmatprep.subr.bf16.mxu0 0
  %926 = vmatpush2.bf16.xpose.msra.mxu0 0
  %927 = vmatprep.subr.bf16.mxu0 0
  %928 = vmatpush2.bf16.xpose.msra.mxu0 0
  %929 = vmatprep.subr.bf16.mxu0 0
  %930 = vmatpush2.bf16.xpose.msra.mxu0 0
  %931 = vmatprep.mubr.bf16.mxu0 0
  %932 = vmatmul.mubr.bf16.gmra.mxu0 %v894
  %v933 = vpop.f32.mrf.mxu0
  %v934 = vadd.f32 0.0, %v933
  %v935 = vpop.f32.mrf.mxu0
  %v936 = vpop.f32.mrf.mxu0
  %v937 = vpop.f32.mrf.mxu0
  %938 = vdwg.mxu0
  %939 = vrot.lane.b32.xlu0 %v215, 80
  %v940 = vpop.permute.xlu0 %939
  %941 = vrot.lane.b32.xlu0 %v215, 16
  %v942 = vpop.permute.xlu0 %941
  %v944 = vsel %vm221, %v940, 0
  %v947 = vsel %vm221, %v942, 0
  %949 = vmatprep.subr.bf16.mxu0 0
  %950 = vmatpush1.bf16.xpose.msra.mxu0 0
  %951 = vmatprep.subr.bf16.mxu0 0
  %952 = vmatpush1.bf16.xpose.msra.mxu0 0
  %953 = vmatprep.subr.bf16.mxu0 0
  %954 = vmatpush1.bf16.xpose.msra.mxu0 0
  %955 = vmatprep.subr.bf16.mxu0 0
  %956 = vmatpush1.bf16.xpose.msra.mxu0 0
  %957 = vmatprep.subr.bf16.mxu0 0
  %958 = vmatpush1.bf16.xpose.msra.mxu0 0
  %959 = vmatprep.subr.bf16.mxu0 0
  %960 = vmatpush1.bf16.xpose.msra.mxu0 0
  %961 = vmatprep.subr.bf16.mxu0 0
  %962 = vmatpush1.bf16.xpose.msra.mxu0 0
  %963 = vmatprep.subr.bf16.mxu0 0
  %964 = vmatpush1.bf16.xpose.msra.mxu0 %v947
  %965 = vmatprep.subr.bf16.mxu0 0
  %966 = vmatpush2.bf16.xpose.msra.mxu0 0
  %967 = vmatprep.subr.bf16.mxu0 0
  %968 = vmatpush2.bf16.xpose.msra.mxu0 0
  %969 = vmatprep.subr.bf16.mxu0 0
  %970 = vmatpush2.bf16.xpose.msra.mxu0 0
  %971 = vmatprep.subr.bf16.mxu0 0
  %972 = vmatpush2.bf16.xpose.msra.mxu0 0
  %973 = vmatprep.subr.bf16.mxu0 0
  %974 = vmatpush2.bf16.xpose.msra.mxu0 0
  %975 = vmatprep.subr.bf16.mxu0 0
  %976 = vmatpush2.bf16.xpose.msra.mxu0 0
  %977 = vmatprep.subr.bf16.mxu0 0
  %978 = vmatpush2.bf16.xpose.msra.mxu0 0
  %979 = vmatprep.subr.bf16.mxu0 0
  %980 = vmatpush2.bf16.xpose.msra.mxu0 0
  %981 = vmatprep.mubr.bf16.mxu0 0
  %982 = vmatmul.mubr.bf16.gmra.mxu0 %v944
  %v983 = vpop.f32.mrf.mxu0
  %v984 = vadd.f32 0.0, %v983
  %v985 = vpop.f32.mrf.mxu0
  %v986 = vpop.f32.mrf.mxu0
  %v987 = vpop.f32.mrf.mxu0
  %988 = vdwg.mxu0
  %v989 = vmul.f32 %v934, 0.25
  %v990 = vmul.f32 %v984, 0.25
  %v991 = vsel %vm60, %v989, -1e+30
  %v992 = vsel %vm60, %v990, -1e+30
  %v993 = vsel %vm321, %v991, -inf
  %994 = vmax.xlane.f32.xlu0 %v993
  %v995 = vpop.xlane.xlu0 %994
  %v996 = vsel %vm321, %v992, -inf
  %997 = vmax.xlane.f32.xlu0 %v996
  %v998 = vpop.xlane.xlu0 %997
  %v999 = vsub.f32 %v991, %v995
  %v1000 = vsub.f32 %v992, %v998
  %v1001 = vmul.f32 %v999, 1.442695
  %v1002 = vpow.pop %v1001
  %v1003 = vmul.f32 %v1000, 1.442695
  %v1004 = vpow.pop %v1003
  %v1005 = vsel %vm321, %v1002, 0.0
  %1006 = vadd.xlane.f32.xlu0 %v1005
  %v1007 = vpop.xlane.xlu0 %1006
  %v1008 = vsel %vm321, %v1004, 0.0
  %1009 = vadd.xlane.f32.xlu0 %v1008
  %v1010 = vpop.xlane.xlu0 %1009
  %v1011 = vrcp.pop %v1007
  %v1012 = vrcp.pop %v1010
  %v1013 = vmul.f32 %v1002, %v1011
  %v1014 = vmul.f32 %v1004, %v1012
  %v1015 = vpack.c.bf16 %v1013, %v1013
  %v1016 = vpack.c.bf16 %v1014, %v1014
  %1017 = vrot.lane.b32.xlu0 %v216, 80
  %v1018 = vpop.permute.xlu0 %1017
  %v1020 = vsel %vm321, %v1015, 0
  %v1023 = vsel %vm349, %v1018, 0
  %1025 = vmatprep.subr.bf16.mxu0 0
  %1026 = vmatpush1.bf16.msra.mxu0 0
  %1027 = vmatprep.subr.bf16.mxu0 0
  %1028 = vmatpush1.bf16.msra.mxu0 0
  %1029 = vmatprep.subr.bf16.mxu0 0
  %1030 = vmatpush1.bf16.msra.mxu0 0
  %1031 = vmatprep.subr.bf16.mxu0 0
  %1032 = vmatpush1.bf16.msra.mxu0 0
  %1033 = vmatprep.subr.bf16.mxu0 0
  %1034 = vmatpush1.bf16.msra.mxu0 0
  %1035 = vmatprep.subr.bf16.mxu0 0
  %1036 = vmatpush1.bf16.msra.mxu0 0
  %1037 = vmatprep.subr.bf16.mxu0 0
  %1038 = vmatpush1.bf16.msra.mxu0 0
  %1039 = vmatprep.subr.bf16.mxu0 0
  %1040 = vmatpush1.bf16.msra.mxu0 %v1023
  %1041 = vmatprep.subr.bf16.mxu0 0
  %1042 = vmatpush2.bf16.msra.mxu0 0
  %1043 = vmatprep.subr.bf16.mxu0 0
  %1044 = vmatpush2.bf16.msra.mxu0 0
  %1045 = vmatprep.subr.bf16.mxu0 0
  %1046 = vmatpush2.bf16.msra.mxu0 0
  %1047 = vmatprep.subr.bf16.mxu0 0
  %1048 = vmatpush2.bf16.msra.mxu0 0
  %1049 = vmatprep.subr.bf16.mxu0 0
  %1050 = vmatpush2.bf16.msra.mxu0 0
  %1051 = vmatprep.subr.bf16.mxu0 0
  %1052 = vmatpush2.bf16.msra.mxu0 0
  %1053 = vmatprep.subr.bf16.mxu0 0
  %1054 = vmatpush2.bf16.msra.mxu0 0
  %1055 = vmatprep.subr.bf16.mxu0 0
  %1056 = vmatpush2.bf16.msra.mxu0 0
  %1057 = vmatprep.mubr.bf16.mxu0 0
  %1058 = vmatmul.mubr.bf16.gmra.mxu0 %v1020
  %v1059 = vpop.f32.mrf.mxu0
  %v1060 = vadd.f32 0.0, %v1059
  %v1061 = vpop.f32.mrf.mxu0
  %v1062 = vpop.f32.mrf.mxu0
  %v1063 = vpop.f32.mrf.mxu0
  %1064 = vdwg.mxu0
  %1065 = vrot.lane.b32.xlu0 %v217, 80
  %v1066 = vpop.permute.xlu0 %1065
  %v1068 = vsel %vm321, %v1016, 0
  %v1071 = vsel %vm349, %v1066, 0
  %1073 = vmatprep.subr.bf16.mxu0 0
  %1074 = vmatpush1.bf16.msra.mxu0 0
  %1075 = vmatprep.subr.bf16.mxu0 0
  %1076 = vmatpush1.bf16.msra.mxu0 0
  %1077 = vmatprep.subr.bf16.mxu0 0
  %1078 = vmatpush1.bf16.msra.mxu0 0
  %1079 = vmatprep.subr.bf16.mxu0 0
  %1080 = vmatpush1.bf16.msra.mxu0 0
  %1081 = vmatprep.subr.bf16.mxu0 0
  %1082 = vmatpush1.bf16.msra.mxu0 0
  %1083 = vmatprep.subr.bf16.mxu0 0
  %1084 = vmatpush1.bf16.msra.mxu0 0
  %1085 = vmatprep.subr.bf16.mxu0 0
  %1086 = vmatpush1.bf16.msra.mxu0 0
  %1087 = vmatprep.subr.bf16.mxu0 0
  %1088 = vmatpush1.bf16.msra.mxu0 %v1071
  %1089 = vmatprep.subr.bf16.mxu0 0
  %1090 = vmatpush2.bf16.msra.mxu0 0
  %1091 = vmatprep.subr.bf16.mxu0 0
  %1092 = vmatpush2.bf16.msra.mxu0 0
  %1093 = vmatprep.subr.bf16.mxu0 0
  %1094 = vmatpush2.bf16.msra.mxu0 0
  %1095 = vmatprep.subr.bf16.mxu0 0
  %1096 = vmatpush2.bf16.msra.mxu0 0
  %1097 = vmatprep.subr.bf16.mxu0 0
  %1098 = vmatpush2.bf16.msra.mxu0 0
  %1099 = vmatprep.subr.bf16.mxu0 0
  %1100 = vmatpush2.bf16.msra.mxu0 0
  %1101 = vmatprep.subr.bf16.mxu0 0
  %1102 = vmatpush2.bf16.msra.mxu0 0
  %1103 = vmatprep.subr.bf16.mxu0 0
  %1104 = vmatpush2.bf16.msra.mxu0 0
  %1105 = vmatprep.mubr.bf16.mxu0 0
  %1106 = vmatmul.mubr.bf16.gmra.mxu0 %v1068
  %v1107 = vpop.f32.mrf.mxu0
  %v1108 = vadd.f32 0.0, %v1107
  %v1109 = vpop.f32.mrf.mxu0
  %v1110 = vpop.f32.mrf.mxu0
  %v1111 = vpop.f32.mrf.mxu0
  %1112 = vdwg.mxu0
  %1115 = vrot.lane.b32.xlu0 %v611, 16
  %v1116 = vpop.permute.xlu0 %1115
  %1117 = vrot.lane.b32.xlu0 %v660, 16
  %v1118 = vpop.permute.xlu0 %1117
  %1123 = vrot.lane.b32.xlu0 %v836, 32
  %v1124 = vpop.permute.xlu0 %1123
  %1125 = vrot.lane.b32.xlu0 %v884, 32
  %v1126 = vpop.permute.xlu0 %1125
  %1131 = vrot.lane.b32.xlu0 %v1060, 48
  %v1132 = vpop.permute.xlu0 %1131
  %1133 = vrot.lane.b32.xlu0 %v1108, 48
  %v1134 = vpop.permute.xlu0 %1133
  %v1137 = vsel %vm221, %v388, %v1116
  %v1138 = vsel %vm221, %v434, %v1118
  %vm1139 = vcmask 261120
  %v1140 = vsel %vm1139, %v1137, %v1124
  %v1141 = vsel %vm1139, %v1138, %v1126
  %vm1142 = vcmask 392192
  %v1143 = vsel %vm1142, %v1140, %v1132
  %v1144 = vsel %vm1142, %v1141, %v1134
  %v1145 = vpack.c.bf16 %v1144, %v1143
  %v1146 = vld [vmem:[%s5] sm:$0xf]
  %v1147 = vld [vmem:[%s5 + $0x4] sm:$0xf]
  %v1148 = vld [vmem:[%s5 + $0x8] sm:$0xf]
  %v1149 = vld [vmem:[%s5 + $0xc] sm:$0xf]
  %v1150 = vld [vmem:[%s5 + $0x10] sm:$0xf]
  %v1151 = vld [vmem:[%s5 + $0x14] sm:$0xf]
  %v1152 = vld [vmem:[%s5 + $0x18] sm:$0xf]
  %v1153 = vld [vmem:[%s5 + $0x1c] sm:$0xf]
  %v1162 = vunpack.c.l.b16 %v1146
  %v1163 = vunpack.c.l.b16 %v1147
  %v1164 = vunpack.c.l.b16 %v1148
  %v1165 = vunpack.c.l.b16 %v1149
  %v1166 = vunpack.c.l.b16 %v1150
  %v1167 = vunpack.c.l.b16 %v1151
  %v1168 = vunpack.c.l.b16 %v1152
  %v1169 = vunpack.c.l.b16 %v1153
  %v1170 = vpack.c.b16 %v1163, %v1162
  %v1171 = vpack.c.b16 %v1165, %v1164
  %v1172 = vpack.c.b16 %v1167, %v1166
  %v1173 = vpack.c.b16 %v1169, %v1168
  %v1179 = vsel %vm63, %v1145, 0
  %1181 = vmatprep.subr.bf16.mxu0 0
  %1182 = vmatpush1.bf16.msra.mxu0 0
  %1183 = vmatprep.subr.bf16.mxu0 0
  %1184 = vmatpush1.bf16.msra.mxu0 0
  %1185 = vmatprep.subr.bf16.mxu0 0
  %1186 = vmatpush1.bf16.msra.mxu0 0
  %1187 = vmatprep.subr.bf16.mxu0 0
  %1188 = vmatpush1.bf16.msra.mxu0 0
  %1189 = vmatprep.subr.bf16.mxu0 0
  %1190 = vmatpush1.bf16.msra.mxu0 %v1173
  %1191 = vmatprep.subr.bf16.mxu0 0
  %1192 = vmatpush1.bf16.msra.mxu0 %v1172
  %1193 = vmatprep.subr.bf16.mxu0 0
  %1194 = vmatpush1.bf16.msra.mxu0 %v1171
  %1195 = vmatprep.subr.bf16.mxu0 0
  %1196 = vmatpush1.bf16.msra.mxu0 %v1170
  %1197 = vmatprep.subr.bf16.mxu0 0
  %1198 = vmatpush2.bf16.msra.mxu0 0
  %1199 = vmatprep.subr.bf16.mxu0 0
  %1200 = vmatpush2.bf16.msra.mxu0 0
  %1201 = vmatprep.subr.bf16.mxu0 0
  %1202 = vmatpush2.bf16.msra.mxu0 0
  %1203 = vmatprep.subr.bf16.mxu0 0
  %1204 = vmatpush2.bf16.msra.mxu0 0
  %1205 = vmatprep.subr.bf16.mxu0 0
  %1206 = vmatpush2.bf16.msra.mxu0 0
  %1207 = vmatprep.subr.bf16.mxu0 0
  %1208 = vmatpush2.bf16.msra.mxu0 0
  %1209 = vmatprep.subr.bf16.mxu0 0
  %1210 = vmatpush2.bf16.msra.mxu0 0
  %1211 = vmatprep.subr.bf16.mxu0 0
  %1212 = vmatpush2.bf16.msra.mxu0 0
  %1213 = vmatprep.mubr.bf16.mxu0 0
  %1214 = vmatmul.mubr.bf16.gmra.mxu0 %v1179
  %v1215 = vpop.f32.mrf.mxu0
  %v1216 = vadd.f32 0.0, %v1215
  %v1217 = vpop.f32.mrf.mxu0
  %v1218 = vpop.f32.mrf.mxu0
  %v1219 = vadd.f32 0.0, %v1218
  %v1220 = vpop.f32.mrf.mxu0
  %1221 = vdwg.mxu0
  %v1222 = vadd.f32 %v54, %v1216
  %v1223 = vadd.f32 %v55, %v1219
  %v1224 = vld [vmem:[%s6] sm:$0x1]
  %v1226 = vlaneseq
  %v1227 = vshrl.u32 %v1226, 7
  %v1228 = vsub.s32 0, %v1227
  %v1229 = vrot.slane %v1224, %v1228
  %v1231 = vadd.f32 %v1222, %v1229
  %v1232 = vadd.f32 %v1223, %v1229
  %v1233 = vld [vmem:[%s7] sm:$0x1]
  %v1234 = vld [vmem:[%s8] sm:$0x1]
  %v1235 = vsel %vm63, %v1231, 0.0
  %1236 = vadd.xlane.f32.xlu0 %v1235
  %v1237 = vpop.xlane.xlu0 %1236
  %v1238 = vsel %vm63, %v1232, 0.0
  %1239 = vadd.xlane.f32.xlu0 %v1238
  %v1240 = vpop.xlane.xlu0 %1239
  %v1241 = vmul.f32 %v1237, %v70
  %v1242 = vmul.f32 %v1240, %v70
  %v1243 = vsub.f32 %v1231, %v1241
  %v1244 = vsub.f32 %v1232, %v1242
  %v1245 = vmul.f32 %v1243, %v1243
  %v1246 = vmul.f32 %v1244, %v1244
  %v1247 = vsel %vm63, %v1245, 0.0
  %1248 = vadd.xlane.f32.xlu0 %v1247
  %v1249 = vpop.xlane.xlu0 %1248
  %v1250 = vsel %vm63, %v1246, 0.0
  %1251 = vadd.xlane.f32.xlu0 %v1250
  %v1252 = vpop.xlane.xlu0 %1251
  %v1253 = vmul.f32 %v1249, %v70
  %v1254 = vmul.f32 %v1252, %v70
  %v1255 = vadd.f32 %v1253, 1e-05
  %v1256 = vadd.f32 %v1254, 1e-05
  %v1257 = vrsqrt.pop %v1255
  %v1258 = vrsqrt.pop %v1256
  %v1259 = vmul.f32 %v1243, %v1257
  %v1260 = vmul.f32 %v1244, %v1258
  %v1262 = vlaneseq
  %v1263 = vshrl.u32 %v1262, 7
  %v1264 = vsub.s32 0, %v1263
  %v1265 = vrot.slane %v1233, %v1264
  %v1267 = vmul.f32 %v1259, %v1265
  %v1268 = vmul.f32 %v1260, %v1265
  %v1270 = vlaneseq
  %v1271 = vshrl.u32 %v1270, 7
  %v1272 = vsub.s32 0, %v1271
  %v1273 = vrot.slane %v1234, %v1272
  %v1275 = vadd.f32 %v1267, %v1273
  %v1276 = vadd.f32 %v1268, %v1273
  %v1277 = vpack.c.bf16 %v1276, %v1275
  %v1278 = vld [vmem:[%s9] sm:$0xff]
  %v1279 = vld [vmem:[%s9 + $0x8] sm:$0xff]
  %v1280 = vld [vmem:[%s9 + $0x10] sm:$0xff]
  %v1281 = vld [vmem:[%s9 + $0x18] sm:$0xff]
  %v1282 = vld [vmem:[%s9 + $0x20] sm:$0xff]
  %v1283 = vld [vmem:[%s9 + $0x28] sm:$0xff]
  %v1284 = vld [vmem:[%s9 + $0x30] sm:$0xff]
  %v1285 = vld [vmem:[%s9 + $0x38] sm:$0xff]
  %v1286 = vld [vmem:[%s10] sm:$0x3]
  %v1288 = vlaneseq
  %v1289 = vshrl.u32 %v1288, 7
  %v1290 = vsub.s32 0, %v1289
  %v1291 = vrot.slane %v1286, %v1290
  %v1292 = vlaneseq
  %v1293 = vshrl.u32 %v1292, 7
  %v1294 = vsub.s32 1, %v1293
  %v1295 = vrot.slane %v1286, %v1294
  %v1306 = vunpack.c.l.b16 %v1278
  %v1307 = vunpack.c.h.b16 %v1278
  %v1308 = vunpack.c.l.b16 %v1279
  %v1309 = vunpack.c.h.b16 %v1279
  %v1310 = vunpack.c.l.b16 %v1280
  %v1311 = vunpack.c.h.b16 %v1280
  %v1312 = vunpack.c.l.b16 %v1281
  %v1313 = vunpack.c.h.b16 %v1281
  %v1314 = vunpack.c.l.b16 %v1282
  %v1315 = vunpack.c.h.b16 %v1282
  %v1316 = vunpack.c.l.b16 %v1283
  %v1317 = vunpack.c.h.b16 %v1283
  %v1318 = vunpack.c.l.b16 %v1284
  %v1319 = vunpack.c.h.b16 %v1284
  %v1320 = vunpack.c.l.b16 %v1285
  %v1321 = vunpack.c.h.b16 %v1285
  %v1322 = vpack.c.b16 %v1308, %v1306
  %v1323 = vpack.c.b16 %v1309, %v1307
  %v1324 = vpack.c.b16 %v1312, %v1310
  %v1325 = vpack.c.b16 %v1313, %v1311
  %v1326 = vpack.c.b16 %v1316, %v1314
  %v1327 = vpack.c.b16 %v1317, %v1315
  %v1328 = vpack.c.b16 %v1320, %v1318
  %v1329 = vpack.c.b16 %v1321, %v1319
  %v1339 = vsel %vm63, %v1277, 0
  %1341 = vmatprep.subr.bf16.mxu0 0
  %1342 = vmatpush1.bf16.msra.mxu0 0
  %1343 = vmatprep.subr.bf16.mxu0 0
  %1344 = vmatpush1.bf16.msra.mxu0 0
  %1345 = vmatprep.subr.bf16.mxu0 0
  %1346 = vmatpush1.bf16.msra.mxu0 0
  %1347 = vmatprep.subr.bf16.mxu0 0
  %1348 = vmatpush1.bf16.msra.mxu0 0
  %1349 = vmatprep.subr.bf16.mxu0 %v1329
  %1350 = vmatpush1.bf16.msra.mxu0 %v1328
  %1351 = vmatprep.subr.bf16.mxu0 %v1327
  %1352 = vmatpush1.bf16.msra.mxu0 %v1326
  %1353 = vmatprep.subr.bf16.mxu0 %v1325
  %1354 = vmatpush1.bf16.msra.mxu0 %v1324
  %1355 = vmatprep.subr.bf16.mxu0 %v1323
  %1356 = vmatpush1.bf16.msra.mxu0 %v1322
  %1357 = vmatprep.subr.bf16.mxu0 0
  %1358 = vmatpush2.bf16.msra.mxu0 0
  %1359 = vmatprep.subr.bf16.mxu0 0
  %1360 = vmatpush2.bf16.msra.mxu0 0
  %1361 = vmatprep.subr.bf16.mxu0 0
  %1362 = vmatpush2.bf16.msra.mxu0 0
  %1363 = vmatprep.subr.bf16.mxu0 0
  %1364 = vmatpush2.bf16.msra.mxu0 0
  %1365 = vmatprep.subr.bf16.mxu0 0
  %1366 = vmatpush2.bf16.msra.mxu0 0
  %1367 = vmatprep.subr.bf16.mxu0 0
  %1368 = vmatpush2.bf16.msra.mxu0 0
  %1369 = vmatprep.subr.bf16.mxu0 0
  %1370 = vmatpush2.bf16.msra.mxu0 0
  %1371 = vmatprep.subr.bf16.mxu0 0
  %1372 = vmatpush2.bf16.msra.mxu0 0
  %1373 = vmatprep.mubr.bf16.mxu0 0
  %1374 = vmatmul.mubr.bf16.gmra.mxu0 %v1339
  %v1375 = vpop.f32.mrf.mxu0
  %v1376 = vadd.f32 %v1291, %v1375
  %v1377 = vpop.f32.mrf.mxu0
  %v1378 = vadd.f32 %v1295, %v1377
  %v1379 = vpop.f32.mrf.mxu0
  %v1380 = vadd.f32 %v1291, %v1379
  %v1381 = vpop.f32.mrf.mxu0
  %v1382 = vadd.f32 %v1295, %v1381
  %1383 = vdwg.mxu0
  %v1384 = vmul.f32 %v1376, 0.5
  %v1385 = vmul.f32 %v1378, 0.5
  %v1386 = vmul.f32 %v1380, 0.5
  %v1387 = vmul.f32 %v1382, 0.5
  %v1388 = vmul.f32 %v1376, 0.044715
  %v1389 = vmul.f32 %v1378, 0.044715
  %v1390 = vmul.f32 %v1380, 0.044715
  %v1391 = vmul.f32 %v1382, 0.044715
  %v1392 = vmul.f32 %v1388, %v1376
  %v1393 = vmul.f32 %v1389, %v1378
  %v1394 = vmul.f32 %v1390, %v1380
  %v1395 = vmul.f32 %v1391, %v1382
  %v1396 = vmul.f32 %v1392, %v1376
  %v1397 = vmul.f32 %v1393, %v1378
  %v1398 = vmul.f32 %v1394, %v1380
  %v1399 = vmul.f32 %v1395, %v1382
  %v1400 = vadd.f32 %v1376, %v1396
  %v1401 = vadd.f32 %v1378, %v1397
  %v1402 = vadd.f32 %v1380, %v1398
  %v1403 = vadd.f32 %v1382, %v1399
  %v1404 = vmul.f32 %v1400, 0.7978846
  %v1405 = vmul.f32 %v1401, 0.7978846
  %v1406 = vmul.f32 %v1402, 0.7978846
  %v1407 = vmul.f32 %v1403, 0.7978846
  %v1408 = vtanh.pop %v1404
  %v1409 = vtanh.pop %v1405
  %v1410 = vtanh.pop %v1406
  %v1411 = vtanh.pop %v1407
  %v1412 = vadd.f32 %v1408, 1.0
  %v1413 = vadd.f32 %v1409, 1.0
  %v1414 = vadd.f32 %v1410, 1.0
  %v1415 = vadd.f32 %v1411, 1.0
  %v1416 = vmul.f32 %v1384, %v1412
  %v1417 = vmul.f32 %v1385, %v1413
  %v1418 = vmul.f32 %v1386, %v1414
  %v1419 = vmul.f32 %v1387, %v1415
  %v1420 = vpack.c.bf16 %v1418, %v1416
  %v1421 = vpack.c.bf16 %v1419, %v1417
  %v1422 = vld [vmem:[%s11] sm:$0xf]
  %v1423 = vld [vmem:[%s11 + $0x4] sm:$0xf]
  %v1424 = vld [vmem:[%s11 + $0x8] sm:$0xf]
  %v1425 = vld [vmem:[%s11 + $0xc] sm:$0xf]
  %v1426 = vld [vmem:[%s11 + $0x10] sm:$0xf]
  %v1427 = vld [vmem:[%s11 + $0x14] sm:$0xf]
  %v1428 = vld [vmem:[%s11 + $0x18] sm:$0xf]
  %v1429 = vld [vmem:[%s11 + $0x1c] sm:$0xf]
  %v1430 = vld [vmem:[%s11 + $0x20] sm:$0xf]
  %v1431 = vld [vmem:[%s11 + $0x24] sm:$0xf]
  %v1432 = vld [vmem:[%s11 + $0x28] sm:$0xf]
  %v1433 = vld [vmem:[%s11 + $0x2c] sm:$0xf]
  %v1434 = vld [vmem:[%s11 + $0x30] sm:$0xf]
  %v1435 = vld [vmem:[%s11 + $0x34] sm:$0xf]
  %v1436 = vld [vmem:[%s11 + $0x38] sm:$0xf]
  %v1437 = vld [vmem:[%s11 + $0x3c] sm:$0xf]
  %v1438 = vld [vmem:[%s11 + $0x40] sm:$0xf]
  %v1439 = vld [vmem:[%s11 + $0x44] sm:$0xf]
  %v1440 = vld [vmem:[%s11 + $0x48] sm:$0xf]
  %v1441 = vld [vmem:[%s11 + $0x4c] sm:$0xf]
  %v1442 = vld [vmem:[%s11 + $0x50] sm:$0xf]
  %v1443 = vld [vmem:[%s11 + $0x54] sm:$0xf]
  %v1444 = vld [vmem:[%s11 + $0x58] sm:$0xf]
  %v1445 = vld [vmem:[%s11 + $0x5c] sm:$0xf]
  %v1446 = vld [vmem:[%s11 + $0x60] sm:$0xf]
  %v1447 = vld [vmem:[%s11 + $0x64] sm:$0xf]
  %v1448 = vld [vmem:[%s11 + $0x68] sm:$0xf]
  %v1449 = vld [vmem:[%s11 + $0x6c] sm:$0xf]
  %v1450 = vld [vmem:[%s11 + $0x70] sm:$0xf]
  %v1451 = vld [vmem:[%s11 + $0x74] sm:$0xf]
  %v1452 = vld [vmem:[%s11 + $0x78] sm:$0xf]
  %v1453 = vld [vmem:[%s11 + $0x7c] sm:$0xf]
  %v1486 = vunpack.c.l.b16 %v1422
  %v1487 = vunpack.c.l.b16 %v1423
  %v1488 = vunpack.c.l.b16 %v1424
  %v1489 = vunpack.c.l.b16 %v1425
  %v1490 = vunpack.c.l.b16 %v1426
  %v1491 = vunpack.c.l.b16 %v1427
  %v1492 = vunpack.c.l.b16 %v1428
  %v1493 = vunpack.c.l.b16 %v1429
  %v1494 = vunpack.c.l.b16 %v1430
  %v1495 = vunpack.c.l.b16 %v1431
  %v1496 = vunpack.c.l.b16 %v1432
  %v1497 = vunpack.c.l.b16 %v1433
  %v1498 = vunpack.c.l.b16 %v1434
  %v1499 = vunpack.c.l.b16 %v1435
  %v1500 = vunpack.c.l.b16 %v1436
  %v1501 = vunpack.c.l.b16 %v1437
  %v1502 = vunpack.c.l.b16 %v1438
  %v1503 = vunpack.c.l.b16 %v1439
  %v1504 = vunpack.c.l.b16 %v1440
  %v1505 = vunpack.c.l.b16 %v1441
  %v1506 = vunpack.c.l.b16 %v1442
  %v1507 = vunpack.c.l.b16 %v1443
  %v1508 = vunpack.c.l.b16 %v1444
  %v1509 = vunpack.c.l.b16 %v1445
  %v1510 = vunpack.c.l.b16 %v1446
  %v1511 = vunpack.c.l.b16 %v1447
  %v1512 = vunpack.c.l.b16 %v1448
  %v1513 = vunpack.c.l.b16 %v1449
  %v1514 = vunpack.c.l.b16 %v1450
  %v1515 = vunpack.c.l.b16 %v1451
  %v1516 = vunpack.c.l.b16 %v1452
  %v1517 = vunpack.c.l.b16 %v1453
  %v1518 = vpack.c.b16 %v1487, %v1486
  %v1519 = vpack.c.b16 %v1489, %v1488
  %v1520 = vpack.c.b16 %v1491, %v1490
  %v1521 = vpack.c.b16 %v1493, %v1492
  %v1522 = vpack.c.b16 %v1495, %v1494
  %v1523 = vpack.c.b16 %v1497, %v1496
  %v1524 = vpack.c.b16 %v1499, %v1498
  %v1525 = vpack.c.b16 %v1501, %v1500
  %v1526 = vpack.c.b16 %v1503, %v1502
  %v1527 = vpack.c.b16 %v1505, %v1504
  %v1528 = vpack.c.b16 %v1507, %v1506
  %v1529 = vpack.c.b16 %v1509, %v1508
  %v1530 = vpack.c.b16 %v1511, %v1510
  %v1531 = vpack.c.b16 %v1513, %v1512
  %v1532 = vpack.c.b16 %v1515, %v1514
  %v1533 = vpack.c.b16 %v1517, %v1516
  %1550 = vmatprep.subr.bf16.mxu0 0
  %1551 = vmatpush1.bf16.msra.mxu0 %v1525
  %1552 = vmatprep.subr.bf16.mxu0 0
  %1553 = vmatpush1.bf16.msra.mxu0 %v1524
  %1554 = vmatprep.subr.bf16.mxu0 0
  %1555 = vmatpush1.bf16.msra.mxu0 %v1523
  %1556 = vmatprep.subr.bf16.mxu0 0
  %1557 = vmatpush1.bf16.msra.mxu0 %v1522
  %1558 = vmatprep.subr.bf16.mxu0 0
  %1559 = vmatpush1.bf16.msra.mxu0 %v1521
  %1560 = vmatprep.subr.bf16.mxu0 0
  %1561 = vmatpush1.bf16.msra.mxu0 %v1520
  %1562 = vmatprep.subr.bf16.mxu0 0
  %1563 = vmatpush1.bf16.msra.mxu0 %v1519
  %1564 = vmatprep.subr.bf16.mxu0 0
  %1565 = vmatpush1.bf16.msra.mxu0 %v1518
  %1566 = vmatprep.subr.bf16.mxu0 0
  %1567 = vmatpush2.bf16.msra.mxu0 %v1533
  %1568 = vmatprep.subr.bf16.mxu0 0
  %1569 = vmatpush2.bf16.msra.mxu0 %v1532
  %1570 = vmatprep.subr.bf16.mxu0 0
  %1571 = vmatpush2.bf16.msra.mxu0 %v1531
  %1572 = vmatprep.subr.bf16.mxu0 0
  %1573 = vmatpush2.bf16.msra.mxu0 %v1530
  %1574 = vmatprep.subr.bf16.mxu0 0
  %1575 = vmatpush2.bf16.msra.mxu0 %v1529
  %1576 = vmatprep.subr.bf16.mxu0 0
  %1577 = vmatpush2.bf16.msra.mxu0 %v1528
  %1578 = vmatprep.subr.bf16.mxu0 0
  %1579 = vmatpush2.bf16.msra.mxu0 %v1527
  %1580 = vmatprep.subr.bf16.mxu0 0
  %1581 = vmatpush2.bf16.msra.mxu0 %v1526
  %1582 = vmatprep.mubr.bf16.mxu0 %v1421
  %1583 = vmatmul.mubr.bf16.gmra.mxu0 %v1420
  %v1584 = vpop.f32.mrf.mxu0
  %v1585 = vadd.f32 0.0, %v1584
  %v1586 = vpop.f32.mrf.mxu0
  %v1587 = vpop.f32.mrf.mxu0
  %v1588 = vadd.f32 0.0, %v1587
  %v1589 = vpop.f32.mrf.mxu0
  %1590 = vdwg.mxu0
  %v1591 = vadd.f32 %v1231, %v1585
  %v1592 = vadd.f32 %v1232, %v1588
  %v1593 = vld [vmem:[%s12] sm:$0x1]
  %v1595 = vlaneseq
  %v1596 = vshrl.u32 %v1595, 7
  %v1597 = vsub.s32 0, %v1596
  %v1598 = vrot.slane %v1593, %v1597
  %v1600 = vadd.f32 %v1591, %v1598
  %v1601 = vadd.f32 %v1592, %v1598
  %s1602 = scalar_lea.vmem %s1, 1
  %v1603 = vld [vmem:[%s1602] sm:$0x1]
  %s1604 = scalar_lea.vmem %s2, 1
  %v1605 = vld [vmem:[%s1604] sm:$0x1]
  %v1606 = vsel %vm63, %v1600, 0.0
  %1607 = vadd.xlane.f32.xlu0 %v1606
  %v1608 = vpop.xlane.xlu0 %1607
  %v1609 = vsel %vm63, %v1601, 0.0
  %1610 = vadd.xlane.f32.xlu0 %v1609
  %v1611 = vpop.xlane.xlu0 %1610
  %v1612 = vmul.f32 %v1608, %v70
  %v1613 = vmul.f32 %v1611, %v70
  %v1614 = vsub.f32 %v1600, %v1612
  %v1615 = vsub.f32 %v1601, %v1613
  %v1616 = vmul.f32 %v1614, %v1614
  %v1617 = vmul.f32 %v1615, %v1615
  %v1618 = vsel %vm63, %v1616, 0.0
  %1619 = vadd.xlane.f32.xlu0 %v1618
  %v1620 = vpop.xlane.xlu0 %1619
  %v1621 = vsel %vm63, %v1617, 0.0
  %1622 = vadd.xlane.f32.xlu0 %v1621
  %v1623 = vpop.xlane.xlu0 %1622
  %v1624 = vmul.f32 %v1620, %v70
  %v1625 = vmul.f32 %v1623, %v70
  %v1626 = vadd.f32 %v1624, 1e-05
  %v1627 = vadd.f32 %v1625, 1e-05
  %v1628 = vrsqrt.pop %v1626
  %v1629 = vrsqrt.pop %v1627
  %v1630 = vmul.f32 %v1614, %v1628
  %v1631 = vmul.f32 %v1615, %v1629
  %v1633 = vlaneseq
  %v1634 = vshrl.u32 %v1633, 7
  %v1635 = vsub.s32 0, %v1634
  %v1636 = vrot.slane %v1603, %v1635
  %v1638 = vmul.f32 %v1630, %v1636
  %v1639 = vmul.f32 %v1631, %v1636
  %v1641 = vlaneseq
  %v1642 = vshrl.u32 %v1641, 7
  %v1643 = vsub.s32 0, %v1642
  %v1644 = vrot.slane %v1605, %v1643
  %v1646 = vadd.f32 %v1638, %v1644
  %v1647 = vadd.f32 %v1639, %v1644
  %v1648 = vpack.c.bf16 %v1647, %v1646
  %s1649 = scalar_lea.vmem %s3, 64
  %v1650 = vld [vmem:[%s1649] sm:$0xff]
  %v1651 = vld [vmem:[%s1649 + $0x8] sm:$0xff]
  %v1652 = vld [vmem:[%s1649 + $0x10] sm:$0xff]
  %v1653 = vld [vmem:[%s1649 + $0x18] sm:$0xff]
  %v1654 = vld [vmem:[%s1649 + $0x20] sm:$0xff]
  %v1655 = vld [vmem:[%s1649 + $0x28] sm:$0xff]
  %v1656 = vld [vmem:[%s1649 + $0x30] sm:$0xff]
  %v1657 = vld [vmem:[%s1649 + $0x38] sm:$0xff]
  %s1658 = scalar_lea.vmem %s4, 2
  %v1659 = vld [vmem:[%s1658] sm:$0x3]
  %v1661 = vlaneseq
  %v1662 = vshrl.u32 %v1661, 7
  %v1663 = vsub.s32 0, %v1662
  %v1664 = vrot.slane %v1659, %v1663
  %v1665 = vlaneseq
  %v1666 = vshrl.u32 %v1665, 7
  %v1667 = vsub.s32 1, %v1666
  %v1668 = vrot.slane %v1659, %v1667
  %v1679 = vunpack.c.l.b16 %v1650
  %v1680 = vunpack.c.h.b16 %v1650
  %v1681 = vunpack.c.l.b16 %v1651
  %v1682 = vunpack.c.h.b16 %v1651
  %v1683 = vunpack.c.l.b16 %v1652
  %v1684 = vunpack.c.h.b16 %v1652
  %v1685 = vunpack.c.l.b16 %v1653
  %v1686 = vunpack.c.h.b16 %v1653
  %v1687 = vunpack.c.l.b16 %v1654
  %v1688 = vunpack.c.h.b16 %v1654
  %v1689 = vunpack.c.l.b16 %v1655
  %v1690 = vunpack.c.h.b16 %v1655
  %v1691 = vunpack.c.l.b16 %v1656
  %v1692 = vunpack.c.h.b16 %v1656
  %v1693 = vunpack.c.l.b16 %v1657
  %v1694 = vunpack.c.h.b16 %v1657
  %v1695 = vpack.c.b16 %v1681, %v1679
  %v1696 = vpack.c.b16 %v1682, %v1680
  %v1697 = vpack.c.b16 %v1685, %v1683
  %v1698 = vpack.c.b16 %v1686, %v1684
  %v1699 = vpack.c.b16 %v1689, %v1687
  %v1700 = vpack.c.b16 %v1690, %v1688
  %v1701 = vpack.c.b16 %v1693, %v1691
  %v1702 = vpack.c.b16 %v1694, %v1692
  %v1712 = vsel %vm63, %v1648, 0
  %1714 = vmatprep.subr.bf16.mxu0 0
  %1715 = vmatpush1.bf16.msra.mxu0 0
  %1716 = vmatprep.subr.bf16.mxu0 0
  %1717 = vmatpush1.bf16.msra.mxu0 0
  %1718 = vmatprep.subr.bf16.mxu0 0
  %1719 = vmatpush1.bf16.msra.mxu0 0
  %1720 = vmatprep.subr.bf16.mxu0 0
  %1721 = vmatpush1.bf16.msra.mxu0 0
  %1722 = vmatprep.subr.bf16.mxu0 %v1702
  %1723 = vmatpush1.bf16.msra.mxu0 %v1701
  %1724 = vmatprep.subr.bf16.mxu0 %v1700
  %1725 = vmatpush1.bf16.msra.mxu0 %v1699
  %1726 = vmatprep.subr.bf16.mxu0 %v1698
  %1727 = vmatpush1.bf16.msra.mxu0 %v1697
  %1728 = vmatprep.subr.bf16.mxu0 %v1696
  %1729 = vmatpush1.bf16.msra.mxu0 %v1695
  %1730 = vmatprep.subr.bf16.mxu0 0
  %1731 = vmatpush2.bf16.msra.mxu0 0
  %1732 = vmatprep.subr.bf16.mxu0 0
  %1733 = vmatpush2.bf16.msra.mxu0 0
  %1734 = vmatprep.subr.bf16.mxu0 0
  %1735 = vmatpush2.bf16.msra.mxu0 0
  %1736 = vmatprep.subr.bf16.mxu0 0
  %1737 = vmatpush2.bf16.msra.mxu0 0
  %1738 = vmatprep.subr.bf16.mxu0 0
  %1739 = vmatpush2.bf16.msra.mxu0 0
  %1740 = vmatprep.subr.bf16.mxu0 0
  %1741 = vmatpush2.bf16.msra.mxu0 0
  %1742 = vmatprep.subr.bf16.mxu0 0
  %1743 = vmatpush2.bf16.msra.mxu0 0
  %1744 = vmatprep.subr.bf16.mxu0 0
  %1745 = vmatpush2.bf16.msra.mxu0 0
  %1746 = vmatprep.mubr.bf16.mxu0 0
  %1747 = vmatmul.mubr.bf16.gmra.mxu0 %v1712
  %v1748 = vpop.f32.mrf.mxu0
  %v1749 = vadd.f32 %v1664, %v1748
  %v1750 = vpop.f32.mrf.mxu0
  %v1751 = vadd.f32 %v1668, %v1750
  %v1752 = vpop.f32.mrf.mxu0
  %v1753 = vadd.f32 %v1664, %v1752
  %v1754 = vpop.f32.mrf.mxu0
  %v1755 = vadd.f32 %v1668, %v1754
  %1756 = vdwg.mxu0
  %v1757 = vpack.c.bf16 %v1749, %v1749
  %v1758 = vpack.c.bf16 %v1753, %v1753
  %v1759 = vpack.c.bf16 %v1751, %v1751
  %v1760 = vpack.c.bf16 %v1755, %v1755
  %1762 = vrot.lane.b32.xlu0 %v1757, 64
  %v1763 = vpop.permute.xlu0 %1762
  %v1765 = vsel %vm221, %v1757, 0
  %v1768 = vsel %vm221, %v1763, 0
  %1770 = vmatprep.subr.bf16.mxu0 0
  %1771 = vmatpush1.bf16.xpose.msra.mxu0 0
  %1772 = vmatprep.subr.bf16.mxu0 0
  %1773 = vmatpush1.bf16.xpose.msra.mxu0 0
  %1774 = vmatprep.subr.bf16.mxu0 0
  %1775 = vmatpush1.bf16.xpose.msra.mxu0 0
  %1776 = vmatprep.subr.bf16.mxu0 0
  %1777 = vmatpush1.bf16.xpose.msra.mxu0 0
  %1778 = vmatprep.subr.bf16.mxu0 0
  %1779 = vmatpush1.bf16.xpose.msra.mxu0 0
  %1780 = vmatprep.subr.bf16.mxu0 0
  %1781 = vmatpush1.bf16.xpose.msra.mxu0 0
  %1782 = vmatprep.subr.bf16.mxu0 0
  %1783 = vmatpush1.bf16.xpose.msra.mxu0 0
  %1784 = vmatprep.subr.bf16.mxu0 0
  %1785 = vmatpush1.bf16.xpose.msra.mxu0 %v1768
  %1786 = vmatprep.subr.bf16.mxu0 0
  %1787 = vmatpush2.bf16.xpose.msra.mxu0 0
  %1788 = vmatprep.subr.bf16.mxu0 0
  %1789 = vmatpush2.bf16.xpose.msra.mxu0 0
  %1790 = vmatprep.subr.bf16.mxu0 0
  %1791 = vmatpush2.bf16.xpose.msra.mxu0 0
  %1792 = vmatprep.subr.bf16.mxu0 0
  %1793 = vmatpush2.bf16.xpose.msra.mxu0 0
  %1794 = vmatprep.subr.bf16.mxu0 0
  %1795 = vmatpush2.bf16.xpose.msra.mxu0 0
  %1796 = vmatprep.subr.bf16.mxu0 0
  %1797 = vmatpush2.bf16.xpose.msra.mxu0 0
  %1798 = vmatprep.subr.bf16.mxu0 0
  %1799 = vmatpush2.bf16.xpose.msra.mxu0 0
  %1800 = vmatprep.subr.bf16.mxu0 0
  %1801 = vmatpush2.bf16.xpose.msra.mxu0 0
  %1802 = vmatprep.mubr.bf16.mxu0 0
  %1803 = vmatmul.mubr.bf16.gmra.mxu0 %v1765
  %v1804 = vpop.f32.mrf.mxu0
  %v1805 = vadd.f32 0.0, %v1804
  %v1806 = vpop.f32.mrf.mxu0
  %v1807 = vpop.f32.mrf.mxu0
  %v1808 = vpop.f32.mrf.mxu0
  %1809 = vdwg.mxu0
  %1811 = vrot.lane.b32.xlu0 %v1758, 64
  %v1812 = vpop.permute.xlu0 %1811
  %v1814 = vsel %vm221, %v1758, 0
  %v1817 = vsel %vm221, %v1812, 0
  %1819 = vmatprep.subr.bf16.mxu0 0
  %1820 = vmatpush1.bf16.xpose.msra.mxu0 0
  %1821 = vmatprep.subr.bf16.mxu0 0
  %1822 = vmatpush1.bf16.xpose.msra.mxu0 0
  %1823 = vmatprep.subr.bf16.mxu0 0
  %1824 = vmatpush1.bf16.xpose.msra.mxu0 0
  %1825 = vmatprep.subr.bf16.mxu0 0
  %1826 = vmatpush1.bf16.xpose.msra.mxu0 0
  %1827 = vmatprep.subr.bf16.mxu0 0
  %1828 = vmatpush1.bf16.xpose.msra.mxu0 0
  %1829 = vmatprep.subr.bf16.mxu0 0
  %1830 = vmatpush1.bf16.xpose.msra.mxu0 0
  %1831 = vmatprep.subr.bf16.mxu0 0
  %1832 = vmatpush1.bf16.xpose.msra.mxu0 0
  %1833 = vmatprep.subr.bf16.mxu0 0
  %1834 = vmatpush1.bf16.xpose.msra.mxu0 %v1817
  %1835 = vmatprep.subr.bf16.mxu0 0
  %1836 = vmatpush2.bf16.xpose.msra.mxu0 0
  %1837 = vmatprep.subr.bf16.mxu0 0
  %1838 = vmatpush2.bf16.xpose.msra.mxu0 0
  %1839 = vmatprep.subr.bf16.mxu0 0
  %1840 = vmatpush2.bf16.xpose.msra.mxu0 0
  %1841 = vmatprep.subr.bf16.mxu0 0
  %1842 = vmatpush2.bf16.xpose.msra.mxu0 0
  %1843 = vmatprep.subr.bf16.mxu0 0
  %1844 = vmatpush2.bf16.xpose.msra.mxu0 0
  %1845 = vmatprep.subr.bf16.mxu0 0
  %1846 = vmatpush2.bf16.xpose.msra.mxu0 0
  %1847 = vmatprep.subr.bf16.mxu0 0
  %1848 = vmatpush2.bf16.xpose.msra.mxu0 0
  %1849 = vmatprep.subr.bf16.mxu0 0
  %1850 = vmatpush2.bf16.xpose.msra.mxu0 0
  %1851 = vmatprep.mubr.bf16.mxu0 0
  %1852 = vmatmul.mubr.bf16.gmra.mxu0 %v1814
  %v1853 = vpop.f32.mrf.mxu0
  %v1854 = vadd.f32 0.0, %v1853
  %v1855 = vpop.f32.mrf.mxu0
  %v1856 = vpop.f32.mrf.mxu0
  %v1857 = vpop.f32.mrf.mxu0
  %1858 = vdwg.mxu0
  %v1859 = vmul.f32 %v1805, 0.25
  %v1860 = vmul.f32 %v1854, 0.25
  %v1861 = vsel %vm60, %v1859, -1e+30
  %v1862 = vsel %vm60, %v1860, -1e+30
  %v1863 = vsel %vm321, %v1861, -inf
  %1864 = vmax.xlane.f32.xlu0 %v1863
  %v1865 = vpop.xlane.xlu0 %1864
  %v1866 = vsel %vm321, %v1862, -inf
  %1867 = vmax.xlane.f32.xlu0 %v1866
  %v1868 = vpop.xlane.xlu0 %1867
  %v1869 = vsub.f32 %v1861, %v1865
  %v1870 = vsub.f32 %v1862, %v1868
  %v1871 = vmul.f32 %v1869, 1.442695
  %v1872 = vpow.pop %v1871
  %v1873 = vmul.f32 %v1870, 1.442695
  %v1874 = vpow.pop %v1873
  %v1875 = vsel %vm321, %v1872, 0.0
  %1876 = vadd.xlane.f32.xlu0 %v1875
  %v1877 = vpop.xlane.xlu0 %1876
  %v1878 = vsel %vm321, %v1874, 0.0
  %1879 = vadd.xlane.f32.xlu0 %v1878
  %v1880 = vpop.xlane.xlu0 %1879
  %v1881 = vrcp.pop %v1877
  %v1882 = vrcp.pop %v1880
  %v1883 = vmul.f32 %v1872, %v1881
  %v1884 = vmul.f32 %v1874, %v1882
  %v1885 = vpack.c.bf16 %v1883, %v1883
  %v1886 = vpack.c.bf16 %v1884, %v1884
  %v1888 = vsel %vm321, %v1885, 0
  %v1891 = vsel %vm349, %v1759, 0
  %1893 = vmatprep.subr.bf16.mxu0 0
  %1894 = vmatpush1.bf16.msra.mxu0 0
  %1895 = vmatprep.subr.bf16.mxu0 0
  %1896 = vmatpush1.bf16.msra.mxu0 0
  %1897 = vmatprep.subr.bf16.mxu0 0
  %1898 = vmatpush1.bf16.msra.mxu0 0
  %1899 = vmatprep.subr.bf16.mxu0 0
  %1900 = vmatpush1.bf16.msra.mxu0 0
  %1901 = vmatprep.subr.bf16.mxu0 0
  %1902 = vmatpush1.bf16.msra.mxu0 0
  %1903 = vmatprep.subr.bf16.mxu0 0
  %1904 = vmatpush1.bf16.msra.mxu0 0
  %1905 = vmatprep.subr.bf16.mxu0 0
  %1906 = vmatpush1.bf16.msra.mxu0 0
  %1907 = vmatprep.subr.bf16.mxu0 0
  %1908 = vmatpush1.bf16.msra.mxu0 %v1891
  %1909 = vmatprep.subr.bf16.mxu0 0
  %1910 = vmatpush2.bf16.msra.mxu0 0
  %1911 = vmatprep.subr.bf16.mxu0 0
  %1912 = vmatpush2.bf16.msra.mxu0 0
  %1913 = vmatprep.subr.bf16.mxu0 0
  %1914 = vmatpush2.bf16.msra.mxu0 0
  %1915 = vmatprep.subr.bf16.mxu0 0
  %1916 = vmatpush2.bf16.msra.mxu0 0
  %1917 = vmatprep.subr.bf16.mxu0 0
  %1918 = vmatpush2.bf16.msra.mxu0 0
  %1919 = vmatprep.subr.bf16.mxu0 0
  %1920 = vmatpush2.bf16.msra.mxu0 0
  %1921 = vmatprep.subr.bf16.mxu0 0
  %1922 = vmatpush2.bf16.msra.mxu0 0
  %1923 = vmatprep.subr.bf16.mxu0 0
  %1924 = vmatpush2.bf16.msra.mxu0 0
  %1925 = vmatprep.mubr.bf16.mxu0 0
  %1926 = vmatmul.mubr.bf16.gmra.mxu0 %v1888
  %v1927 = vpop.f32.mrf.mxu0
  %v1928 = vadd.f32 0.0, %v1927
  %v1929 = vpop.f32.mrf.mxu0
  %v1930 = vpop.f32.mrf.mxu0
  %v1931 = vpop.f32.mrf.mxu0
  %1932 = vdwg.mxu0
  %v1934 = vsel %vm321, %v1886, 0
  %v1937 = vsel %vm349, %v1760, 0
  %1939 = vmatprep.subr.bf16.mxu0 0
  %1940 = vmatpush1.bf16.msra.mxu0 0
  %1941 = vmatprep.subr.bf16.mxu0 0
  %1942 = vmatpush1.bf16.msra.mxu0 0
  %1943 = vmatprep.subr.bf16.mxu0 0
  %1944 = vmatpush1.bf16.msra.mxu0 0
  %1945 = vmatprep.subr.bf16.mxu0 0
  %1946 = vmatpush1.bf16.msra.mxu0 0
  %1947 = vmatprep.subr.bf16.mxu0 0
  %1948 = vmatpush1.bf16.msra.mxu0 0
  %1949 = vmatprep.subr.bf16.mxu0 0
  %1950 = vmatpush1.bf16.msra.mxu0 0
  %1951 = vmatprep.subr.bf16.mxu0 0
  %1952 = vmatpush1.bf16.msra.mxu0 0
  %1953 = vmatprep.subr.bf16.mxu0 0
  %1954 = vmatpush1.bf16.msra.mxu0 %v1937
  %1955 = vmatprep.subr.bf16.mxu0 0
  %1956 = vmatpush2.bf16.msra.mxu0 0
  %1957 = vmatprep.subr.bf16.mxu0 0
  %1958 = vmatpush2.bf16.msra.mxu0 0
  %1959 = vmatprep.subr.bf16.mxu0 0
  %1960 = vmatpush2.bf16.msra.mxu0 0
  %1961 = vmatprep.subr.bf16.mxu0 0
  %1962 = vmatpush2.bf16.msra.mxu0 0
  %1963 = vmatprep.subr.bf16.mxu0 0
  %1964 = vmatpush2.bf16.msra.mxu0 0
  %1965 = vmatprep.subr.bf16.mxu0 0
  %1966 = vmatpush2.bf16.msra.mxu0 0
  %1967 = vmatprep.subr.bf16.mxu0 0
  %1968 = vmatpush2.bf16.msra.mxu0 0
  %1969 = vmatprep.subr.bf16.mxu0 0
  %1970 = vmatpush2.bf16.msra.mxu0 0
  %1971 = vmatprep.mubr.bf16.mxu0 0
  %1972 = vmatmul.mubr.bf16.gmra.mxu0 %v1934
  %v1973 = vpop.f32.mrf.mxu0
  %v1974 = vadd.f32 0.0, %v1973
  %v1975 = vpop.f32.mrf.mxu0
  %v1976 = vpop.f32.mrf.mxu0
  %v1977 = vpop.f32.mrf.mxu0
  %1978 = vdwg.mxu0
  %1979 = vrot.lane.b32.xlu0 %v1757, 112
  %v1980 = vpop.permute.xlu0 %1979
  %1981 = vrot.lane.b32.xlu0 %v1757, 48
  %v1982 = vpop.permute.xlu0 %1981
  %v1984 = vsel %vm221, %v1980, 0
  %v1987 = vsel %vm221, %v1982, 0
  %1989 = vmatprep.subr.bf16.mxu0 0
  %1990 = vmatpush1.bf16.xpose.msra.mxu0 0
  %1991 = vmatprep.subr.bf16.mxu0 0
  %1992 = vmatpush1.bf16.xpose.msra.mxu0 0
  %1993 = vmatprep.subr.bf16.mxu0 0
  %1994 = vmatpush1.bf16.xpose.msra.mxu0 0
  %1995 = vmatprep.subr.bf16.mxu0 0
  %1996 = vmatpush1.bf16.xpose.msra.mxu0 0
  %1997 = vmatprep.subr.bf16.mxu0 0
  %1998 = vmatpush1.bf16.xpose.msra.mxu0 0
  %1999 = vmatprep.subr.bf16.mxu0 0
  %2000 = vmatpush1.bf16.xpose.msra.mxu0 0
  %2001 = vmatprep.subr.bf16.mxu0 0
  %2002 = vmatpush1.bf16.xpose.msra.mxu0 0
  %2003 = vmatprep.subr.bf16.mxu0 0
  %2004 = vmatpush1.bf16.xpose.msra.mxu0 %v1987
  %2005 = vmatprep.subr.bf16.mxu0 0
  %2006 = vmatpush2.bf16.xpose.msra.mxu0 0
  %2007 = vmatprep.subr.bf16.mxu0 0
  %2008 = vmatpush2.bf16.xpose.msra.mxu0 0
  %2009 = vmatprep.subr.bf16.mxu0 0
  %2010 = vmatpush2.bf16.xpose.msra.mxu0 0
  %2011 = vmatprep.subr.bf16.mxu0 0
  %2012 = vmatpush2.bf16.xpose.msra.mxu0 0
  %2013 = vmatprep.subr.bf16.mxu0 0
  %2014 = vmatpush2.bf16.xpose.msra.mxu0 0
  %2015 = vmatprep.subr.bf16.mxu0 0
  %2016 = vmatpush2.bf16.xpose.msra.mxu0 0
  %2017 = vmatprep.subr.bf16.mxu0 0
  %2018 = vmatpush2.bf16.xpose.msra.mxu0 0
  %2019 = vmatprep.subr.bf16.mxu0 0
  %2020 = vmatpush2.bf16.xpose.msra.mxu0 0
  %2021 = vmatprep.mubr.bf16.mxu0 0
  %2022 = vmatmul.mubr.bf16.gmra.mxu0 %v1984
  %v2023 = vpop.f32.mrf.mxu0
  %v2024 = vadd.f32 0.0, %v2023
  %v2025 = vpop.f32.mrf.mxu0
  %v2026 = vpop.f32.mrf.mxu0
  %v2027 = vpop.f32.mrf.mxu0
  %2028 = vdwg.mxu0
  %2029 = vrot.lane.b32.xlu0 %v1758, 112
  %v2030 = vpop.permute.xlu0 %2029
  %2031 = vrot.lane.b32.xlu0 %v1758, 48
  %v2032 = vpop.permute.xlu0 %2031
  %v2034 = vsel %vm221, %v2030, 0
  %v2037 = vsel %vm221, %v2032, 0
  %2039 = vmatprep.subr.bf16.mxu0 0
  %2040 = vmatpush1.bf16.xpose.msra.mxu0 0
  %2041 = vmatprep.subr.bf16.mxu0 0
  %2042 = vmatpush1.bf16.xpose.msra.mxu0 0
  %2043 = vmatprep.subr.bf16.mxu0 0
  %2044 = vmatpush1.bf16.xpose.msra.mxu0 0
  %2045 = vmatprep.subr.bf16.mxu0 0
  %2046 = vmatpush1.bf16.xpose.msra.mxu0 0
  %2047 = vmatprep.subr.bf16.mxu0 0
  %2048 = vmatpush1.bf16.xpose.msra.mxu0 0
  %2049 = vmatprep.subr.bf16.mxu0 0
  %2050 = vmatpush1.bf16.xpose.msra.mxu0 0
  %2051 = vmatprep.subr.bf16.mxu0 0
  %2052 = vmatpush1.bf16.xpose.msra.mxu0 0
  %2053 = vmatprep.subr.bf16.mxu0 0
  %2054 = vmatpush1.bf16.xpose.msra.mxu0 %v2037
  %2055 = vmatprep.subr.bf16.mxu0 0
  %2056 = vmatpush2.bf16.xpose.msra.mxu0 0
  %2057 = vmatprep.subr.bf16.mxu0 0
  %2058 = vmatpush2.bf16.xpose.msra.mxu0 0
  %2059 = vmatprep.subr.bf16.mxu0 0
  %2060 = vmatpush2.bf16.xpose.msra.mxu0 0
  %2061 = vmatprep.subr.bf16.mxu0 0
  %2062 = vmatpush2.bf16.xpose.msra.mxu0 0
  %2063 = vmatprep.subr.bf16.mxu0 0
  %2064 = vmatpush2.bf16.xpose.msra.mxu0 0
  %2065 = vmatprep.subr.bf16.mxu0 0
  %2066 = vmatpush2.bf16.xpose.msra.mxu0 0
  %2067 = vmatprep.subr.bf16.mxu0 0
  %2068 = vmatpush2.bf16.xpose.msra.mxu0 0
  %2069 = vmatprep.subr.bf16.mxu0 0
  %2070 = vmatpush2.bf16.xpose.msra.mxu0 0
  %2071 = vmatprep.mubr.bf16.mxu0 0
  %2072 = vmatmul.mubr.bf16.gmra.mxu0 %v2034
  %v2073 = vpop.f32.mrf.mxu0
  %v2074 = vadd.f32 0.0, %v2073
  %v2075 = vpop.f32.mrf.mxu0
  %v2076 = vpop.f32.mrf.mxu0
  %v2077 = vpop.f32.mrf.mxu0
  %2078 = vdwg.mxu0
  %v2079 = vmul.f32 %v2024, 0.25
  %v2080 = vmul.f32 %v2074, 0.25
  %v2081 = vsel %vm60, %v2079, -1e+30
  %v2082 = vsel %vm60, %v2080, -1e+30
  %v2083 = vsel %vm321, %v2081, -inf
  %2084 = vmax.xlane.f32.xlu0 %v2083
  %v2085 = vpop.xlane.xlu0 %2084
  %v2086 = vsel %vm321, %v2082, -inf
  %2087 = vmax.xlane.f32.xlu0 %v2086
  %v2088 = vpop.xlane.xlu0 %2087
  %v2089 = vsub.f32 %v2081, %v2085
  %v2090 = vsub.f32 %v2082, %v2088
  %v2091 = vmul.f32 %v2089, 1.442695
  %v2092 = vpow.pop %v2091
  %v2093 = vmul.f32 %v2090, 1.442695
  %v2094 = vpow.pop %v2093
  %v2095 = vsel %vm321, %v2092, 0.0
  %2096 = vadd.xlane.f32.xlu0 %v2095
  %v2097 = vpop.xlane.xlu0 %2096
  %v2098 = vsel %vm321, %v2094, 0.0
  %2099 = vadd.xlane.f32.xlu0 %v2098
  %v2100 = vpop.xlane.xlu0 %2099
  %v2101 = vrcp.pop %v2097
  %v2102 = vrcp.pop %v2100
  %v2103 = vmul.f32 %v2092, %v2101
  %v2104 = vmul.f32 %v2094, %v2102
  %v2105 = vpack.c.bf16 %v2103, %v2103
  %v2106 = vpack.c.bf16 %v2104, %v2104
  %2108 = vrot.lane.b32.xlu0 %v1759, 112
  %v2109 = vpop.permute.xlu0 %2108
  %v2111 = vsel %vm321, %v2105, 0
  %v2114 = vsel %vm349, %v2109, 0
  %2116 = vmatprep.subr.bf16.mxu0 0
  %2117 = vmatpush1.bf16.msra.mxu0 0
  %2118 = vmatprep.subr.bf16.mxu0 0
  %2119 = vmatpush1.bf16.msra.mxu0 0
  %2120 = vmatprep.subr.bf16.mxu0 0
  %2121 = vmatpush1.bf16.msra.mxu0 0
  %2122 = vmatprep.subr.bf16.mxu0 0
  %2123 = vmatpush1.bf16.msra.mxu0 0
  %2124 = vmatprep.subr.bf16.mxu0 0
  %2125 = vmatpush1.bf16.msra.mxu0 0
  %2126 = vmatprep.subr.bf16.mxu0 0
  %2127 = vmatpush1.bf16.msra.mxu0 0
  %2128 = vmatprep.subr.bf16.mxu0 0
  %2129 = vmatpush1.bf16.msra.mxu0 0
  %2130 = vmatprep.subr.bf16.mxu0 0
  %2131 = vmatpush1.bf16.msra.mxu0 %v2114
  %2132 = vmatprep.subr.bf16.mxu0 0
  %2133 = vmatpush2.bf16.msra.mxu0 0
  %2134 = vmatprep.subr.bf16.mxu0 0
  %2135 = vmatpush2.bf16.msra.mxu0 0
  %2136 = vmatprep.subr.bf16.mxu0 0
  %2137 = vmatpush2.bf16.msra.mxu0 0
  %2138 = vmatprep.subr.bf16.mxu0 0
  %2139 = vmatpush2.bf16.msra.mxu0 0
  %2140 = vmatprep.subr.bf16.mxu0 0
  %2141 = vmatpush2.bf16.msra.mxu0 0
  %2142 = vmatprep.subr.bf16.mxu0 0
  %2143 = vmatpush2.bf16.msra.mxu0 0
  %2144 = vmatprep.subr.bf16.mxu0 0
  %2145 = vmatpush2.bf16.msra.mxu0 0
  %2146 = vmatprep.subr.bf16.mxu0 0
  %2147 = vmatpush2.bf16.msra.mxu0 0
  %2148 = vmatprep.mubr.bf16.mxu0 0
  %2149 = vmatmul.mubr.bf16.gmra.mxu0 %v2111
  %v2150 = vpop.f32.mrf.mxu0
  %v2151 = vadd.f32 0.0, %v2150
  %v2152 = vpop.f32.mrf.mxu0
  %v2153 = vpop.f32.mrf.mxu0
  %v2154 = vpop.f32.mrf.mxu0
  %2155 = vdwg.mxu0
  %2157 = vrot.lane.b32.xlu0 %v1760, 112
  %v2158 = vpop.permute.xlu0 %2157
  %v2160 = vsel %vm321, %v2106, 0
  %v2163 = vsel %vm349, %v2158, 0
  %2165 = vmatprep.subr.bf16.mxu0 0
  %2166 = vmatpush1.bf16.msra.mxu0 0
  %2167 = vmatprep.subr.bf16.mxu0 0
  %2168 = vmatpush1.bf16.msra.mxu0 0
  %2169 = vmatprep.subr.bf16.mxu0 0
  %2170 = vmatpush1.bf16.msra.mxu0 0
  %2171 = vmatprep.subr.bf16.mxu0 0
  %2172 = vmatpush1.bf16.msra.mxu0 0
  %2173 = vmatprep.subr.bf16.mxu0 0
  %2174 = vmatpush1.bf16.msra.mxu0 0
  %2175 = vmatprep.subr.bf16.mxu0 0
  %2176 = vmatpush1.bf16.msra.mxu0 0
  %2177 = vmatprep.subr.bf16.mxu0 0
  %2178 = vmatpush1.bf16.msra.mxu0 0
  %2179 = vmatprep.subr.bf16.mxu0 0
  %2180 = vmatpush1.bf16.msra.mxu0 %v2163
  %2181 = vmatprep.subr.bf16.mxu0 0
  %2182 = vmatpush2.bf16.msra.mxu0 0
  %2183 = vmatprep.subr.bf16.mxu0 0
  %2184 = vmatpush2.bf16.msra.mxu0 0
  %2185 = vmatprep.subr.bf16.mxu0 0
  %2186 = vmatpush2.bf16.msra.mxu0 0
  %2187 = vmatprep.subr.bf16.mxu0 0
  %2188 = vmatpush2.bf16.msra.mxu0 0
  %2189 = vmatprep.subr.bf16.mxu0 0
  %2190 = vmatpush2.bf16.msra.mxu0 0
  %2191 = vmatprep.subr.bf16.mxu0 0
  %2192 = vmatpush2.bf16.msra.mxu0 0
  %2193 = vmatprep.subr.bf16.mxu0 0
  %2194 = vmatpush2.bf16.msra.mxu0 0
  %2195 = vmatprep.subr.bf16.mxu0 0
  %2196 = vmatpush2.bf16.msra.mxu0 0
  %2197 = vmatprep.mubr.bf16.mxu0 0
  %2198 = vmatmul.mubr.bf16.gmra.mxu0 %v2160
  %v2199 = vpop.f32.mrf.mxu0
  %v2200 = vadd.f32 0.0, %v2199
  %v2201 = vpop.f32.mrf.mxu0
  %v2202 = vpop.f32.mrf.mxu0
  %v2203 = vpop.f32.mrf.mxu0
  %2204 = vdwg.mxu0
  %2205 = vrot.lane.b32.xlu0 %v1757, 96
  %v2206 = vpop.permute.xlu0 %2205
  %2207 = vrot.lane.b32.xlu0 %v1757, 32
  %v2208 = vpop.permute.xlu0 %2207
  %v2210 = vsel %vm221, %v2206, 0
  %v2213 = vsel %vm221, %v2208, 0
  %2215 = vmatprep.subr.bf16.mxu0 0
  %2216 = vmatpush1.bf16.xpose.msra.mxu0 0
  %2217 = vmatprep.subr.bf16.mxu0 0
  %2218 = vmatpush1.bf16.xpose.msra.mxu0 0
  %2219 = vmatprep.subr.bf16.mxu0 0
  %2220 = vmatpush1.bf16.xpose.msra.mxu0 0
  %2221 = vmatprep.subr.bf16.mxu0 0
  %2222 = vmatpush1.bf16.xpose.msra.mxu0 0
  %2223 = vmatprep.subr.bf16.mxu0 0
  %2224 = vmatpush1.bf16.xpose.msra.mxu0 0
  %2225 = vmatprep.subr.bf16.mxu0 0
  %2226 = vmatpush1.bf16.xpose.msra.mxu0 0
  %2227 = vmatprep.subr.bf16.mxu0 0
  %2228 = vmatpush1.bf16.xpose.msra.mxu0 0
  %2229 = vmatprep.subr.bf16.mxu0 0
  %2230 = vmatpush1.bf16.xpose.msra.mxu0 %v2213
  %2231 = vmatprep.subr.bf16.mxu0 0
  %2232 = vmatpush2.bf16.xpose.msra.mxu0 0
  %2233 = vmatprep.subr.bf16.mxu0 0
  %2234 = vmatpush2.bf16.xpose.msra.mxu0 0
  %2235 = vmatprep.subr.bf16.mxu0 0
  %2236 = vmatpush2.bf16.xpose.msra.mxu0 0
  %2237 = vmatprep.subr.bf16.mxu0 0
  %2238 = vmatpush2.bf16.xpose.msra.mxu0 0
  %2239 = vmatprep.subr.bf16.mxu0 0
  %2240 = vmatpush2.bf16.xpose.msra.mxu0 0
  %2241 = vmatprep.subr.bf16.mxu0 0
  %2242 = vmatpush2.bf16.xpose.msra.mxu0 0
  %2243 = vmatprep.subr.bf16.mxu0 0
  %2244 = vmatpush2.bf16.xpose.msra.mxu0 0
  %2245 = vmatprep.subr.bf16.mxu0 0
  %2246 = vmatpush2.bf16.xpose.msra.mxu0 0
  %2247 = vmatprep.mubr.bf16.mxu0 0
  %2248 = vmatmul.mubr.bf16.gmra.mxu0 %v2210
  %v2249 = vpop.f32.mrf.mxu0
  %v2250 = vadd.f32 0.0, %v2249
  %v2251 = vpop.f32.mrf.mxu0
  %v2252 = vpop.f32.mrf.mxu0
  %v2253 = vpop.f32.mrf.mxu0
  %2254 = vdwg.mxu0
  %2255 = vrot.lane.b32.xlu0 %v1758, 96
  %v2256 = vpop.permute.xlu0 %2255
  %2257 = vrot.lane.b32.xlu0 %v1758, 32
  %v2258 = vpop.permute.xlu0 %2257
  %v2260 = vsel %vm221, %v2256, 0
  %v2263 = vsel %vm221, %v2258, 0
  %2265 = vmatprep.subr.bf16.mxu0 0
  %2266 = vmatpush1.bf16.xpose.msra.mxu0 0
  %2267 = vmatprep.subr.bf16.mxu0 0
  %2268 = vmatpush1.bf16.xpose.msra.mxu0 0
  %2269 = vmatprep.subr.bf16.mxu0 0
  %2270 = vmatpush1.bf16.xpose.msra.mxu0 0
  %2271 = vmatprep.subr.bf16.mxu0 0
  %2272 = vmatpush1.bf16.xpose.msra.mxu0 0
  %2273 = vmatprep.subr.bf16.mxu0 0
  %2274 = vmatpush1.bf16.xpose.msra.mxu0 0
  %2275 = vmatprep.subr.bf16.mxu0 0
  %2276 = vmatpush1.bf16.xpose.msra.mxu0 0
  %2277 = vmatprep.subr.bf16.mxu0 0
  %2278 = vmatpush1.bf16.xpose.msra.mxu0 0
  %2279 = vmatprep.subr.bf16.mxu0 0
  %2280 = vmatpush1.bf16.xpose.msra.mxu0 %v2263
  %2281 = vmatprep.subr.bf16.mxu0 0
  %2282 = vmatpush2.bf16.xpose.msra.mxu0 0
  %2283 = vmatprep.subr.bf16.mxu0 0
  %2284 = vmatpush2.bf16.xpose.msra.mxu0 0
  %2285 = vmatprep.subr.bf16.mxu0 0
  %2286 = vmatpush2.bf16.xpose.msra.mxu0 0
  %2287 = vmatprep.subr.bf16.mxu0 0
  %2288 = vmatpush2.bf16.xpose.msra.mxu0 0
  %2289 = vmatprep.subr.bf16.mxu0 0
  %2290 = vmatpush2.bf16.xpose.msra.mxu0 0
  %2291 = vmatprep.subr.bf16.mxu0 0
  %2292 = vmatpush2.bf16.xpose.msra.mxu0 0
  %2293 = vmatprep.subr.bf16.mxu0 0
  %2294 = vmatpush2.bf16.xpose.msra.mxu0 0
  %2295 = vmatprep.subr.bf16.mxu0 0
  %2296 = vmatpush2.bf16.xpose.msra.mxu0 0
  %2297 = vmatprep.mubr.bf16.mxu0 0
  %2298 = vmatmul.mubr.bf16.gmra.mxu0 %v2260
  %v2299 = vpop.f32.mrf.mxu0
  %v2300 = vadd.f32 0.0, %v2299
  %v2301 = vpop.f32.mrf.mxu0
  %v2302 = vpop.f32.mrf.mxu0
  %v2303 = vpop.f32.mrf.mxu0
  %2304 = vdwg.mxu0
  %v2305 = vmul.f32 %v2250, 0.25
  %v2306 = vmul.f32 %v2300, 0.25
  %v2307 = vsel %vm60, %v2305, -1e+30
  %v2308 = vsel %vm60, %v2306, -1e+30
  %v2309 = vsel %vm321, %v2307, -inf
  %2310 = vmax.xlane.f32.xlu0 %v2309
  %v2311 = vpop.xlane.xlu0 %2310
  %v2312 = vsel %vm321, %v2308, -inf
  %2313 = vmax.xlane.f32.xlu0 %v2312
  %v2314 = vpop.xlane.xlu0 %2313
  %v2315 = vsub.f32 %v2307, %v2311
  %v2316 = vsub.f32 %v2308, %v2314
  %v2317 = vmul.f32 %v2315, 1.442695
  %v2318 = vpow.pop %v2317
  %v2319 = vmul.f32 %v2316, 1.442695
  %v2320 = vpow.pop %v2319
  %v2321 = vsel %vm321, %v2318, 0.0
  %2322 = vadd.xlane.f32.xlu0 %v2321
  %v2323 = vpop.xlane.xlu0 %2322
  %v2324 = vsel %vm321, %v2320, 0.0
  %2325 = vadd.xlane.f32.xlu0 %v2324
  %v2326 = vpop.xlane.xlu0 %2325
  %v2327 = vrcp.pop %v2323
  %v2328 = vrcp.pop %v2326
  %v2329 = vmul.f32 %v2318, %v2327
  %v2330 = vmul.f32 %v2320, %v2328
  %v2331 = vpack.c.bf16 %v2329, %v2329
  %v2332 = vpack.c.bf16 %v2330, %v2330
  %2333 = vrot.lane.b32.xlu0 %v1759, 96
  %v2334 = vpop.permute.xlu0 %2333
  %v2336 = vsel %vm321, %v2331, 0
  %v2339 = vsel %vm349, %v2334, 0
  %2341 = vmatprep.subr.bf16.mxu0 0
  %2342 = vmatpush1.bf16.msra.mxu0 0
  %2343 = vmatprep.subr.bf16.mxu0 0
  %2344 = vmatpush1.bf16.msra.mxu0 0
  %2345 = vmatprep.subr.bf16.mxu0 0
  %2346 = vmatpush1.bf16.msra.mxu0 0
  %2347 = vmatprep.subr.bf16.mxu0 0
  %2348 = vmatpush1.bf16.msra.mxu0 0
  %2349 = vmatprep.subr.bf16.mxu0 0
  %2350 = vmatpush1.bf16.msra.mxu0 0
  %2351 = vmatprep.subr.bf16.mxu0 0
  %2352 = vmatpush1.bf16.msra.mxu0 0
  %2353 = vmatprep.subr.bf16.mxu0 0
  %2354 = vmatpush1.bf16.msra.mxu0 0
  %2355 = vmatprep.subr.bf16.mxu0 0
  %2356 = vmatpush1.bf16.msra.mxu0 %v2339
  %2357 = vmatprep.subr.bf16.mxu0 0
  %2358 = vmatpush2.bf16.msra.mxu0 0
  %2359 = vmatprep.subr.bf16.mxu0 0
  %2360 = vmatpush2.bf16.msra.mxu0 0
  %2361 = vmatprep.subr.bf16.mxu0 0
  %2362 = vmatpush2.bf16.msra.mxu0 0
  %2363 = vmatprep.subr.bf16.mxu0 0
  %2364 = vmatpush2.bf16.msra.mxu0 0
  %2365 = vmatprep.subr.bf16.mxu0 0
  %2366 = vmatpush2.bf16.msra.mxu0 0
  %2367 = vmatprep.subr.bf16.mxu0 0
  %2368 = vmatpush2.bf16.msra.mxu0 0
  %2369 = vmatprep.subr.bf16.mxu0 0
  %2370 = vmatpush2.bf16.msra.mxu0 0
  %2371 = vmatprep.subr.bf16.mxu0 0
  %2372 = vmatpush2.bf16.msra.mxu0 0
  %2373 = vmatprep.mubr.bf16.mxu0 0
  %2374 = vmatmul.mubr.bf16.gmra.mxu0 %v2336
  %v2375 = vpop.f32.mrf.mxu0
  %v2376 = vadd.f32 0.0, %v2375
  %v2377 = vpop.f32.mrf.mxu0
  %v2378 = vpop.f32.mrf.mxu0
  %v2379 = vpop.f32.mrf.mxu0
  %2380 = vdwg.mxu0
  %2381 = vrot.lane.b32.xlu0 %v1760, 96
  %v2382 = vpop.permute.xlu0 %2381
  %v2384 = vsel %vm321, %v2332, 0
  %v2387 = vsel %vm349, %v2382, 0
  %2389 = vmatprep.subr.bf16.mxu0 0
  %2390 = vmatpush1.bf16.msra.mxu0 0
  %2391 = vmatprep.subr.bf16.mxu0 0
  %2392 = vmatpush1.bf16.msra.mxu0 0
  %2393 = vmatprep.subr.bf16.mxu0 0
  %2394 = vmatpush1.bf16.msra.mxu0 0
  %2395 = vmatprep.subr.bf16.mxu0 0
  %2396 = vmatpush1.bf16.msra.mxu0 0
  %2397 = vmatprep.subr.bf16.mxu0 0
  %2398 = vmatpush1.bf16.msra.mxu0 0
  %2399 = vmatprep.subr.bf16.mxu0 0
  %2400 = vmatpush1.bf16.msra.mxu0 0
  %2401 = vmatprep.subr.bf16.mxu0 0
  %2402 = vmatpush1.bf16.msra.mxu0 0
  %2403 = vmatprep.subr.bf16.mxu0 0
  %2404 = vmatpush1.bf16.msra.mxu0 %v2387
  %2405 = vmatprep.subr.bf16.mxu0 0
  %2406 = vmatpush2.bf16.msra.mxu0 0
  %2407 = vmatprep.subr.bf16.mxu0 0
  %2408 = vmatpush2.bf16.msra.mxu0 0
  %2409 = vmatprep.subr.bf16.mxu0 0
  %2410 = vmatpush2.bf16.msra.mxu0 0
  %2411 = vmatprep.subr.bf16.mxu0 0
  %2412 = vmatpush2.bf16.msra.mxu0 0
  %2413 = vmatprep.subr.bf16.mxu0 0
  %2414 = vmatpush2.bf16.msra.mxu0 0
  %2415 = vmatprep.subr.bf16.mxu0 0
  %2416 = vmatpush2.bf16.msra.mxu0 0
  %2417 = vmatprep.subr.bf16.mxu0 0
  %2418 = vmatpush2.bf16.msra.mxu0 0
  %2419 = vmatprep.subr.bf16.mxu0 0
  %2420 = vmatpush2.bf16.msra.mxu0 0
  %2421 = vmatprep.mubr.bf16.mxu0 0
  %2422 = vmatmul.mubr.bf16.gmra.mxu0 %v2384
  %v2423 = vpop.f32.mrf.mxu0
  %v2424 = vadd.f32 0.0, %v2423
  %v2425 = vpop.f32.mrf.mxu0
  %v2426 = vpop.f32.mrf.mxu0
  %v2427 = vpop.f32.mrf.mxu0
  %2428 = vdwg.mxu0
  %2429 = vrot.lane.b32.xlu0 %v1757, 80
  %v2430 = vpop.permute.xlu0 %2429
  %2431 = vrot.lane.b32.xlu0 %v1757, 16
  %v2432 = vpop.permute.xlu0 %2431
  %v2434 = vsel %vm221, %v2430, 0
  %v2437 = vsel %vm221, %v2432, 0
  %2439 = vmatprep.subr.bf16.mxu0 0
  %2440 = vmatpush1.bf16.xpose.msra.mxu0 0
  %2441 = vmatprep.subr.bf16.mxu0 0
  %2442 = vmatpush1.bf16.xpose.msra.mxu0 0
  %2443 = vmatprep.subr.bf16.mxu0 0
  %2444 = vmatpush1.bf16.xpose.msra.mxu0 0
  %2445 = vmatprep.subr.bf16.mxu0 0
  %2446 = vmatpush1.bf16.xpose.msra.mxu0 0
  %2447 = vmatprep.subr.bf16.mxu0 0
  %2448 = vmatpush1.bf16.xpose.msra.mxu0 0
  %2449 = vmatprep.subr.bf16.mxu0 0
  %2450 = vmatpush1.bf16.xpose.msra.mxu0 0
  %2451 = vmatprep.subr.bf16.mxu0 0
  %2452 = vmatpush1.bf16.xpose.msra.mxu0 0
  %2453 = vmatprep.subr.bf16.mxu0 0
  %2454 = vmatpush1.bf16.xpose.msra.mxu0 %v2437
  %2455 = vmatprep.subr.bf16.mxu0 0
  %2456 = vmatpush2.bf16.xpose.msra.mxu0 0
  %2457 = vmatprep.subr.bf16.mxu0 0
  %2458 = vmatpush2.bf16.xpose.msra.mxu0 0
  %2459 = vmatprep.subr.bf16.mxu0 0
  %2460 = vmatpush2.bf16.xpose.msra.mxu0 0
  %2461 = vmatprep.subr.bf16.mxu0 0
  %2462 = vmatpush2.bf16.xpose.msra.mxu0 0
  %2463 = vmatprep.subr.bf16.mxu0 0
  %2464 = vmatpush2.bf16.xpose.msra.mxu0 0
  %2465 = vmatprep.subr.bf16.mxu0 0
  %2466 = vmatpush2.bf16.xpose.msra.mxu0 0
  %2467 = vmatprep.subr.bf16.mxu0 0
  %2468 = vmatpush2.bf16.xpose.msra.mxu0 0
  %2469 = vmatprep.subr.bf16.mxu0 0
  %2470 = vmatpush2.bf16.xpose.msra.mxu0 0
  %2471 = vmatprep.mubr.bf16.mxu0 0
  %2472 = vmatmul.mubr.bf16.gmra.mxu0 %v2434
  %v2473 = vpop.f32.mrf.mxu0
  %v2474 = vadd.f32 0.0, %v2473
  %v2475 = vpop.f32.mrf.mxu0
  %v2476 = vpop.f32.mrf.mxu0
  %v2477 = vpop.f32.mrf.mxu0
  %2478 = vdwg.mxu0
  %2479 = vrot.lane.b32.xlu0 %v1758, 80
  %v2480 = vpop.permute.xlu0 %2479
  %2481 = vrot.lane.b32.xlu0 %v1758, 16
  %v2482 = vpop.permute.xlu0 %2481
  %v2484 = vsel %vm221, %v2480, 0
  %v2487 = vsel %vm221, %v2482, 0
  %2489 = vmatprep.subr.bf16.mxu0 0
  %2490 = vmatpush1.bf16.xpose.msra.mxu0 0
  %2491 = vmatprep.subr.bf16.mxu0 0
  %2492 = vmatpush1.bf16.xpose.msra.mxu0 0
  %2493 = vmatprep.subr.bf16.mxu0 0
  %2494 = vmatpush1.bf16.xpose.msra.mxu0 0
  %2495 = vmatprep.subr.bf16.mxu0 0
  %2496 = vmatpush1.bf16.xpose.msra.mxu0 0
  %2497 = vmatprep.subr.bf16.mxu0 0
  %2498 = vmatpush1.bf16.xpose.msra.mxu0 0
  %2499 = vmatprep.subr.bf16.mxu0 0
  %2500 = vmatpush1.bf16.xpose.msra.mxu0 0
  %2501 = vmatprep.subr.bf16.mxu0 0
  %2502 = vmatpush1.bf16.xpose.msra.mxu0 0
  %2503 = vmatprep.subr.bf16.mxu0 0
  %2504 = vmatpush1.bf16.xpose.msra.mxu0 %v2487
  %2505 = vmatprep.subr.bf16.mxu0 0
  %2506 = vmatpush2.bf16.xpose.msra.mxu0 0
  %2507 = vmatprep.subr.bf16.mxu0 0
  %2508 = vmatpush2.bf16.xpose.msra.mxu0 0
  %2509 = vmatprep.subr.bf16.mxu0 0
  %2510 = vmatpush2.bf16.xpose.msra.mxu0 0
  %2511 = vmatprep.subr.bf16.mxu0 0
  %2512 = vmatpush2.bf16.xpose.msra.mxu0 0
  %2513 = vmatprep.subr.bf16.mxu0 0
  %2514 = vmatpush2.bf16.xpose.msra.mxu0 0
  %2515 = vmatprep.subr.bf16.mxu0 0
  %2516 = vmatpush2.bf16.xpose.msra.mxu0 0
  %2517 = vmatprep.subr.bf16.mxu0 0
  %2518 = vmatpush2.bf16.xpose.msra.mxu0 0
  %2519 = vmatprep.subr.bf16.mxu0 0
  %2520 = vmatpush2.bf16.xpose.msra.mxu0 0
  %2521 = vmatprep.mubr.bf16.mxu0 0
  %2522 = vmatmul.mubr.bf16.gmra.mxu0 %v2484
  %v2523 = vpop.f32.mrf.mxu0
  %v2524 = vadd.f32 0.0, %v2523
  %v2525 = vpop.f32.mrf.mxu0
  %v2526 = vpop.f32.mrf.mxu0
  %v2527 = vpop.f32.mrf.mxu0
  %2528 = vdwg.mxu0
  %v2529 = vmul.f32 %v2474, 0.25
  %v2530 = vmul.f32 %v2524, 0.25
  %v2531 = vsel %vm60, %v2529, -1e+30
  %v2532 = vsel %vm60, %v2530, -1e+30
  %v2533 = vsel %vm321, %v2531, -inf
  %2534 = vmax.xlane.f32.xlu0 %v2533
  %v2535 = vpop.xlane.xlu0 %2534
  %v2536 = vsel %vm321, %v2532, -inf
  %2537 = vmax.xlane.f32.xlu0 %v2536
  %v2538 = vpop.xlane.xlu0 %2537
  %v2539 = vsub.f32 %v2531, %v2535
  %v2540 = vsub.f32 %v2532, %v2538
  %v2541 = vmul.f32 %v2539, 1.442695
  %v2542 = vpow.pop %v2541
  %v2543 = vmul.f32 %v2540, 1.442695
  %v2544 = vpow.pop %v2543
  %v2545 = vsel %vm321, %v2542, 0.0
  %2546 = vadd.xlane.f32.xlu0 %v2545
  %v2547 = vpop.xlane.xlu0 %2546
  %v2548 = vsel %vm321, %v2544, 0.0
  %2549 = vadd.xlane.f32.xlu0 %v2548
  %v2550 = vpop.xlane.xlu0 %2549
  %v2551 = vrcp.pop %v2547
  %v2552 = vrcp.pop %v2550
  %v2553 = vmul.f32 %v2542, %v2551
  %v2554 = vmul.f32 %v2544, %v2552
  %v2555 = vpack.c.bf16 %v2553, %v2553
  %v2556 = vpack.c.bf16 %v2554, %v2554
  %2557 = vrot.lane.b32.xlu0 %v1759, 80
  %v2558 = vpop.permute.xlu0 %2557
  %v2560 = vsel %vm321, %v2555, 0
  %v2563 = vsel %vm349, %v2558, 0
  %2565 = vmatprep.subr.bf16.mxu0 0
  %2566 = vmatpush1.bf16.msra.mxu0 0
  %2567 = vmatprep.subr.bf16.mxu0 0
  %2568 = vmatpush1.bf16.msra.mxu0 0
  %2569 = vmatprep.subr.bf16.mxu0 0
  %2570 = vmatpush1.bf16.msra.mxu0 0
  %2571 = vmatprep.subr.bf16.mxu0 0
  %2572 = vmatpush1.bf16.msra.mxu0 0
  %2573 = vmatprep.subr.bf16.mxu0 0
  %2574 = vmatpush1.bf16.msra.mxu0 0
  %2575 = vmatprep.subr.bf16.mxu0 0
  %2576 = vmatpush1.bf16.msra.mxu0 0
  %2577 = vmatprep.subr.bf16.mxu0 0
  %2578 = vmatpush1.bf16.msra.mxu0 0
  %2579 = vmatprep.subr.bf16.mxu0 0
  %2580 = vmatpush1.bf16.msra.mxu0 %v2563
  %2581 = vmatprep.subr.bf16.mxu0 0
  %2582 = vmatpush2.bf16.msra.mxu0 0
  %2583 = vmatprep.subr.bf16.mxu0 0
  %2584 = vmatpush2.bf16.msra.mxu0 0
  %2585 = vmatprep.subr.bf16.mxu0 0
  %2586 = vmatpush2.bf16.msra.mxu0 0
  %2587 = vmatprep.subr.bf16.mxu0 0
  %2588 = vmatpush2.bf16.msra.mxu0 0
  %2589 = vmatprep.subr.bf16.mxu0 0
  %2590 = vmatpush2.bf16.msra.mxu0 0
  %2591 = vmatprep.subr.bf16.mxu0 0
  %2592 = vmatpush2.bf16.msra.mxu0 0
  %2593 = vmatprep.subr.bf16.mxu0 0
  %2594 = vmatpush2.bf16.msra.mxu0 0
  %2595 = vmatprep.subr.bf16.mxu0 0
  %2596 = vmatpush2.bf16.msra.mxu0 0
  %2597 = vmatprep.mubr.bf16.mxu0 0
  %2598 = vmatmul.mubr.bf16.gmra.mxu0 %v2560
  %v2599 = vpop.f32.mrf.mxu0
  %v2600 = vadd.f32 0.0, %v2599
  %v2601 = vpop.f32.mrf.mxu0
  %v2602 = vpop.f32.mrf.mxu0
  %v2603 = vpop.f32.mrf.mxu0
  %2604 = vdwg.mxu0
  %2605 = vrot.lane.b32.xlu0 %v1760, 80
  %v2606 = vpop.permute.xlu0 %2605
  %v2608 = vsel %vm321, %v2556, 0
  %v2611 = vsel %vm349, %v2606, 0
  %2613 = vmatprep.subr.bf16.mxu0 0
  %2614 = vmatpush1.bf16.msra.mxu0 0
  %2615 = vmatprep.subr.bf16.mxu0 0
  %2616 = vmatpush1.bf16.msra.mxu0 0
  %2617 = vmatprep.subr.bf16.mxu0 0
  %2618 = vmatpush1.bf16.msra.mxu0 0
  %2619 = vmatprep.subr.bf16.mxu0 0
  %2620 = vmatpush1.bf16.msra.mxu0 0
  %2621 = vmatprep.subr.bf16.mxu0 0
  %2622 = vmatpush1.bf16.msra.mxu0 0
  %2623 = vmatprep.subr.bf16.mxu0 0
  %2624 = vmatpush1.bf16.msra.mxu0 0
  %2625 = vmatprep.subr.bf16.mxu0 0
  %2626 = vmatpush1.bf16.msra.mxu0 0
  %2627 = vmatprep.subr.bf16.mxu0 0
  %2628 = vmatpush1.bf16.msra.mxu0 %v2611
  %2629 = vmatprep.subr.bf16.mxu0 0
  %2630 = vmatpush2.bf16.msra.mxu0 0
  %2631 = vmatprep.subr.bf16.mxu0 0
  %2632 = vmatpush2.bf16.msra.mxu0 0
  %2633 = vmatprep.subr.bf16.mxu0 0
  %2634 = vmatpush2.bf16.msra.mxu0 0
  %2635 = vmatprep.subr.bf16.mxu0 0
  %2636 = vmatpush2.bf16.msra.mxu0 0
  %2637 = vmatprep.subr.bf16.mxu0 0
  %2638 = vmatpush2.bf16.msra.mxu0 0
  %2639 = vmatprep.subr.bf16.mxu0 0
  %2640 = vmatpush2.bf16.msra.mxu0 0
  %2641 = vmatprep.subr.bf16.mxu0 0
  %2642 = vmatpush2.bf16.msra.mxu0 0
  %2643 = vmatprep.subr.bf16.mxu0 0
  %2644 = vmatpush2.bf16.msra.mxu0 0
  %2645 = vmatprep.mubr.bf16.mxu0 0
  %2646 = vmatmul.mubr.bf16.gmra.mxu0 %v2608
  %v2647 = vpop.f32.mrf.mxu0
  %v2648 = vadd.f32 0.0, %v2647
  %v2649 = vpop.f32.mrf.mxu0
  %v2650 = vpop.f32.mrf.mxu0
  %v2651 = vpop.f32.mrf.mxu0
  %2652 = vdwg.mxu0
  %2655 = vrot.lane.b32.xlu0 %v2151, 16
  %v2656 = vpop.permute.xlu0 %2655
  %2657 = vrot.lane.b32.xlu0 %v2200, 16
  %v2658 = vpop.permute.xlu0 %2657
  %2663 = vrot.lane.b32.xlu0 %v2376, 32
  %v2664 = vpop.permute.xlu0 %2663
  %2665 = vrot.lane.b32.xlu0 %v2424, 32
  %v2666 = vpop.permute.xlu0 %2665
  %2671 = vrot.lane.b32.xlu0 %v2600, 48
  %v2672 = vpop.permute.xlu0 %2671
  %2673 = vrot.lane.b32.xlu0 %v2648, 48
  %v2674 = vpop.permute.xlu0 %2673
  %v2677 = vsel %vm221, %v1928, %v2656
  %v2678 = vsel %vm221, %v1974, %v2658
  %v2679 = vsel %vm1139, %v2677, %v2664
  %v2680 = vsel %vm1139, %v2678, %v2666
  %v2681 = vsel %vm1142, %v2679, %v2672
  %v2682 = vsel %vm1142, %v2680, %v2674
  %v2683 = vpack.c.bf16 %v2682, %v2681
  %s2684 = scalar_lea.vmem %s5, 32
  %v2685 = vld [vmem:[%s2684] sm:$0xf]
  %v2686 = vld [vmem:[%s2684 + $0x4] sm:$0xf]
  %v2687 = vld [vmem:[%s2684 + $0x8] sm:$0xf]
  %v2688 = vld [vmem:[%s2684 + $0xc] sm:$0xf]
  %v2689 = vld [vmem:[%s2684 + $0x10] sm:$0xf]
  %v2690 = vld [vmem:[%s2684 + $0x14] sm:$0xf]
  %v2691 = vld [vmem:[%s2684 + $0x18] sm:$0xf]
  %v2692 = vld [vmem:[%s2684 + $0x1c] sm:$0xf]
  %v2701 = vunpack.c.l.b16 %v2685
  %v2702 = vunpack.c.l.b16 %v2686
  %v2703 = vunpack.c.l.b16 %v2687
  %v2704 = vunpack.c.l.b16 %v2688
  %v2705 = vunpack.c.l.b16 %v2689
  %v2706 = vunpack.c.l.b16 %v2690
  %v2707 = vunpack.c.l.b16 %v2691
  %v2708 = vunpack.c.l.b16 %v2692
  %v2709 = vpack.c.b16 %v2702, %v2701
  %v2710 = vpack.c.b16 %v2704, %v2703
  %v2711 = vpack.c.b16 %v2706, %v2705
  %v2712 = vpack.c.b16 %v2708, %v2707
  %v2718 = vsel %vm63, %v2683, 0
  %2720 = vmatprep.subr.bf16.mxu0 0
  %2721 = vmatpush1.bf16.msra.mxu0 0
  %2722 = vmatprep.subr.bf16.mxu0 0
  %2723 = vmatpush1.bf16.msra.mxu0 0
  %2724 = vmatprep.subr.bf16.mxu0 0
  %2725 = vmatpush1.bf16.msra.mxu0 0
  %2726 = vmatprep.subr.bf16.mxu0 0
  %2727 = vmatpush1.bf16.msra.mxu0 0
  %2728 = vmatprep.subr.bf16.mxu0 0
  %2729 = vmatpush1.bf16.msra.mxu0 %v2712
  %2730 = vmatprep.subr.bf16.mxu0 0
  %2731 = vmatpush1.bf16.msra.mxu0 %v2711
  %2732 = vmatprep.subr.bf16.mxu0 0
  %2733 = vmatpush1.bf16.msra.mxu0 %v2710
  %2734 = vmatprep.subr.bf16.mxu0 0
  %2735 = vmatpush1.bf16.msra.mxu0 %v2709
  %2736 = vmatprep.subr.bf16.mxu0 0
  %2737 = vmatpush2.bf16.msra.mxu0 0
  %2738 = vmatprep.subr.bf16.mxu0 0
  %2739 = vmatpush2.bf16.msra.mxu0 0
  %2740 = vmatprep.subr.bf16.mxu0 0
  %2741 = vmatpush2.bf16.msra.mxu0 0
  %2742 = vmatprep.subr.bf16.mxu0 0
  %2743 = vmatpush2.bf16.msra.mxu0 0
  %2744 = vmatprep.subr.bf16.mxu0 0
  %2745 = vmatpush2.bf16.msra.mxu0 0
  %2746 = vmatprep.subr.bf16.mxu0 0
  %2747 = vmatpush2.bf16.msra.mxu0 0
  %2748 = vmatprep.subr.bf16.mxu0 0
  %2749 = vmatpush2.bf16.msra.mxu0 0
  %2750 = vmatprep.subr.bf16.mxu0 0
  %2751 = vmatpush2.bf16.msra.mxu0 0
  %2752 = vmatprep.mubr.bf16.mxu0 0
  %2753 = vmatmul.mubr.bf16.gmra.mxu0 %v2718
  %v2754 = vpop.f32.mrf.mxu0
  %v2755 = vadd.f32 0.0, %v2754
  %v2756 = vpop.f32.mrf.mxu0
  %v2757 = vpop.f32.mrf.mxu0
  %v2758 = vadd.f32 0.0, %v2757
  %v2759 = vpop.f32.mrf.mxu0
  %2760 = vdwg.mxu0
  %v2761 = vadd.f32 %v1600, %v2755
  %v2762 = vadd.f32 %v1601, %v2758
  %s2763 = scalar_lea.vmem %s6, 1
  %v2764 = vld [vmem:[%s2763] sm:$0x1]
  %v2766 = vlaneseq
  %v2767 = vshrl.u32 %v2766, 7
  %v2768 = vsub.s32 0, %v2767
  %v2769 = vrot.slane %v2764, %v2768
  %v2771 = vadd.f32 %v2761, %v2769
  %v2772 = vadd.f32 %v2762, %v2769
  %s2773 = scalar_lea.vmem %s7, 1
  %v2774 = vld [vmem:[%s2773] sm:$0x1]
  %s2775 = scalar_lea.vmem %s8, 1
  %v2776 = vld [vmem:[%s2775] sm:$0x1]
  %v2777 = vsel %vm63, %v2771, 0.0
  %2778 = vadd.xlane.f32.xlu0 %v2777
  %v2779 = vpop.xlane.xlu0 %2778
  %v2780 = vsel %vm63, %v2772, 0.0
  %2781 = vadd.xlane.f32.xlu0 %v2780
  %v2782 = vpop.xlane.xlu0 %2781
  %v2783 = vmul.f32 %v2779, %v70
  %v2784 = vmul.f32 %v2782, %v70
  %v2785 = vsub.f32 %v2771, %v2783
  %v2786 = vsub.f32 %v2772, %v2784
  %v2787 = vmul.f32 %v2785, %v2785
  %v2788 = vmul.f32 %v2786, %v2786
  %v2789 = vsel %vm63, %v2787, 0.0
  %2790 = vadd.xlane.f32.xlu0 %v2789
  %v2791 = vpop.xlane.xlu0 %2790
  %v2792 = vsel %vm63, %v2788, 0.0
  %2793 = vadd.xlane.f32.xlu0 %v2792
  %v2794 = vpop.xlane.xlu0 %2793
  %v2795 = vmul.f32 %v2791, %v70
  %v2796 = vmul.f32 %v2794, %v70
  %v2797 = vadd.f32 %v2795, 1e-05
  %v2798 = vadd.f32 %v2796, 1e-05
  %v2799 = vrsqrt.pop %v2797
  %v2800 = vrsqrt.pop %v2798
  %v2801 = vmul.f32 %v2785, %v2799
  %v2802 = vmul.f32 %v2786, %v2800
  %v2804 = vlaneseq
  %v2805 = vshrl.u32 %v2804, 7
  %v2806 = vsub.s32 0, %v2805
  %v2807 = vrot.slane %v2774, %v2806
  %v2809 = vmul.f32 %v2801, %v2807
  %v2810 = vmul.f32 %v2802, %v2807
  %v2812 = vlaneseq
  %v2813 = vshrl.u32 %v2812, 7
  %v2814 = vsub.s32 0, %v2813
  %v2815 = vrot.slane %v2776, %v2814
  %v2817 = vadd.f32 %v2809, %v2815
  %v2818 = vadd.f32 %v2810, %v2815
  %v2819 = vpack.c.bf16 %v2818, %v2817
  %s2820 = scalar_lea.vmem %s9, 64
  %v2821 = vld [vmem:[%s2820] sm:$0xff]
  %v2822 = vld [vmem:[%s2820 + $0x8] sm:$0xff]
  %v2823 = vld [vmem:[%s2820 + $0x10] sm:$0xff]
  %v2824 = vld [vmem:[%s2820 + $0x18] sm:$0xff]
  %v2825 = vld [vmem:[%s2820 + $0x20] sm:$0xff]
  %v2826 = vld [vmem:[%s2820 + $0x28] sm:$0xff]
  %v2827 = vld [vmem:[%s2820 + $0x30] sm:$0xff]
  %v2828 = vld [vmem:[%s2820 + $0x38] sm:$0xff]
  %s2829 = scalar_lea.vmem %s10, 2
  %v2830 = vld [vmem:[%s2829] sm:$0x3]
  %v2832 = vlaneseq
  %v2833 = vshrl.u32 %v2832, 7
  %v2834 = vsub.s32 0, %v2833
  %v2835 = vrot.slane %v2830, %v2834
  %v2836 = vlaneseq
  %v2837 = vshrl.u32 %v2836, 7
  %v2838 = vsub.s32 1, %v2837
  %v2839 = vrot.slane %v2830, %v2838
  %v2850 = vunpack.c.l.b16 %v2821
  %v2851 = vunpack.c.h.b16 %v2821
  %v2852 = vunpack.c.l.b16 %v2822
  %v2853 = vunpack.c.h.b16 %v2822
  %v2854 = vunpack.c.l.b16 %v2823
  %v2855 = vunpack.c.h.b16 %v2823
  %v2856 = vunpack.c.l.b16 %v2824
  %v2857 = vunpack.c.h.b16 %v2824
  %v2858 = vunpack.c.l.b16 %v2825
  %v2859 = vunpack.c.h.b16 %v2825
  %v2860 = vunpack.c.l.b16 %v2826
  %v2861 = vunpack.c.h.b16 %v2826
  %v2862 = vunpack.c.l.b16 %v2827
  %v2863 = vunpack.c.h.b16 %v2827
  %v2864 = vunpack.c.l.b16 %v2828
  %v2865 = vunpack.c.h.b16 %v2828
  %v2866 = vpack.c.b16 %v2852, %v2850
  %v2867 = vpack.c.b16 %v2853, %v2851
  %v2868 = vpack.c.b16 %v2856, %v2854
  %v2869 = vpack.c.b16 %v2857, %v2855
  %v2870 = vpack.c.b16 %v2860, %v2858
  %v2871 = vpack.c.b16 %v2861, %v2859
  %v2872 = vpack.c.b16 %v2864, %v2862
  %v2873 = vpack.c.b16 %v2865, %v2863
  %v2883 = vsel %vm63, %v2819, 0
  %2885 = vmatprep.subr.bf16.mxu0 0
  %2886 = vmatpush1.bf16.msra.mxu0 0
  %2887 = vmatprep.subr.bf16.mxu0 0
  %2888 = vmatpush1.bf16.msra.mxu0 0
  %2889 = vmatprep.subr.bf16.mxu0 0
  %2890 = vmatpush1.bf16.msra.mxu0 0
  %2891 = vmatprep.subr.bf16.mxu0 0
  %2892 = vmatpush1.bf16.msra.mxu0 0
  %2893 = vmatprep.subr.bf16.mxu0 %v2873
  %2894 = vmatpush1.bf16.msra.mxu0 %v2872
  %2895 = vmatprep.subr.bf16.mxu0 %v2871
  %2896 = vmatpush1.bf16.msra.mxu0 %v2870
  %2897 = vmatprep.subr.bf16.mxu0 %v2869
  %2898 = vmatpush1.bf16.msra.mxu0 %v2868
  %2899 = vmatprep.subr.bf16.mxu0 %v2867
  %2900 = vmatpush1.bf16.msra.mxu0 %v2866
  %2901 = vmatprep.subr.bf16.mxu0 0
  %2902 = vmatpush2.bf16.msra.mxu0 0
  %2903 = vmatprep.subr.bf16.mxu0 0
  %2904 = vmatpush2.bf16.msra.mxu0 0
  %2905 = vmatprep.subr.bf16.mxu0 0
  %2906 = vmatpush2.bf16.msra.mxu0 0
  %2907 = vmatprep.subr.bf16.mxu0 0
  %2908 = vmatpush2.bf16.msra.mxu0 0
  %2909 = vmatprep.subr.bf16.mxu0 0
  %2910 = vmatpush2.bf16.msra.mxu0 0
  %2911 = vmatprep.subr.bf16.mxu0 0
  %2912 = vmatpush2.bf16.msra.mxu0 0
  %2913 = vmatprep.subr.bf16.mxu0 0
  %2914 = vmatpush2.bf16.msra.mxu0 0
  %2915 = vmatprep.subr.bf16.mxu0 0
  %2916 = vmatpush2.bf16.msra.mxu0 0
  %2917 = vmatprep.mubr.bf16.mxu0 0
  %2918 = vmatmul.mubr.bf16.gmra.mxu0 %v2883
  %v2919 = vpop.f32.mrf.mxu0
  %v2920 = vadd.f32 %v2835, %v2919
  %v2921 = vpop.f32.mrf.mxu0
  %v2922 = vadd.f32 %v2839, %v2921
  %v2923 = vpop.f32.mrf.mxu0
  %v2924 = vadd.f32 %v2835, %v2923
  %v2925 = vpop.f32.mrf.mxu0
  %v2926 = vadd.f32 %v2839, %v2925
  %2927 = vdwg.mxu0
  %v2928 = vmul.f32 %v2920, 0.5
  %v2929 = vmul.f32 %v2922, 0.5
  %v2930 = vmul.f32 %v2924, 0.5
  %v2931 = vmul.f32 %v2926, 0.5
  %v2932 = vmul.f32 %v2920, 0.044715
  %v2933 = vmul.f32 %v2922, 0.044715
  %v2934 = vmul.f32 %v2924, 0.044715
  %v2935 = vmul.f32 %v2926, 0.044715
  %v2936 = vmul.f32 %v2932, %v2920
  %v2937 = vmul.f32 %v2933, %v2922
  %v2938 = vmul.f32 %v2934, %v2924
  %v2939 = vmul.f32 %v2935, %v2926
  %v2940 = vmul.f32 %v2936, %v2920
  %v2941 = vmul.f32 %v2937, %v2922
  %v2942 = vmul.f32 %v2938, %v2924
  %v2943 = vmul.f32 %v2939, %v2926
  %v2944 = vadd.f32 %v2920, %v2940
  %v2945 = vadd.f32 %v2922, %v2941
  %v2946 = vadd.f32 %v2924, %v2942
  %v2947 = vadd.f32 %v2926, %v2943
  %v2948 = vmul.f32 %v2944, 0.7978846
  %v2949 = vmul.f32 %v2945, 0.7978846
  %v2950 = vmul.f32 %v2946, 0.7978846
  %v2951 = vmul.f32 %v2947, 0.7978846
  %v2952 = vtanh.pop %v2948
  %v2953 = vtanh.pop %v2949
  %v2954 = vtanh.pop %v2950
  %v2955 = vtanh.pop %v2951
  %v2956 = vadd.f32 %v2952, 1.0
  %v2957 = vadd.f32 %v2953, 1.0
  %v2958 = vadd.f32 %v2954, 1.0
  %v2959 = vadd.f32 %v2955, 1.0
  %v2960 = vmul.f32 %v2928, %v2956
  %v2961 = vmul.f32 %v2929, %v2957
  %v2962 = vmul.f32 %v2930, %v2958
  %v2963 = vmul.f32 %v2931, %v2959
  %v2964 = vpack.c.bf16 %v2962, %v2960
  %v2965 = vpack.c.bf16 %v2963, %v2961
  %s2966 = scalar_lea.vmem %s11, 128
  %v2967 = vld [vmem:[%s2966] sm:$0xf]
  %v2968 = vld [vmem:[%s2966 + $0x4] sm:$0xf]
  %v2969 = vld [vmem:[%s2966 + $0x8] sm:$0xf]
  %v2970 = vld [vmem:[%s2966 + $0xc] sm:$0xf]
  %v2971 = vld [vmem:[%s2966 + $0x10] sm:$0xf]
  %v2972 = vld [vmem:[%s2966 + $0x14] sm:$0xf]
  %v2973 = vld [vmem:[%s2966 + $0x18] sm:$0xf]
  %v2974 = vld [vmem:[%s2966 + $0x1c] sm:$0xf]
  %v2975 = vld [vmem:[%s2966 + $0x20] sm:$0xf]
  %v2976 = vld [vmem:[%s2966 + $0x24] sm:$0xf]
  %v2977 = vld [vmem:[%s2966 + $0x28] sm:$0xf]
  %v2978 = vld [vmem:[%s2966 + $0x2c] sm:$0xf]
  %v2979 = vld [vmem:[%s2966 + $0x30] sm:$0xf]
  %v2980 = vld [vmem:[%s2966 + $0x34] sm:$0xf]
  %v2981 = vld [vmem:[%s2966 + $0x38] sm:$0xf]
  %v2982 = vld [vmem:[%s2966 + $0x3c] sm:$0xf]
  %v2983 = vld [vmem:[%s2966 + $0x40] sm:$0xf]
  %v2984 = vld [vmem:[%s2966 + $0x44] sm:$0xf]
  %v2985 = vld [vmem:[%s2966 + $0x48] sm:$0xf]
  %v2986 = vld [vmem:[%s2966 + $0x4c] sm:$0xf]
  %v2987 = vld [vmem:[%s2966 + $0x50] sm:$0xf]
  %v2988 = vld [vmem:[%s2966 + $0x54] sm:$0xf]
  %v2989 = vld [vmem:[%s2966 + $0x58] sm:$0xf]
  %v2990 = vld [vmem:[%s2966 + $0x5c] sm:$0xf]
  %v2991 = vld [vmem:[%s2966 + $0x60] sm:$0xf]
  %v2992 = vld [vmem:[%s2966 + $0x64] sm:$0xf]
  %v2993 = vld [vmem:[%s2966 + $0x68] sm:$0xf]
  %v2994 = vld [vmem:[%s2966 + $0x6c] sm:$0xf]
  %v2995 = vld [vmem:[%s2966 + $0x70] sm:$0xf]
  %v2996 = vld [vmem:[%s2966 + $0x74] sm:$0xf]
  %v2997 = vld [vmem:[%s2966 + $0x78] sm:$0xf]
  %v2998 = vld [vmem:[%s2966 + $0x7c] sm:$0xf]
  %v3031 = vunpack.c.l.b16 %v2967
  %v3032 = vunpack.c.l.b16 %v2968
  %v3033 = vunpack.c.l.b16 %v2969
  %v3034 = vunpack.c.l.b16 %v2970
  %v3035 = vunpack.c.l.b16 %v2971
  %v3036 = vunpack.c.l.b16 %v2972
  %v3037 = vunpack.c.l.b16 %v2973
  %v3038 = vunpack.c.l.b16 %v2974
  %v3039 = vunpack.c.l.b16 %v2975
  %v3040 = vunpack.c.l.b16 %v2976
  %v3041 = vunpack.c.l.b16 %v2977
  %v3042 = vunpack.c.l.b16 %v2978
  %v3043 = vunpack.c.l.b16 %v2979
  %v3044 = vunpack.c.l.b16 %v2980
  %v3045 = vunpack.c.l.b16 %v2981
  %v3046 = vunpack.c.l.b16 %v2982
  %v3047 = vunpack.c.l.b16 %v2983
  %v3048 = vunpack.c.l.b16 %v2984
  %v3049 = vunpack.c.l.b16 %v2985
  %v3050 = vunpack.c.l.b16 %v2986
  %v3051 = vunpack.c.l.b16 %v2987
  %v3052 = vunpack.c.l.b16 %v2988
  %v3053 = vunpack.c.l.b16 %v2989
  %v3054 = vunpack.c.l.b16 %v2990
  %v3055 = vunpack.c.l.b16 %v2991
  %v3056 = vunpack.c.l.b16 %v2992
  %v3057 = vunpack.c.l.b16 %v2993
  %v3058 = vunpack.c.l.b16 %v2994
  %v3059 = vunpack.c.l.b16 %v2995
  %v3060 = vunpack.c.l.b16 %v2996
  %v3061 = vunpack.c.l.b16 %v2997
  %v3062 = vunpack.c.l.b16 %v2998
  %v3063 = vpack.c.b16 %v3032, %v3031
  %v3064 = vpack.c.b16 %v3034, %v3033
  %v3065 = vpack.c.b16 %v3036, %v3035
  %v3066 = vpack.c.b16 %v3038, %v3037
  %v3067 = vpack.c.b16 %v3040, %v3039
  %v3068 = vpack.c.b16 %v3042, %v3041
  %v3069 = vpack.c.b16 %v3044, %v3043
  %v3070 = vpack.c.b16 %v3046, %v3045
  %v3071 = vpack.c.b16 %v3048, %v3047
  %v3072 = vpack.c.b16 %v3050, %v3049
  %v3073 = vpack.c.b16 %v3052, %v3051
  %v3074 = vpack.c.b16 %v3054, %v3053
  %v3075 = vpack.c.b16 %v3056, %v3055
  %v3076 = vpack.c.b16 %v3058, %v3057
  %v3077 = vpack.c.b16 %v3060, %v3059
  %v3078 = vpack.c.b16 %v3062, %v3061
  %3095 = vmatprep.subr.bf16.mxu0 0
  %3096 = vmatpush1.bf16.msra.mxu0 %v3070
  %3097 = vmatprep.subr.bf16.mxu0 0
  %3098 = vmatpush1.bf16.msra.mxu0 %v3069
  %3099 = vmatprep.subr.bf16.mxu0 0
  %3100 = vmatpush1.bf16.msra.mxu0 %v3068
  %3101 = vmatprep.subr.bf16.mxu0 0
  %3102 = vmatpush1.bf16.msra.mxu0 %v3067
  %3103 = vmatprep.subr.bf16.mxu0 0
  %3104 = vmatpush1.bf16.msra.mxu0 %v3066
  %3105 = vmatprep.subr.bf16.mxu0 0
  %3106 = vmatpush1.bf16.msra.mxu0 %v3065
  %3107 = vmatprep.subr.bf16.mxu0 0
  %3108 = vmatpush1.bf16.msra.mxu0 %v3064
  %3109 = vmatprep.subr.bf16.mxu0 0
  %3110 = vmatpush1.bf16.msra.mxu0 %v3063
  %3111 = vmatprep.subr.bf16.mxu0 0
  %3112 = vmatpush2.bf16.msra.mxu0 %v3078
  %3113 = vmatprep.subr.bf16.mxu0 0
  %3114 = vmatpush2.bf16.msra.mxu0 %v3077
  %3115 = vmatprep.subr.bf16.mxu0 0
  %3116 = vmatpush2.bf16.msra.mxu0 %v3076
  %3117 = vmatprep.subr.bf16.mxu0 0
  %3118 = vmatpush2.bf16.msra.mxu0 %v3075
  %3119 = vmatprep.subr.bf16.mxu0 0
  %3120 = vmatpush2.bf16.msra.mxu0 %v3074
  %3121 = vmatprep.subr.bf16.mxu0 0
  %3122 = vmatpush2.bf16.msra.mxu0 %v3073
  %3123 = vmatprep.subr.bf16.mxu0 0
  %3124 = vmatpush2.bf16.msra.mxu0 %v3072
  %3125 = vmatprep.subr.bf16.mxu0 0
  %3126 = vmatpush2.bf16.msra.mxu0 %v3071
  %3127 = vmatprep.mubr.bf16.mxu0 %v2965
  %3128 = vmatmul.mubr.bf16.gmra.mxu0 %v2964
  %v3129 = vpop.f32.mrf.mxu0
  %v3130 = vadd.f32 0.0, %v3129
  %v3131 = vpop.f32.mrf.mxu0
  %v3132 = vpop.f32.mrf.mxu0
  %v3133 = vadd.f32 0.0, %v3132
  %v3134 = vpop.f32.mrf.mxu0
  %3135 = vdwg.mxu0
  %v3136 = vadd.f32 %v2771, %v3130
  %v3137 = vadd.f32 %v2772, %v3133
  %s3138 = scalar_lea.vmem %s12, 1
  %v3139 = vld [vmem:[%s3138] sm:$0x1]
  %v3141 = vlaneseq
  %v3142 = vshrl.u32 %v3141, 7
  %v3143 = vsub.s32 0, %v3142
  %v3144 = vrot.slane %v3139, %v3143
  %v3146 = vadd.f32 %v3136, %v3144
  %v3147 = vadd.f32 %v3137, %v3144
  %v3148 = vld [vmem:[%s13] sm:$0x1]
  %v3149 = vld [vmem:[%s14] sm:$0x1]
  %v3150 = vsel %vm63, %v3146, 0.0
  %3151 = vadd.xlane.f32.xlu0 %v3150
  %v3152 = vpop.xlane.xlu0 %3151
  %v3153 = vsel %vm63, %v3147, 0.0
  %3154 = vadd.xlane.f32.xlu0 %v3153
  %v3155 = vpop.xlane.xlu0 %3154
  %v3156 = vmul.f32 %v3152, %v70
  %v3157 = vmul.f32 %v3155, %v70
  %v3158 = vsub.f32 %v3146, %v3156
  %v3159 = vsub.f32 %v3147, %v3157
  %v3160 = vmul.f32 %v3158, %v3158
  %v3161 = vmul.f32 %v3159, %v3159
  %v3162 = vsel %vm63, %v3160, 0.0
  %3163 = vadd.xlane.f32.xlu0 %v3162
  %v3164 = vpop.xlane.xlu0 %3163
  %v3165 = vsel %vm63, %v3161, 0.0
  %3166 = vadd.xlane.f32.xlu0 %v3165
  %v3167 = vpop.xlane.xlu0 %3166
  %v3168 = vmul.f32 %v3164, %v70
  %v3169 = vmul.f32 %v3167, %v70
  %v3170 = vadd.f32 %v3168, 1e-05
  %v3171 = vadd.f32 %v3169, 1e-05
  %v3172 = vrsqrt.pop %v3170
  %v3173 = vrsqrt.pop %v3171
  %v3174 = vmul.f32 %v3158, %v3172
  %v3175 = vmul.f32 %v3159, %v3173
  %v3177 = vlaneseq
  %v3178 = vshrl.u32 %v3177, 7
  %v3179 = vsub.s32 0, %v3178
  %v3180 = vrot.slane %v3148, %v3179
  %v3182 = vmul.f32 %v3174, %v3180
  %v3183 = vmul.f32 %v3175, %v3180
  %v3185 = vlaneseq
  %v3186 = vshrl.u32 %v3185, 7
  %v3187 = vsub.s32 0, %v3186
  %v3188 = vrot.slane %v3149, %v3187
  %v3190 = vadd.f32 %v3182, %v3188
  %v3191 = vadd.f32 %v3183, %v3188
  %v3192 = vpack.c.bf16 %v3191, %v3190
  %v3193 = vld [vmem:[%s15] sm:$0xf]
  %v3194 = vld [vmem:[%s15 + $0x4] sm:$0xf]
  %v3195 = vld [vmem:[%s15 + $0x8] sm:$0xf]
  %v3196 = vld [vmem:[%s15 + $0xc] sm:$0xf]
  %v3197 = vld [vmem:[%s15 + $0x10] sm:$0xf]
  %v3198 = vld [vmem:[%s15 + $0x14] sm:$0xf]
  %v3199 = vld [vmem:[%s15 + $0x18] sm:$0xf]
  %v3200 = vld [vmem:[%s15 + $0x1c] sm:$0xf]
  %v3209 = vunpack.c.l.b16 %v3193
  %v3210 = vunpack.c.l.b16 %v3194
  %v3211 = vunpack.c.l.b16 %v3195
  %v3212 = vunpack.c.l.b16 %v3196
  %v3213 = vunpack.c.l.b16 %v3197
  %v3214 = vunpack.c.l.b16 %v3198
  %v3215 = vunpack.c.l.b16 %v3199
  %v3216 = vunpack.c.l.b16 %v3200
  %v3217 = vpack.c.b16 %v3210, %v3209
  %v3218 = vpack.c.b16 %v3212, %v3211
  %v3219 = vpack.c.b16 %v3214, %v3213
  %v3220 = vpack.c.b16 %v3216, %v3215
  %v3226 = vsel %vm63, %v3192, 0
  %3228 = vmatprep.subr.bf16.mxu0 0
  %3229 = vmatpush1.bf16.msra.mxu0 0
  %3230 = vmatprep.subr.bf16.mxu0 0
  %3231 = vmatpush1.bf16.msra.mxu0 0
  %3232 = vmatprep.subr.bf16.mxu0 0
  %3233 = vmatpush1.bf16.msra.mxu0 0
  %3234 = vmatprep.subr.bf16.mxu0 0
  %3235 = vmatpush1.bf16.msra.mxu0 0
  %3236 = vmatprep.subr.bf16.mxu0 0
  %3237 = vmatpush1.bf16.msra.mxu0 %v3220
  %3238 = vmatprep.subr.bf16.mxu0 0
  %3239 = vmatpush1.bf16.msra.mxu0 %v3219
  %3240 = vmatprep.subr.bf16.mxu0 0
  %3241 = vmatpush1.bf16.msra.mxu0 %v3218
  %3242 = vmatprep.subr.bf16.mxu0 0
  %3243 = vmatpush1.bf16.msra.mxu0 %v3217
  %3244 = vmatprep.subr.bf16.mxu0 0
  %3245 = vmatpush2.bf16.msra.mxu0 0
  %3246 = vmatprep.subr.bf16.mxu0 0
  %3247 = vmatpush2.bf16.msra.mxu0 0
  %3248 = vmatprep.subr.bf16.mxu0 0
  %3249 = vmatpush2.bf16.msra.mxu0 0
  %3250 = vmatprep.subr.bf16.mxu0 0
  %3251 = vmatpush2.bf16.msra.mxu0 0
  %3252 = vmatprep.subr.bf16.mxu0 0
  %3253 = vmatpush2.bf16.msra.mxu0 0
  %3254 = vmatprep.subr.bf16.mxu0 0
  %3255 = vmatpush2.bf16.msra.mxu0 0
  %3256 = vmatprep.subr.bf16.mxu0 0
  %3257 = vmatpush2.bf16.msra.mxu0 0
  %3258 = vmatprep.subr.bf16.mxu0 0
  %3259 = vmatpush2.bf16.msra.mxu0 0
  %3260 = vmatprep.mubr.bf16.mxu0 0
  %3261 = vmatmul.mubr.bf16.gmra.mxu0 %v3226
  %v3262 = vpop.f32.mrf.mxu0
  %v3263 = vadd.f32 0.0, %v3262
  %v3264 = vpop.f32.mrf.mxu0
  %v3265 = vpop.f32.mrf.mxu0
  %v3266 = vadd.f32 0.0, %v3265
  %v3267 = vpop.f32.mrf.mxu0
  %3268 = vdwg.mxu0
  %3269 = vst [vmem:[%s16] sm:$0xff] %v3263
  %3270 = vst [vmem:[%s16 + $0x8] sm:$0xff] %v3266
  // Predicated region
  $region66: #{gpt2_forward.1} parent=0 // pred_check
    _
  $region67: #{gpt2_forward.1} parent=0 // pred_check_branch
    %3272 = sbr.rel (0) target = $region69
  $region68: #{gpt2_forward.1} parent=0 // pred_region
    _
  $region69: #{gpt2_forward.1} parent=0 // pred_fallthru
    _
  // Predicated region
  $region70: #{gpt2_forward.1} parent=0 // pred_check
    _
  $region71: #{gpt2_forward.1} parent=0 // pred_check_branch
    %3274 = sbr.rel (0) target = $region73
  $region72: #{gpt2_forward.1} parent=0 // pred_region
    _
  $region73: #{gpt2_forward.1} parent=0 // pred_fallthru
    _

</llo_original>
